<compile_context>
chip_gen: v5e
topology: v5e:2x2
jax: 0.10.0
libtpu: 0.0.40
codegen_flags: <defaults>
</compile_context>

<pallas_src>
import functools

import jax
import jax.numpy as jnp
import numpy as np
from jax.experimental import pallas as pl
from jax.experimental.pallas import tpu as pltpu


def _round_up(x, m):
    return ((x + m - 1) // m) * m


# ----------------------------------------------------------------------------
# Kernel A: fused (M,K)x(K,Cout) GEMM + bias + LeakyReLU  (layer 1, im2col path)
# ----------------------------------------------------------------------------
def _gemm_bias_lrelu_kernel(slope, p_ref, w_ref, b_ref, o_ref):
    acc = jnp.dot(p_ref[...], w_ref[...], preferred_element_type=jnp.float32)
    acc = acc + b_ref[...]
    acc = jnp.where(acc >= 0.0, acc, slope * acc)
    o_ref[...] = acc.astype(o_ref.dtype)


def _choose_tm(m):
    if m <= 1024:
        return m                                    # single full block
    # >= 2 grid steps (v7x megacore) and a large tile whose double-buffered
    # footprint stays well under the 16 MiB v5e scoped-VMEM default.
    return min(8192, _round_up(pl.cdiv(m, 2), 256))


def _gemm_bias_lrelu(patches, w2d, bias, slope, out_dtype):
    """patches (M,Kp) bf16, w2d (Kp,Cout) bf16, bias (1,Cout) f32 -> (M,Cout)."""
    m, kp = patches.shape
    cout = w2d.shape[1]
    tm = _choose_tm(m)
    flops = 2 * m * kp * cout
    bytes_accessed = (m * kp * 2 + kp * cout * 2
                      + m * cout * np.dtype(out_dtype).itemsize)
    return pl.pallas_call(
        functools.partial(_gemm_bias_lrelu_kernel, slope),
        out_shape=jax.ShapeDtypeStruct((m, cout), out_dtype),
        grid=(pl.cdiv(m, tm),),
        in_specs=[
            pl.BlockSpec((tm, kp), lambda i: (i, 0)),       # patch tile
            pl.BlockSpec((kp, cout), lambda i: (0, 0)),     # weights (resident)
            pl.BlockSpec((1, cout), lambda i: (0, 0)),      # bias (resident)
        ],
        out_specs=pl.BlockSpec((tm, cout), lambda i: (i, 0)),
        compiler_params=pltpu.CompilerParams(
            dimension_semantics=("parallel",)),
        cost_estimate=pl.CostEstimate(flops=flops, transcendentals=0,
                                      bytes_accessed=bytes_accessed),
    )(patches, w2d, bias)


def conv_im2col_lrelu(x, wgt, bias_vec, stride, pad, slope, out_dtype):
    """x: (N,H,W,Cin) bf16, wgt: (Cout,Cin,k,k) OIHW. Returns (N,OH,OW,Cout)."""
    n, h, w, cin = x.shape
    cout, _, k, _ = wgt.shape
    oh = (h + 2 * pad - k) // stride + 1
    ow = (w + 2 * pad - k) // stride + 1
    hp = (oh - 1) * stride + k                      # crop rows the conv never reads
    wp = (ow - 1) * stride + k
    xp = jnp.pad(x, ((0, 0), (pad, hp - h - pad), (pad, wp - w - pad), (0, 0)),
                 mode="reflect")
    kdim = k * k * cin
    kp = _round_up(kdim, 128)
    # Slice-based im2col written directly in bf16; lane padding (108 -> 128) is
    # folded into the same concat (one glue pass, no extra cast/pad passes).
    slices = []
    for dh in range(k):
        for dw in range(k):
            slices.append(jax.lax.slice(
                xp, (0, dh, dw, 0),
                (n, dh + (oh - 1) * stride + 1, dw + (ow - 1) * stride + 1, cin),
                (1, stride, stride, 1)))
    if kp > kdim:
        slices.append(jnp.zeros((n, oh, ow, kp - kdim), x.dtype))
    patches = jnp.concatenate(slices, axis=-1).reshape(n * oh * ow, kp)
    w2d = jnp.transpose(wgt, (2, 3, 1, 0)).reshape(kdim, cout).astype(jnp.bfloat16)
    w2d = jnp.pad(w2d, ((0, kp - kdim), (0, 0)))
    b2d = bias_vec.reshape(1, cout).astype(jnp.float32)
    y = _gemm_bias_lrelu(patches, w2d, b2d, slope, out_dtype)
    return y.reshape(n, oh, ow, cout)


# ----------------------------------------------------------------------------
# Kernel B: fully fused conv + bias + LeakyReLU (layers 2/3, k == 2*stride)
#   - input re-grouped (free bitcast) to (N, Hp, OW+1, s*Cin)
#   - row tile + one-group halo read per grid step
#   - im2col built in VMEM scratch; one K = k*k*Cin matmul per output row
# ----------------------------------------------------------------------------
def _conv_fused_kernel(k, s, t, ow, slope, xm_ref, xh_ref, w_ref, b_ref, o_ref,
                       xs_ref, pat_ref):
    gw, sc = xm_ref.shape[2], xm_ref.shape[3]
    # Stage main + halo row groups contiguously:
    # xs_ref[g, q, cg, :] == padded input row (tile_row0 + g)*s + q.
    xs_ref[0:t] = xm_ref[0].reshape(t, s, gw, sc)
    xs_ref[t] = xh_ref[0]
    # In-VMEM im2col: one lane-aligned, sc-wide column strip per (kh, pw).
    for kh in range(k):
        g, q = kh // s, kh % s
        rows = xs_ref[g:g + t, q]                           # (t, gw, sc)
        for p in range(2):
            j = kh * 2 + p
            pat_ref[:, :, j * sc:(j + 1) * sc] = rows[:, p:p + ow, :]
    # One full-depth MXU matmul per output row, fused bias + LeakyReLU.
    for r in range(t):
        acc = jnp.dot(pat_ref[r], w_ref[...], preferred_element_type=jnp.float32)
        acc = acc + b_ref[...]
        acc = jnp.where(acc >= 0.0, acc, slope * acc)
        o_ref[0, r] = acc.astype(o_ref.dtype)


def _choose_rows_per_tile(oh, ow, gw, s, cin, cout, out_bytes):
    sc = s * cin
    kk = 2 * s * sc                                  # k*k*cin with k == 2s
    budget = 12 * 2 ** 20                            # safe under v5e 16 MiB default
    best = 1
    for cand in (2, 4, 8, 16):
        if cand > oh:
            break
        foot = (4 * cand * s * gw * sc               # main tile, bf16, 2 buffers
                + 4 * s * gw * sc                    # halo, bf16, 2 buffers
                + 2 * (cand + 1) * s * gw * sc       # staging scratch
                + 2 * cand * ow * kk                 # patch scratch
                + 2 * cand * ow * cout * out_bytes   # output, 2 buffers
                + 4 * kk * cout + 8 * cand * ow * cout)  # weights + temporaries
        if foot <= budget:
            best = cand
    return best


def conv_fused_lrelu(x, wgt, bias_vec, stride, pad, slope, out_dtype):
    """Direct (im2col-free) conv + bias + LeakyReLU. Requires k == 2*stride.
    x: (N,H,W,Cin) bf16, wgt: (Cout,Cin,k,k) OIHW. Returns (N,OH,OW,Cout)."""
    n, h, w, cin = x.shape
    cout, _, k, _ = wgt.shape
    s = stride
    assert k == 2 * s, "fused conv kernel assumes kernel == 2 * stride"
    oh = (h + 2 * pad - k) // s + 1
    ow = (w + 2 * pad - k) // s + 1
    hp, wp = (oh + 1) * s, (ow + 1) * s              # exactly the rows/cols read
    xp = jnp.pad(x, ((0, 0), (pad, hp - h - pad), (pad, wp - w - pad), (0, 0)),
                 mode="reflect")
    gw, sc = ow + 1, s * cin
    kk = k * k * cin
    xg = xp.reshape(n, hp, gw, sc)                   # free bitcast regroup (W,Cin)

    # Weights: (Cout,Cin,kh,kw) -> rows ordered as (kh, pw, qw, ci), kw = pw*s+qw,
    # matching the column order the kernel writes into the VMEM patch scratch.
    wr = jnp.transpose(wgt, (2, 3, 1, 0)).reshape(k, 2, s, cin, cout)
    wr = wr.reshape(kk, cout).astype(jnp.bfloat16)
    b2d = bias_vec.reshape(1, cout).astype(jnp.float32)

    t = _choose_rows_per_tile(oh, ow, gw, s, cin, cout, np.dtype(out_dtype).itemsize)
    n_tiles = pl.cdiv(oh, t)
    flops = 2 * n * oh * ow * kk * cout
    bytes_accessed = (n * hp * gw * sc * 2 + kk * cout * 2
                      + n * oh * ow * cout * np.dtype(out_dtype).itemsize)

    kern = functools.partial(_conv_fused_kernel, k, s, t, ow, slope)
    return pl.pallas_call(
        kern,
        out_shape=jax.ShapeDtypeStruct((n, oh, ow, cout), out_dtype),
        grid=(n, n_tiles),
        in_specs=[
            # main row tile: t row-groups of s rows each
            pl.BlockSpec((1, t * s, gw, sc), lambda bi, ti: (bi, ti, 0, 0)),
            # one-group halo (same array, second BlockSpec); clamp for last tile
            pl.BlockSpec((1, s, gw, sc),
                         lambda bi, ti: (bi, jnp.minimum(ti * t + t, oh), 0, 0)),
            # weights + bias, grid-invariant
            pl.BlockSpec((kk, cout), lambda bi, ti: (0, 0)),
            pl.BlockSpec((1, cout), lambda bi, ti: (0, 0)),
        ],
        out_specs=pl.BlockSpec((1, t, ow, cout), lambda bi, ti: (bi, ti, 0, 0)),
        scratch_shapes=[
            pltpu.VMEM((t + 1, s, gw, sc), jnp.bfloat16),   # staged rows
            pltpu.VMEM((t, ow, kk), jnp.bfloat16),          # in-VMEM patch matrix
        ],
        compiler_params=pltpu.CompilerParams(
            dimension_semantics=("parallel", "parallel")),
        cost_estimate=pl.CostEstimate(flops=flops, transcendentals=0,
                                      bytes_accessed=bytes_accessed),
    )(xg, xg, wr, b2d)


# ----------------------------------------------------------------------------
# Condition module
# ----------------------------------------------------------------------------
def init_condition_params(key, in_nc=3, nf=64):
    nhidden = 64
    ks = jax.random.split(key, 6)
    scale = 0.05
    return {
        "w1": (scale * jax.random.normal(ks[0], (nhidden, in_nc, 6, 6))).astype(jnp.float32),
        "b1": (scale * jax.random.normal(ks[1], (nhidden,))).astype(jnp.float32),
        "w2": (scale * jax.random.normal(ks[2], (nhidden, nhidden, 4, 4))).astype(jnp.float32),
        "b2": (scale * jax.random.normal(ks[3], (nhidden,))).astype(jnp.float32),
        "w3": (scale * jax.random.normal(ks[4], (nf, nhidden, 4, 4))).astype(jnp.float32),
        "b3": (scale * jax.random.normal(ks[5], (nf,))).astype(jnp.float32),
    }


def condition_forward(params, x):
    # x: (N, C, H, W) float32
    n, c, h, w = x.shape
    if h > 600 or w > 600:  # static-shape check, same semantics as the torch code
        scale_factor = min(600.0 / h, 600.0 / w)
        nh, nw = int(h * scale_factor), int(w * scale_factor)
        # TODO(synk): jax.image.resize bilinear may differ slightly from torch
        # F.interpolate corner handling at the borders; outside the Pallas kernels.
        x = jax.image.resize(x, (n, c, nh, nw), method="bilinear")
    out = jnp.transpose(x, (0, 2, 3, 1)).astype(jnp.bfloat16)   # NCHW->NHWC + bf16 once
    out = conv_im2col_lrelu(out, params["w1"], params["b1"], 3, 3, 0.2, jnp.bfloat16)
    out = conv_fused_lrelu(out, params["w2"], params["b2"], 2, 1, 0.2, jnp.bfloat16)
    out = conv_fused_lrelu(out, params["w3"], params["b3"], 2, 1, 0.02, jnp.float32)
    return jnp.transpose(out, (0, 3, 1, 2))                      # NHWC -> NCHW once


# ----------------------------------------------------------------------------
# Pure-JAX f32 reference (lax.conv) for correctness check
# ----------------------------------------------------------------------------
def _ref_conv_lrelu(x, w, b, stride, pad, slope):
    xp = jnp.pad(x, ((0, 0), (0, 0), (pad, pad), (pad, pad)), mode="reflect")
    y = jax.lax.conv_general_dilated(
        xp, w, (stride, stride), "VALID",
        dimension_numbers=("NCHW", "OIHW", "NCHW"))
    y = y + b[None, :, None, None]
    return jnp.where(y >= 0, y, slope * y)


def condition_forward_ref(params, x):
    out = _ref_conv_lrelu(x, params["w1"], params["b1"], 3, 3, 0.2)
    out = _ref_conv_lrelu(out, params["w2"], params["b2"], 2, 1, 0.2)
    out = _ref_conv_lrelu(out, params["w3"], params["b3"], 2, 1, 0.02)
    return out


if __name__ == "__main__":
    key = jax.random.PRNGKey(0)
    k_param, k_x = jax.random.split(key)

    in_nc, nf = 3, 64
    params = init_condition_params(k_param, in_nc=in_nc, nf=nf)

    # Small NCHW input (H=W=24 -> 9 -> 4 -> 2 through the three strided convs).
    x = jax.random.normal(k_x, (2, in_nc, 24, 24), dtype=jnp.float32)

    fwd = jax.jit(functools.partial(condition_forward, params))
    out = jax.block_until_ready(fwd(x))

    ref = jax.block_until_ready(condition_forward_ref(params, x))
    # Tolerance accounts for bf16 activations/weights (f32 accumulation) vs f32 ref.
    np.testing.assert_allclose(np.asarray(out), np.asarray(ref), rtol=2e-2, atol=2e-2)
    assert out.shape == (2, nf, 2, 2), out.shape

    print("KERNEL_OK")
</pallas_src>

<mosaic_0001>
module attributes {stable_mosaic.version = 11 : i64} {
  func.func @_gemm_bias_lrelu_kernel(%arg0: i32, %arg1: memref<162x128xbf16, #tpu.memory_space<vmem>>, %arg2: memref<128x64xbf16, #tpu.memory_space<vmem>>, %arg3: memref<1x64xf32, #tpu.memory_space<vmem>>, %arg4: memref<162x64xbf16, #tpu.memory_space<vmem>>) attributes {dimension_semantics = [#tpu.dimension_semantics<parallel>], iteration_bounds = array<i64: 1>, scalar_prefetch = 0 : i64, scratch_operands = 0 : i64, tpu.core_type = #tpu.core_type<tc>, window_params = [{transform_indices = @transform_0, window_bounds = array<i64: 162, 128>}, {pipeline_mode = #tpu.pipeline_mode<synchronous>, transform_indices = @transform_1, window_bounds = array<i64: 128, 64>}, {pipeline_mode = #tpu.pipeline_mode<synchronous>, transform_indices = @transform_2, window_bounds = array<i64: 1, 64>}, {transform_indices = @transform_3, window_bounds = array<i64: 162, 64>}]} {
    %c0 = arith.constant 0 : index
    %c0_0 = arith.constant 0 : index
    %0 = vector.load %arg1[%c0, %c0_0] : memref<162x128xbf16, #tpu.memory_space<vmem>>, vector<162x128xbf16>
    %c0_1 = arith.constant 0 : index
    %c0_2 = arith.constant 0 : index
    %1 = vector.load %arg2[%c0_1, %c0_2] : memref<128x64xbf16, #tpu.memory_space<vmem>>, vector<128x64xbf16>
    %cst = arith.constant dense<0.000000e+00> : vector<162x64xf32>
    %2 = tpu.matmul %0, %1, %cst {dimension_numbers = #tpu.dot_dimension_numbers<[1], [0], [0], [1], [0, 0, 1, 1], [], []>} : vector<162x128xbf16>, vector<128x64xbf16>, vector<162x64xf32> -> vector<162x64xf32>
    %c0_3 = arith.constant 0 : index
    %c0_4 = arith.constant 0 : index
    %3 = vector.load %arg3[%c0_3, %c0_4] : memref<1x64xf32, #tpu.memory_space<vmem>>, vector<1x64xf32>
    %4 = vector.broadcast %3 : vector<1x64xf32> to vector<162x64xf32>
    %5 = arith.addf %2, %4 : vector<162x64xf32>
    %cst_5 = arith.constant 0.000000e+00 : f32
    %6 = vector.broadcast %cst_5 : f32 to vector<162x64xf32>
    %7 = arith.cmpf oge, %5, %6 : vector<162x64xf32>
    %cst_6 = arith.constant 2.000000e-01 : f32
    %8 = vector.broadcast %cst_6 : f32 to vector<162x64xf32>
    %9 = arith.mulf %8, %5 : vector<162x64xf32>
    %10 = arith.select %7, %5, %9 : vector<162x64xi1>, vector<162x64xf32>
    %11 = arith.truncf %10 : vector<162x64xf32> to vector<162x64xbf16>
    %c0_7 = arith.constant 0 : index
    %c0_8 = arith.constant 0 : index
    %12 = vector.load %arg4[%c0_7, %c0_8] : memref<162x64xbf16, #tpu.memory_space<vmem>>, vector<162x64xbf16>
    tpu.vector_store %arg4[%c0_7, %c0_8], %11 {strides = array<i32>} : memref<162x64xbf16, #tpu.memory_space<vmem>>, vector<162x64xbf16>,
    return
  }
  func.func @transform_0(%arg0: i32) -> (i32, i32) {
    %c0_i32 = arith.constant 0 : i32
    %c0_i32_0 = arith.constant 0 : i32
    return %arg0, %c0_i32 : i32, i32
  }
  func.func @transform_1(%arg0: i32) -> (i32, i32) {
    %c0_i32 = arith.constant 0 : i32
    %c0_i32_0 = arith.constant 0 : i32
    %c0_i32_1 = arith.constant 0 : i32
    return %c0_i32, %c0_i32_0 : i32, i32
  }
  func.func @transform_2(%arg0: i32) -> (i32, i32) {
    %c0_i32 = arith.constant 0 : i32
    %c0_i32_0 = arith.constant 0 : i32
    %c0_i32_1 = arith.constant 0 : i32
    return %c0_i32, %c0_i32_0 : i32, i32
  }
  func.func @transform_3(%arg0: i32) -> (i32, i32) {
    %c0_i32 = arith.constant 0 : i32
    %c0_i32_0 = arith.constant 0 : i32
    return %arg0, %c0_i32 : i32, i32
  }
}

module attributes {stable_mosaic.version = 11 : i64} {
  func.func @_conv_fused_kernel(%arg0: i32, %arg1: i32, %arg2: memref<1x8x5x128xbf16, #tpu.memory_space<vmem>>, %arg3: memref<1x2x5x128xbf16, #tpu.memory_space<vmem>>, %arg4: memref<1024x64xbf16, #tpu.memory_space<vmem>>, %arg5: memref<1x64xf32, #tpu.memory_space<vmem>>, %arg6: memref<1x4x4x64xbf16, #tpu.memory_space<vmem>>, %arg7: memref<5x2x5x128xbf16, #tpu.memory_space<vmem>>, %arg8: memref<4x4x1024xbf16, #tpu.memory_space<vmem>>) attributes {dimension_semantics = [#tpu.dimension_semantics<parallel>, #tpu.dimension_semantics<parallel>], iteration_bounds = array<i64: 2, 1>, scalar_prefetch = 0 : i64, scratch_operands = 2 : i64, tpu.core_type = #tpu.core_type<tc>, window_params = [{transform_indices = @transform_0, window_bounds = array<i64: 1, 8, 5, 128>}, {transform_indices = @transform_1, window_bounds = array<i64: 1, 2, 5, 128>}, {pipeline_mode = #tpu.pipeline_mode<synchronous>, transform_indices = @transform_2, window_bounds = array<i64: 1024, 64>}, {pipeline_mode = #tpu.pipeline_mode<synchronous>, transform_indices = @transform_3, window_bounds = array<i64: 1, 64>}, {transform_indices = @transform_4, window_bounds = array<i64: 1, 4, 4, 64>}]} {
    %c0 = arith.constant 0 : index
    %c0_0 = arith.constant 0 : index
    %c0_1 = arith.constant 0 : index
    %c0_2 = arith.constant 0 : index
    %0 = vector.load %arg2[%c0, %c0_0, %c0_1, %c0_2] : memref<1x8x5x128xbf16, #tpu.memory_space<vmem>>, vector<1x8x5x128xbf16>
    %1 = vector.shape_cast %0 : vector<1x8x5x128xbf16> to vector<8x5x128xbf16>
    %2 = vector.shape_cast %1 : vector<8x5x128xbf16> to vector<4x2x5x128xbf16>
    %c0_3 = arith.constant 0 : index
    %c0_4 = arith.constant 0 : index
    %c0_5 = arith.constant 0 : index
    %c0_6 = arith.constant 0 : index
    %3 = vector.load %arg7[%c0_3, %c0_4, %c0_5, %c0_6] : memref<5x2x5x128xbf16, #tpu.memory_space<vmem>>, vector<4x2x5x128xbf16>
    tpu.vector_store %arg7[%c0_3, %c0_4, %c0_5, %c0_6], %2 {strides = array<i32>} : memref<5x2x5x128xbf16, #tpu.memory_space<vmem>>, vector<4x2x5x128xbf16>,
    %c0_7 = arith.constant 0 : index
    %c0_8 = arith.constant 0 : index
    %c0_9 = arith.constant 0 : index
    %c0_10 = arith.constant 0 : index
    %4 = vector.load %arg3[%c0_7, %c0_8, %c0_9, %c0_10] : memref<1x2x5x128xbf16, #tpu.memory_space<vmem>>, vector<1x2x5x128xbf16>
    %5 = vector.shape_cast %4 : vector<1x2x5x128xbf16> to vector<2x5x128xbf16>
    %c4 = arith.constant 4 : index
    %c0_11 = arith.constant 0 : index
    %c0_12 = arith.constant 0 : index
    %c0_13 = arith.constant 0 : index
    %6 = vector.load %arg7[%c4, %c0_11, %c0_12, %c0_13] : memref<5x2x5x128xbf16, #tpu.memory_space<vmem>>, vector<1x2x5x128xbf16>
    %7 = vector.shape_cast %6 : vector<1x2x5x128xbf16> to vector<2x5x128xbf16>
    %8 = vector.shape_cast %5 : vector<2x5x128xbf16> to vector<1x2x5x128xbf16>
    tpu.vector_store %arg7[%c4, %c0_11, %c0_12, %c0_13], %8 {strides = array<i32>} : memref<5x2x5x128xbf16, #tpu.memory_space<vmem>>, vector<1x2x5x128xbf16>,
    %c0_14 = arith.constant 0 : index
    %c0_15 = arith.constant 0 : index
    %c0_16 = arith.constant 0 : index
    %c0_17 = arith.constant 0 : index
    %9 = vector.load %arg7[%c0_14, %c0_15, %c0_16, %c0_17] : memref<5x2x5x128xbf16, #tpu.memory_space<vmem>>, vector<4x1x5x128xbf16>
    %10 = vector.shape_cast %9 : vector<4x1x5x128xbf16> to vector<4x5x128xbf16>
    %11 = vector.extract_strided_slice %10 {offsets = [0, 0, 0], sizes = [4, 4, 128], strides = [1, 1, 1]} : vector<4x5x128xbf16> to vector<4x4x128xbf16>
    %c0_18 = arith.constant 0 : index
    %c0_19 = arith.constant 0 : index
    %c0_20 = arith.constant 0 : index
    %12 = vector.load %arg8[%c0_18, %c0_19, %c0_20] : memref<4x4x1024xbf16, #tpu.memory_space<vmem>>, vector<4x4x128xbf16>
    tpu.vector_store %arg8[%c0_18, %c0_19, %c0_20], %11 {strides = array<i32>} : memref<4x4x1024xbf16, #tpu.memory_space<vmem>>, vector<4x4x128xbf16>,
    %13 = vector.extract_strided_slice %10 {offsets = [0, 1, 0], sizes = [4, 4, 128], strides = [1, 1, 1]} : vector<4x5x128xbf16> to vector<4x4x128xbf16>
    %c0_21 = arith.constant 0 : index
    %c0_22 = arith.constant 0 : index
    %c128 = arith.constant 128 : index
    %14 = vector.load %arg8[%c0_21, %c0_22, %c128] : memref<4x4x1024xbf16, #tpu.memory_space<vmem>>, vector<4x4x128xbf16>
    tpu.vector_store %arg8[%c0_21, %c0_22, %c128], %13 {strides = array<i32>} : memref<4x4x1024xbf16, #tpu.memory_space<vmem>>, vector<4x4x128xbf16>,
    %c0_23 = arith.constant 0 : index
    %c1 = arith.constant 1 : index
    %c0_24 = arith.constant 0 : index
    %c0_25 = arith.constant 0 : index
    %15 = vector.load %arg7[%c0_23, %c1, %c0_24, %c0_25] : memref<5x2x5x128xbf16, #tpu.memory_space<vmem>>, vector<4x1x5x128xbf16>
    %16 = vector.shape_cast %15 : vector<4x1x5x128xbf16> to vector<4x5x128xbf16>
    %17 = vector.extract_strided_slice %16 {offsets = [0, 0, 0], sizes = [4, 4, 128], strides = [1, 1, 1]} : vector<4x5x128xbf16> to vector<4x4x128xbf16>
    %c0_26 = arith.constant 0 : index
    %c0_27 = arith.constant 0 : index
    %c256 = arith.constant 256 : index
    %18 = vector.load %arg8[%c0_26, %c0_27, %c256] : memref<4x4x1024xbf16, #tpu.memory_space<vmem>>, vector<4x4x128xbf16>
    tpu.vector_store %arg8[%c0_26, %c0_27, %c256], %17 {strides = array<i32>} : memref<4x4x1024xbf16, #tpu.memory_space<vmem>>, vector<4x4x128xbf16>,
    %19 = vector.extract_strided_slice %16 {offsets = [0, 1, 0], sizes = [4, 4, 128], strides = [1, 1, 1]} : vector<4x5x128xbf16> to vector<4x4x128xbf16>
    %c0_28 = arith.constant 0 : index
    %c0_29 = arith.constant 0 : index
    %c384 = arith.constant 384 : index
    %20 = vector.load %arg8[%c0_28, %c0_29, %c384] : memref<4x4x1024xbf16, #tpu.memory_space<vmem>>, vector<4x4x128xbf16>
    tpu.vector_store %arg8[%c0_28, %c0_29, %c384], %19 {strides = array<i32>} : memref<4x4x1024xbf16, #tpu.memory_space<vmem>>, vector<4x4x128xbf16>,
    %c1_30 = arith.constant 1 : index
    %c0_31 = arith.constant 0 : index
    %c0_32 = arith.constant 0 : index
    %c0_33 = arith.constant 0 : index
    %21 = vector.load %arg7[%c1_30, %c0_31, %c0_32, %c0_33] : memref<5x2x5x128xbf16, #tpu.memory_space<vmem>>, vector<4x1x5x128xbf16>
    %22 = vector.shape_cast %21 : vector<4x1x5x128xbf16> to vector<4x5x128xbf16>
    %23 = vector.extract_strided_slice %22 {offsets = [0, 0, 0], sizes = [4, 4, 128], strides = [1, 1, 1]} : vector<4x5x128xbf16> to vector<4x4x128xbf16>
    %c0_34 = arith.constant 0 : index
    %c0_35 = arith.constant 0 : index
    %c512 = arith.constant 512 : index
    %24 = vector.load %arg8[%c0_34, %c0_35, %c512] : memref<4x4x1024xbf16, #tpu.memory_space<vmem>>, vector<4x4x128xbf16>
    tpu.vector_store %arg8[%c0_34, %c0_35, %c512], %23 {strides = array<i32>} : memref<4x4x1024xbf16, #tpu.memory_space<vmem>>, vector<4x4x128xbf16>,
    %25 = vector.extract_strided_slice %22 {offsets = [0, 1, 0], sizes = [4, 4, 128], strides = [1, 1, 1]} : vector<4x5x128xbf16> to vector<4x4x128xbf16>
    %c0_36 = arith.constant 0 : index
    %c0_37 = arith.constant 0 : index
    %c640 = arith.constant 640 : index
    %26 = vector.load %arg8[%c0_36, %c0_37, %c640] : memref<4x4x1024xbf16, #tpu.memory_space<vmem>>, vector<4x4x128xbf16>
    tpu.vector_store %arg8[%c0_36, %c0_37, %c640], %25 {strides = array<i32>} : memref<4x4x1024xbf16, #tpu.memory_space<vmem>>, vector<4x4x128xbf16>,
    %c1_38 = arith.constant 1 : index
    %c1_39 = arith.constant 1 : index
    %c0_40 = arith.constant 0 : index
    %c0_41 = arith.constant 0 : index
    %27 = vector.load %arg7[%c1_38, %c1_39, %c0_40, %c0_41] : memref<5x2x5x128xbf16, #tpu.memory_space<vmem>>, vector<4x1x5x128xbf16>
    %28 = vector.shape_cast %27 : vector<4x1x5x128xbf16> to vector<4x5x128xbf16>
    %29 = vector.extract_strided_slice %28 {offsets = [0, 0, 0], sizes = [4, 4, 128], strides = [1, 1, 1]} : vector<4x5x128xbf16> to vector<4x4x128xbf16>
    %c0_42 = arith.constant 0 : index
    %c0_43 = arith.constant 0 : index
    %c768 = arith.constant 768 : index
    %30 = vector.load %arg8[%c0_42, %c0_43, %c768] : memref<4x4x1024xbf16, #tpu.memory_space<vmem>>, vector<4x4x128xbf16>
    tpu.vector_store %arg8[%c0_42, %c0_43, %c768], %29 {strides = array<i32>} : memref<4x4x1024xbf16, #tpu.memory_space<vmem>>, vector<4x4x128xbf16>,
    %31 = vector.extract_strided_slice %28 {offsets = [0, 1, 0], sizes = [4, 4, 128], strides = [1, 1, 1]} : vector<4x5x128xbf16> to vector<4x4x128xbf16>
    %c0_44 = arith.constant 0 : index
    %c0_45 = arith.constant 0 : index
    %c896 = arith.constant 896 : index
    %32 = vector.load %arg8[%c0_44, %c0_45, %c896] : memref<4x4x1024xbf16, #tpu.memory_space<vmem>>, vector<4x4x128xbf16>
    tpu.vector_store %arg8[%c0_44, %c0_45, %c896], %31 {strides = array<i32>} : memref<4x4x1024xbf16, #tpu.memory_space<vmem>>, vector<4x4x128xbf16>,
    %c0_46 = arith.constant 0 : index
    %c0_47 = arith.constant 0 : index
    %c0_48 = arith.constant 0 : index
    %33 = vector.load %arg8[%c0_46, %c0_47, %c0_48] : memref<4x4x1024xbf16, #tpu.memory_space<vmem>>, vector<1x4x1024xbf16>
    %34 = vector.shape_cast %33 : vector<1x4x1024xbf16> to vector<4x1024xbf16>
    %c0_49 = arith.constant 0 : index
    %c0_50 = arith.constant 0 : index
    %35 = vector.load %arg4[%c0_49, %c0_50] : memref<1024x64xbf16, #tpu.memory_space<vmem>>, vector<1024x64xbf16>
    %cst = arith.constant dense<0.000000e+00> : vector<4x64xf32>
    %36 = tpu.matmul %34, %35, %cst {dimension_numbers = #tpu.dot_dimension_numbers<[1], [0], [0], [1], [0, 0, 1, 1], [], []>} : vector<4x1024xbf16>, vector<1024x64xbf16>, vector<4x64xf32> -> vector<4x64xf32>
    %c0_51 = arith.constant 0 : index
    %c0_52 = arith.constant 0 : index
    %37 = vector.load %arg5[%c0_51, %c0_52] : memref<1x64xf32, #tpu.memory_space<vmem>>, vector<1x64xf32>
    %38 = vector.broadcast %37 : vector<1x64xf32> to vector<4x64xf32>
    %39 = arith.addf %36, %38 : vector<4x64xf32>
    %cst_53 = arith.constant 0.000000e+00 : f32
    %40 = vector.broadcast %cst_53 : f32 to vector<4x64xf32>
    %41 = arith.cmpf oge, %39, %40 : vector<4x64xf32>
    %cst_54 = arith.constant 2.000000e-01 : f32
    %42 = vector.broadcast %cst_54 : f32 to vector<4x64xf32>
    %43 = arith.mulf %42, %39 : vector<4x64xf32>
    %44 = arith.select %41, %39, %43 : vector<4x64xi1>, vector<4x64xf32>
    %45 = arith.truncf %44 : vector<4x64xf32> to vector<4x64xbf16>
    %c0_55 = arith.constant 0 : index
    %c0_56 = arith.constant 0 : index
    %c0_57 = arith.constant 0 : index
    %c0_58 = arith.constant 0 : index
    %46 = vector.load %arg6[%c0_55, %c0_56, %c0_57, %c0_58] : memref<1x4x4x64xbf16, #tpu.memory_space<vmem>>, vector<1x1x4x64xbf16>
    %47 = vector.shape_cast %46 : vector<1x1x4x64xbf16> to vector<4x64xbf16>
    %48 = vector.shape_cast %45 : vector<4x64xbf16> to vector<1x1x4x64xbf16>
    tpu.vector_store %arg6[%c0_55, %c0_56, %c0_57, %c0_58], %48 {strides = array<i32>} : memref<1x4x4x64xbf16, #tpu.memory_space<vmem>>, vector<1x1x4x64xbf16>,
    %c1_59 = arith.constant 1 : index
    %c0_60 = arith.constant 0 : index
    %c0_61 = arith.constant 0 : index
    %49 = vector.load %arg8[%c1_59, %c0_60, %c0_61] : memref<4x4x1024xbf16, #tpu.memory_space<vmem>>, vector<1x4x1024xbf16>
    %50 = vector.shape_cast %49 : vector<1x4x1024xbf16> to vector<4x1024xbf16>
    %c0_62 = arith.constant 0 : index
    %c0_63 = arith.constant 0 : index
    %51 = vector.load %arg4[%c0_62, %c0_63] : memref<1024x64xbf16, #tpu.memory_space<vmem>>, vector<1024x64xbf16>
    %cst_64 = arith.constant dense<0.000000e+00> : vector<4x64xf32>
    %52 = tpu.matmul %50, %51, %cst_64 {dimension_numbers = #tpu.dot_dimension_numbers<[1], [0], [0], [1], [0, 0, 1, 1], [], []>} : vector<4x1024xbf16>, vector<1024x64xbf16>, vector<4x64xf32> -> vector<4x64xf32>
    %c0_65 = arith.constant 0 : index
    %c0_66 = arith.constant 0 : index
    %53 = vector.load %arg5[%c0_65, %c0_66] : memref<1x64xf32, #tpu.memory_space<vmem>>, vector<1x64xf32>
    %54 = vector.broadcast %53 : vector<1x64xf32> to vector<4x64xf32>
    %55 = arith.addf %52, %54 : vector<4x64xf32>
    %cst_67 = arith.constant 0.000000e+00 : f32
    %56 = vector.broadcast %cst_67 : f32 to vector<4x64xf32>
    %57 = arith.cmpf oge, %55, %56 : vector<4x64xf32>
    %cst_68 = arith.constant 2.000000e-01 : f32
    %58 = vector.broadcast %cst_68 : f32 to vector<4x64xf32>
    %59 = arith.mulf %58, %55 : vector<4x64xf32>
    %60 = arith.select %57, %55, %59 : vector<4x64xi1>, vector<4x64xf32>
    %61 = arith.truncf %60 : vector<4x64xf32> to vector<4x64xbf16>
    %c0_69 = arith.constant 0 : index
    %c1_70 = arith.constant 1 : index
    %c0_71 = arith.constant 0 : index
    %c0_72 = arith.constant 0 : index
    %62 = vector.load %arg6[%c0_69, %c1_70, %c0_71, %c0_72] : memref<1x4x4x64xbf16, #tpu.memory_space<vmem>>, vector<1x1x4x64xbf16>
    %63 = vector.shape_cast %62 : vector<1x1x4x64xbf16> to vector<4x64xbf16>
    %64 = vector.shape_cast %61 : vector<4x64xbf16> to vector<1x1x4x64xbf16>
    tpu.vector_store %arg6[%c0_69, %c1_70, %c0_71, %c0_72], %64 {strides = array<i32>} : memref<1x4x4x64xbf16, #tpu.memory_space<vmem>>, vector<1x1x4x64xbf16>,
    %c2 = arith.constant 2 : index
    %c0_73 = arith.constant 0 : index
    %c0_74 = arith.constant 0 : index
    %65 = vector.load %arg8[%c2, %c0_73, %c0_74] : memref<4x4x1024xbf16, #tpu.memory_space<vmem>>, vector<1x4x1024xbf16>
    %66 = vector.shape_cast %65 : vector<1x4x1024xbf16> to vector<4x1024xbf16>
    %c0_75 = arith.constant 0 : index
    %c0_76 = arith.constant 0 : index
    %67 = vector.load %arg4[%c0_75, %c0_76] : memref<1024x64xbf16, #tpu.memory_space<vmem>>, vector<1024x64xbf16>
    %cst_77 = arith.constant dense<0.000000e+00> : vector<4x64xf32>
    %68 = tpu.matmul %66, %67, %cst_77 {dimension_numbers = #tpu.dot_dimension_numbers<[1], [0], [0], [1], [0, 0, 1, 1], [], []>} : vector<4x1024xbf16>, vector<1024x64xbf16>, vector<4x64xf32> -> vector<4x64xf32>
    %c0_78 = arith.constant 0 : index
    %c0_79 = arith.constant 0 : index
    %69 = vector.load %arg5[%c0_78, %c0_79] : memref<1x64xf32, #tpu.memory_space<vmem>>, vector<1x64xf32>
    %70 = vector.broadcast %69 : vector<1x64xf32> to vector<4x64xf32>
    %71 = arith.addf %68, %70 : vector<4x64xf32>
    %cst_80 = arith.constant 0.000000e+00 : f32
    %72 = vector.broadcast %cst_80 : f32 to vector<4x64xf32>
    %73 = arith.cmpf oge, %71, %72 : vector<4x64xf32>
    %cst_81 = arith.constant 2.000000e-01 : f32
    %74 = vector.broadcast %cst_81 : f32 to vector<4x64xf32>
    %75 = arith.mulf %74, %71 : vector<4x64xf32>
    %76 = arith.select %73, %71, %75 : vector<4x64xi1>, vector<4x64xf32>
    %77 = arith.truncf %76 : vector<4x64xf32> to vector<4x64xbf16>
    %c0_82 = arith.constant 0 : index
    %c2_83 = arith.constant 2 : index
    %c0_84 = arith.constant 0 : index
    %c0_85 = arith.constant 0 : index
    %78 = vector.load %arg6[%c0_82, %c2_83, %c0_84, %c0_85] : memref<1x4x4x64xbf16, #tpu.memory_space<vmem>>, vector<1x1x4x64xbf16>
    %79 = vector.shape_cast %78 : vector<1x1x4x64xbf16> to vector<4x64xbf16>
    %80 = vector.shape_cast %77 : vector<4x64xbf16> to vector<1x1x4x64xbf16>
    tpu.vector_store %arg6[%c0_82, %c2_83, %c0_84, %c0_85], %80 {strides = array<i32>} : memref<1x4x4x64xbf16, #tpu.memory_space<vmem>>, vector<1x1x4x64xbf16>,
    %c3 = arith.constant 3 : index
    %c0_86 = arith.constant 0 : index
    %c0_87 = arith.constant 0 : index
    %81 = vector.load %arg8[%c3, %c0_86, %c0_87] : memref<4x4x1024xbf16, #tpu.memory_space<vmem>>, vector<1x4x1024xbf16>
    %82 = vector.shape_cast %81 : vector<1x4x1024xbf16> to vector<4x1024xbf16>
    %c0_88 = arith.constant 0 : index
    %c0_89 = arith.constant 0 : index
    %83 = vector.load %arg4[%c0_88, %c0_89] : memref<1024x64xbf16, #tpu.memory_space<vmem>>, vector<1024x64xbf16>
    %cst_90 = arith.constant dense<0.000000e+00> : vector<4x64xf32>
    %84 = tpu.matmul %82, %83, %cst_90 {dimension_numbers = #tpu.dot_dimension_numbers<[1], [0], [0], [1], [0, 0, 1, 1], [], []>} : vector<4x1024xbf16>, vector<1024x64xbf16>, vector<4x64xf32> -> vector<4x64xf32>
    %c0_91 = arith.constant 0 : index
    %c0_92 = arith.constant 0 : index
    %85 = vector.load %arg5[%c0_91, %c0_92] : memref<1x64xf32, #tpu.memory_space<vmem>>, vector<1x64xf32>
    %86 = vector.broadcast %85 : vector<1x64xf32> to vector<4x64xf32>
    %87 = arith.addf %84, %86 : vector<4x64xf32>
    %cst_93 = arith.constant 0.000000e+00 : f32
    %88 = vector.broadcast %cst_93 : f32 to vector<4x64xf32>
    %89 = arith.cmpf oge, %87, %88 : vector<4x64xf32>
    %cst_94 = arith.constant 2.000000e-01 : f32
    %90 = vector.broadcast %cst_94 : f32 to vector<4x64xf32>
    %91 = arith.mulf %90, %87 : vector<4x64xf32>
    %92 = arith.select %89, %87, %91 : vector<4x64xi1>, vector<4x64xf32>
    %93 = arith.truncf %92 : vector<4x64xf32> to vector<4x64xbf16>
    %c0_95 = arith.constant 0 : index
    %c3_96 = arith.constant 3 : index
    %c0_97 = arith.constant 0 : index
    %c0_98 = arith.constant 0 : index
    %94 = vector.load %arg6[%c0_95, %c3_96, %c0_97, %c0_98] : memref<1x4x4x64xbf16, #tpu.memory_space<vmem>>, vector<1x1x4x64xbf16>
    %95 = vector.shape_cast %94 : vector<1x1x4x64xbf16> to vector<4x64xbf16>
    %96 = vector.shape_cast %93 : vector<4x64xbf16> to vector<1x1x4x64xbf16>
    tpu.vector_store %arg6[%c0_95, %c3_96, %c0_97, %c0_98], %96 {strides = array<i32>} : memref<1x4x4x64xbf16, #tpu.memory_space<vmem>>, vector<1x1x4x64xbf16>,
    return
  }
  func.func @transform_0(%arg0: i32, %arg1: i32) -> (i32, i32, i32, i32) {
    %c0_i32 = arith.constant 0 : i32
    %c0_i32_0 = arith.constant 0 : i32
    %c0_i32_1 = arith.constant 0 : i32
    return %arg0, %arg1, %c0_i32, %c0_i32_0 : i32, i32, i32, i32
  }
  func.func @transform_1(%arg0: i32, %arg1: i32) -> (i32, i32, i32, i32) {
    %c4_i32 = arith.constant 4 : i32
    %0 = arith.muli %arg1, %c4_i32 : i32
    %c4_i32_0 = arith.constant 4 : i32
    %1 = arith.addi %0, %c4_i32_0 : i32
    %c4_i32_1 = arith.constant 4 : i32
    %2 = arith.minsi %1, %c4_i32_1 : i32
    %c0_i32 = arith.constant 0 : i32
    %c0_i32_2 = arith.constant 0 : i32
    %c0_i32_3 = arith.constant 0 : i32
    return %arg0, %2, %c0_i32, %c0_i32_2 : i32, i32, i32, i32
  }
  func.func @transform_2(%arg0: i32, %arg1: i32) -> (i32, i32) {
    %c0_i32 = arith.constant 0 : i32
    %c0_i32_0 = arith.constant 0 : i32
    %c0_i32_1 = arith.constant 0 : i32
    return %c0_i32, %c0_i32_0 : i32, i32
  }
  func.func @transform_3(%arg0: i32, %arg1: i32) -> (i32, i32) {
    %c0_i32 = arith.constant 0 : i32
    %c0_i32_0 = arith.constant 0 : i32
    %c0_i32_1 = arith.constant 0 : i32
    return %c0_i32, %c0_i32_0 : i32, i32
  }
  func.func @transform_4(%arg0: i32, %arg1: i32) -> (i32, i32, i32, i32) {
    %c0_i32 = arith.constant 0 : i32
    %c0_i32_0 = arith.constant 0 : i32
    %c0_i32_1 = arith.constant 0 : i32
    return %arg0, %arg1, %c0_i32, %c0_i32_0 : i32, i32, i32, i32
  }
}

module attributes {stable_mosaic.version = 11 : i64} {
  func.func @_conv_fused_kernel(%arg0: i32, %arg1: i32, %arg2: memref<1x4x3x128xbf16, #tpu.memory_space<vmem>>, %arg3: memref<1x2x3x128xbf16, #tpu.memory_space<vmem>>, %arg4: memref<1024x64xbf16, #tpu.memory_space<vmem>>, %arg5: memref<1x64xf32, #tpu.memory_space<vmem>>, %arg6: memref<1x2x2x64xf32, #tpu.memory_space<vmem>>, %arg7: memref<3x2x3x128xbf16, #tpu.memory_space<vmem>>, %arg8: memref<2x2x1024xbf16, #tpu.memory_space<vmem>>) attributes {dimension_semantics = [#tpu.dimension_semantics<parallel>, #tpu.dimension_semantics<parallel>], iteration_bounds = array<i64: 2, 1>, scalar_prefetch = 0 : i64, scratch_operands = 2 : i64, tpu.core_type = #tpu.core_type<tc>, window_params = [{transform_indices = @transform_0, window_bounds = array<i64: 1, 4, 3, 128>}, {transform_indices = @transform_1, window_bounds = array<i64: 1, 2, 3, 128>}, {pipeline_mode = #tpu.pipeline_mode<synchronous>, transform_indices = @transform_2, window_bounds = array<i64: 1024, 64>}, {pipeline_mode = #tpu.pipeline_mode<synchronous>, transform_indices = @transform_3, window_bounds = array<i64: 1, 64>}, {transform_indices = @transform_4, window_bounds = array<i64: 1, 2, 2, 64>}]} {
    %c0 = arith.constant 0 : index
    %c0_0 = arith.constant 0 : index
    %c0_1 = arith.constant 0 : index
    %c0_2 = arith.constant 0 : index
    %0 = vector.load %arg2[%c0, %c0_0, %c0_1, %c0_2] : memref<1x4x3x128xbf16, #tpu.memory_space<vmem>>, vector<1x4x3x128xbf16>
    %1 = vector.shape_cast %0 : vector<1x4x3x128xbf16> to vector<4x3x128xbf16>
    %2 = vector.shape_cast %1 : vector<4x3x128xbf16> to vector<2x2x3x128xbf16>
    %c0_3 = arith.constant 0 : index
    %c0_4 = arith.constant 0 : index
    %c0_5 = arith.constant 0 : index
    %c0_6 = arith.constant 0 : index
    %3 = vector.load %arg7[%c0_3, %c0_4, %c0_5, %c0_6] : memref<3x2x3x128xbf16, #tpu.memory_space<vmem>>, vector<2x2x3x128xbf16>
    tpu.vector_store %arg7[%c0_3, %c0_4, %c0_5, %c0_6], %2 {strides = array<i32>} : memref<3x2x3x128xbf16, #tpu.memory_space<vmem>>, vector<2x2x3x128xbf16>,
    %c0_7 = arith.constant 0 : index
    %c0_8 = arith.constant 0 : index
    %c0_9 = arith.constant 0 : index
    %c0_10 = arith.constant 0 : index
    %4 = vector.load %arg3[%c0_7, %c0_8, %c0_9, %c0_10] : memref<1x2x3x128xbf16, #tpu.memory_space<vmem>>, vector<1x2x3x128xbf16>
    %5 = vector.shape_cast %4 : vector<1x2x3x128xbf16> to vector<2x3x128xbf16>
    %c2 = arith.constant 2 : index
    %c0_11 = arith.constant 0 : index
    %c0_12 = arith.constant 0 : index
    %c0_13 = arith.constant 0 : index
    %6 = vector.load %arg7[%c2, %c0_11, %c0_12, %c0_13] : memref<3x2x3x128xbf16, #tpu.memory_space<vmem>>, vector<1x2x3x128xbf16>
    %7 = vector.shape_cast %6 : vector<1x2x3x128xbf16> to vector<2x3x128xbf16>
    %8 = vector.shape_cast %5 : vector<2x3x128xbf16> to vector<1x2x3x128xbf16>
    tpu.vector_store %arg7[%c2, %c0_11, %c0_12, %c0_13], %8 {strides = array<i32>} : memref<3x2x3x128xbf16, #tpu.memory_space<vmem>>, vector<1x2x3x128xbf16>,
    %c0_14 = arith.constant 0 : index
    %c0_15 = arith.constant 0 : index
    %c0_16 = arith.constant 0 : index
    %c0_17 = arith.constant 0 : index
    %9 = vector.load %arg7[%c0_14, %c0_15, %c0_16, %c0_17] : memref<3x2x3x128xbf16, #tpu.memory_space<vmem>>, vector<2x1x3x128xbf16>
    %10 = vector.shape_cast %9 : vector<2x1x3x128xbf16> to vector<2x3x128xbf16>
    %11 = vector.extract_strided_slice %10 {offsets = [0, 0, 0], sizes = [2, 2, 128], strides = [1, 1, 1]} : vector<2x3x128xbf16> to vector<2x2x128xbf16>
    %c0_18 = arith.constant 0 : index
    %c0_19 = arith.constant 0 : index
    %c0_20 = arith.constant 0 : index
    %12 = vector.load %arg8[%c0_18, %c0_19, %c0_20] : memref<2x2x1024xbf16, #tpu.memory_space<vmem>>, vector<2x2x128xbf16>
    tpu.vector_store %arg8[%c0_18, %c0_19, %c0_20], %11 {strides = array<i32>} : memref<2x2x1024xbf16, #tpu.memory_space<vmem>>, vector<2x2x128xbf16>,
    %13 = vector.extract_strided_slice %10 {offsets = [0, 1, 0], sizes = [2, 2, 128], strides = [1, 1, 1]} : vector<2x3x128xbf16> to vector<2x2x128xbf16>
    %c0_21 = arith.constant 0 : index
    %c0_22 = arith.constant 0 : index
    %c128 = arith.constant 128 : index
    %14 = vector.load %arg8[%c0_21, %c0_22, %c128] : memref<2x2x1024xbf16, #tpu.memory_space<vmem>>, vector<2x2x128xbf16>
    tpu.vector_store %arg8[%c0_21, %c0_22, %c128], %13 {strides = array<i32>} : memref<2x2x1024xbf16, #tpu.memory_space<vmem>>, vector<2x2x128xbf16>,
    %c0_23 = arith.constant 0 : index
    %c1 = arith.constant 1 : index
    %c0_24 = arith.constant 0 : index
    %c0_25 = arith.constant 0 : index
    %15 = vector.load %arg7[%c0_23, %c1, %c0_24, %c0_25] : memref<3x2x3x128xbf16, #tpu.memory_space<vmem>>, vector<2x1x3x128xbf16>
    %16 = vector.shape_cast %15 : vector<2x1x3x128xbf16> to vector<2x3x128xbf16>
    %17 = vector.extract_strided_slice %16 {offsets = [0, 0, 0], sizes = [2, 2, 128], strides = [1, 1, 1]} : vector<2x3x128xbf16> to vector<2x2x128xbf16>
    %c0_26 = arith.constant 0 : index
    %c0_27 = arith.constant 0 : index
    %c256 = arith.constant 256 : index
    %18 = vector.load %arg8[%c0_26, %c0_27, %c256] : memref<2x2x1024xbf16, #tpu.memory_space<vmem>>, vector<2x2x128xbf16>
    tpu.vector_store %arg8[%c0_26, %c0_27, %c256], %17 {strides = array<i32>} : memref<2x2x1024xbf16, #tpu.memory_space<vmem>>, vector<2x2x128xbf16>,
    %19 = vector.extract_strided_slice %16 {offsets = [0, 1, 0], sizes = [2, 2, 128], strides = [1, 1, 1]} : vector<2x3x128xbf16> to vector<2x2x128xbf16>
    %c0_28 = arith.constant 0 : index
    %c0_29 = arith.constant 0 : index
    %c384 = arith.constant 384 : index
    %20 = vector.load %arg8[%c0_28, %c0_29, %c384] : memref<2x2x1024xbf16, #tpu.memory_space<vmem>>, vector<2x2x128xbf16>
    tpu.vector_store %arg8[%c0_28, %c0_29, %c384], %19 {strides = array<i32>} : memref<2x2x1024xbf16, #tpu.memory_space<vmem>>, vector<2x2x128xbf16>,
    %c1_30 = arith.constant 1 : index
    %c0_31 = arith.constant 0 : index
    %c0_32 = arith.constant 0 : index
    %c0_33 = arith.constant 0 : index
    %21 = vector.load %arg7[%c1_30, %c0_31, %c0_32, %c0_33] : memref<3x2x3x128xbf16, #tpu.memory_space<vmem>>, vector<2x1x3x128xbf16>
    %22 = vector.shape_cast %21 : vector<2x1x3x128xbf16> to vector<2x3x128xbf16>
    %23 = vector.extract_strided_slice %22 {offsets = [0, 0, 0], sizes = [2, 2, 128], strides = [1, 1, 1]} : vector<2x3x128xbf16> to vector<2x2x128xbf16>
    %c0_34 = arith.constant 0 : index
    %c0_35 = arith.constant 0 : index
    %c512 = arith.constant 512 : index
    %24 = vector.load %arg8[%c0_34, %c0_35, %c512] : memref<2x2x1024xbf16, #tpu.memory_space<vmem>>, vector<2x2x128xbf16>
    tpu.vector_store %arg8[%c0_34, %c0_35, %c512], %23 {strides = array<i32>} : memref<2x2x1024xbf16, #tpu.memory_space<vmem>>, vector<2x2x128xbf16>,
    %25 = vector.extract_strided_slice %22 {offsets = [0, 1, 0], sizes = [2, 2, 128], strides = [1, 1, 1]} : vector<2x3x128xbf16> to vector<2x2x128xbf16>
    %c0_36 = arith.constant 0 : index
    %c0_37 = arith.constant 0 : index
    %c640 = arith.constant 640 : index
    %26 = vector.load %arg8[%c0_36, %c0_37, %c640] : memref<2x2x1024xbf16, #tpu.memory_space<vmem>>, vector<2x2x128xbf16>
    tpu.vector_store %arg8[%c0_36, %c0_37, %c640], %25 {strides = array<i32>} : memref<2x2x1024xbf16, #tpu.memory_space<vmem>>, vector<2x2x128xbf16>,
    %c1_38 = arith.constant 1 : index
    %c1_39 = arith.constant 1 : index
    %c0_40 = arith.constant 0 : index
    %c0_41 = arith.constant 0 : index
    %27 = vector.load %arg7[%c1_38, %c1_39, %c0_40, %c0_41] : memref<3x2x3x128xbf16, #tpu.memory_space<vmem>>, vector<2x1x3x128xbf16>
    %28 = vector.shape_cast %27 : vector<2x1x3x128xbf16> to vector<2x3x128xbf16>
    %29 = vector.extract_strided_slice %28 {offsets = [0, 0, 0], sizes = [2, 2, 128], strides = [1, 1, 1]} : vector<2x3x128xbf16> to vector<2x2x128xbf16>
    %c0_42 = arith.constant 0 : index
    %c0_43 = arith.constant 0 : index
    %c768 = arith.constant 768 : index
    %30 = vector.load %arg8[%c0_42, %c0_43, %c768] : memref<2x2x1024xbf16, #tpu.memory_space<vmem>>, vector<2x2x128xbf16>
    tpu.vector_store %arg8[%c0_42, %c0_43, %c768], %29 {strides = array<i32>} : memref<2x2x1024xbf16, #tpu.memory_space<vmem>>, vector<2x2x128xbf16>,
    %31 = vector.extract_strided_slice %28 {offsets = [0, 1, 0], sizes = [2, 2, 128], strides = [1, 1, 1]} : vector<2x3x128xbf16> to vector<2x2x128xbf16>
    %c0_44 = arith.constant 0 : index
    %c0_45 = arith.constant 0 : index
    %c896 = arith.constant 896 : index
    %32 = vector.load %arg8[%c0_44, %c0_45, %c896] : memref<2x2x1024xbf16, #tpu.memory_space<vmem>>, vector<2x2x128xbf16>
    tpu.vector_store %arg8[%c0_44, %c0_45, %c896], %31 {strides = array<i32>} : memref<2x2x1024xbf16, #tpu.memory_space<vmem>>, vector<2x2x128xbf16>,
    %c0_46 = arith.constant 0 : index
    %c0_47 = arith.constant 0 : index
    %c0_48 = arith.constant 0 : index
    %33 = vector.load %arg8[%c0_46, %c0_47, %c0_48] : memref<2x2x1024xbf16, #tpu.memory_space<vmem>>, vector<1x2x1024xbf16>
    %34 = vector.shape_cast %33 : vector<1x2x1024xbf16> to vector<2x1024xbf16>
    %c0_49 = arith.constant 0 : index
    %c0_50 = arith.constant 0 : index
    %35 = vector.load %arg4[%c0_49, %c0_50] : memref<1024x64xbf16, #tpu.memory_space<vmem>>, vector<1024x64xbf16>
    %cst = arith.constant dense<0.000000e+00> : vector<2x64xf32>
    %36 = tpu.matmul %34, %35, %cst {dimension_numbers = #tpu.dot_dimension_numbers<[1], [0], [0], [1], [0, 0, 1, 1], [], []>} : vector<2x1024xbf16>, vector<1024x64xbf16>, vector<2x64xf32> -> vector<2x64xf32>
    %c0_51 = arith.constant 0 : index
    %c0_52 = arith.constant 0 : index
    %37 = vector.load %arg5[%c0_51, %c0_52] : memref<1x64xf32, #tpu.memory_space<vmem>>, vector<1x64xf32>
    %38 = vector.broadcast %37 : vector<1x64xf32> to vector<2x64xf32>
    %39 = arith.addf %36, %38 : vector<2x64xf32>
    %cst_53 = arith.constant 0.000000e+00 : f32
    %40 = vector.broadcast %cst_53 : f32 to vector<2x64xf32>
    %41 = arith.cmpf oge, %39, %40 : vector<2x64xf32>
    %cst_54 = arith.constant 2.000000e-02 : f32
    %42 = vector.broadcast %cst_54 : f32 to vector<2x64xf32>
    %43 = arith.mulf %42, %39 : vector<2x64xf32>
    %44 = arith.select %41, %39, %43 : vector<2x64xi1>, vector<2x64xf32>
    %c0_55 = arith.constant 0 : index
    %c0_56 = arith.constant 0 : index
    %c0_57 = arith.constant 0 : index
    %c0_58 = arith.constant 0 : index
    %45 = vector.load %arg6[%c0_55, %c0_56, %c0_57, %c0_58] : memref<1x2x2x64xf32, #tpu.memory_space<vmem>>, vector<1x1x2x64xf32>
    %46 = vector.shape_cast %45 : vector<1x1x2x64xf32> to vector<2x64xf32>
    %47 = vector.shape_cast %44 : vector<2x64xf32> to vector<1x1x2x64xf32>
    tpu.vector_store %arg6[%c0_55, %c0_56, %c0_57, %c0_58], %47 {strides = array<i32>} : memref<1x2x2x64xf32, #tpu.memory_space<vmem>>, vector<1x1x2x64xf32>,
    %c1_59 = arith.constant 1 : index
    %c0_60 = arith.constant 0 : index
    %c0_61 = arith.constant 0 : index
    %48 = vector.load %arg8[%c1_59, %c0_60, %c0_61] : memref<2x2x1024xbf16, #tpu.memory_space<vmem>>, vector<1x2x1024xbf16>
    %49 = vector.shape_cast %48 : vector<1x2x1024xbf16> to vector<2x1024xbf16>
    %c0_62 = arith.constant 0 : index
    %c0_63 = arith.constant 0 : index
    %50 = vector.load %arg4[%c0_62, %c0_63] : memref<1024x64xbf16, #tpu.memory_space<vmem>>, vector<1024x64xbf16>
    %cst_64 = arith.constant dense<0.000000e+00> : vector<2x64xf32>
    %51 = tpu.matmul %49, %50, %cst_64 {dimension_numbers = #tpu.dot_dimension_numbers<[1], [0], [0], [1], [0, 0, 1, 1], [], []>} : vector<2x1024xbf16>, vector<1024x64xbf16>, vector<2x64xf32> -> vector<2x64xf32>
    %c0_65 = arith.constant 0 : index
    %c0_66 = arith.constant 0 : index
    %52 = vector.load %arg5[%c0_65, %c0_66] : memref<1x64xf32, #tpu.memory_space<vmem>>, vector<1x64xf32>
    %53 = vector.broadcast %52 : vector<1x64xf32> to vector<2x64xf32>
    %54 = arith.addf %51, %53 : vector<2x64xf32>
    %cst_67 = arith.constant 0.000000e+00 : f32
    %55 = vector.broadcast %cst_67 : f32 to vector<2x64xf32>
    %56 = arith.cmpf oge, %54, %55 : vector<2x64xf32>
    %cst_68 = arith.constant 2.000000e-02 : f32
    %57 = vector.broadcast %cst_68 : f32 to vector<2x64xf32>
    %58 = arith.mulf %57, %54 : vector<2x64xf32>
    %59 = arith.select %56, %54, %58 : vector<2x64xi1>, vector<2x64xf32>
    %c0_69 = arith.constant 0 : index
    %c1_70 = arith.constant 1 : index
    %c0_71 = arith.constant 0 : index
    %c0_72 = arith.constant 0 : index
    %60 = vector.load %arg6[%c0_69, %c1_70, %c0_71, %c0_72] : memref<1x2x2x64xf32, #tpu.memory_space<vmem>>, vector<1x1x2x64xf32>
    %61 = vector.shape_cast %60 : vector<1x1x2x64xf32> to vector<2x64xf32>
    %62 = vector.shape_cast %59 : vector<2x64xf32> to vector<1x1x2x64xf32>
    tpu.vector_store %arg6[%c0_69, %c1_70, %c0_71, %c0_72], %62 {strides = array<i32>} : memref<1x2x2x64xf32, #tpu.memory_space<vmem>>, vector<1x1x2x64xf32>,
    return
  }
  func.func @transform_0(%arg0: i32, %arg1: i32) -> (i32, i32, i32, i32) {
    %c0_i32 = arith.constant 0 : i32
    %c0_i32_0 = arith.constant 0 : i32
    %c0_i32_1 = arith.constant 0 : i32
    return %arg0, %arg1, %c0_i32, %c0_i32_0 : i32, i32, i32, i32
  }
  func.func @transform_1(%arg0: i32, %arg1: i32) -> (i32, i32, i32, i32) {
    %c2_i32 = arith.constant 2 : i32
    %0 = arith.muli %arg1, %c2_i32 : i32
    %c2_i32_0 = arith.constant 2 : i32
    %1 = arith.addi %0, %c2_i32_0 : i32
    %c2_i32_1 = arith.constant 2 : i32
    %2 = arith.minsi %1, %c2_i32_1 : i32
    %c0_i32 = arith.constant 0 : i32
    %c0_i32_2 = arith.constant 0 : i32
    %c0_i32_3 = arith.constant 0 : i32
    return %arg0, %2, %c0_i32, %c0_i32_2 : i32, i32, i32, i32
  }
  func.func @transform_2(%arg0: i32, %arg1: i32) -> (i32, i32) {
    %c0_i32 = arith.constant 0 : i32
    %c0_i32_0 = arith.constant 0 : i32
    %c0_i32_1 = arith.constant 0 : i32
    return %c0_i32, %c0_i32_0 : i32, i32
  }
  func.func @transform_3(%arg0: i32, %arg1: i32) -> (i32, i32) {
    %c0_i32 = arith.constant 0 : i32
    %c0_i32_0 = arith.constant 0 : i32
    %c0_i32_1 = arith.constant 0 : i32
    return %c0_i32, %c0_i32_0 : i32, i32
  }
  func.func @transform_4(%arg0: i32, %arg1: i32) -> (i32, i32, i32, i32) {
    %c0_i32 = arith.constant 0 : i32
    %c0_i32_0 = arith.constant 0 : i32
    %c0_i32_1 = arith.constant 0 : i32
    return %arg0, %arg1, %c0_i32, %c0_i32_0 : i32, i32, i32, i32
  }
}

</mosaic_0001>

<llo_original>
// kernel: condition_forward.3
$region0: #{condition_forward.3}
  #allocation0 [shape = 'u32[]', space=smem, size = 0x4, offset = 0x4, fixed_abs, tag = 'smem constant byte address 0x4 - core index']
  #allocation1 [shape = 'u32[72,128]{1,0:T(1,128)}', space=vmem, size = 0x9000, scoped, tag = 'internal scratch']
  %s0 = inlined_call_operand.vmem [shape: bf16[162,128], index: 0, kind: input, shape index: {}]
  %s1 = inlined_call_operand.vmem [shape: bf16[128,64], index: 1, kind: input, shape index: {}]
  %s2 = inlined_call_operand.vmem [shape: f32[1,64], index: 2, kind: input, shape index: {}]
  %s3 = inlined_call_operand.vmem [shape: bf16[162,64], index: 3, kind: output, shape index: {}]
  %s4 = sld [smem:[#allocation0]]
  $region22: #{condition_forward.3} parent=0
    _
  %s6 = ssub.s32 1, %s4
  %s7 = scalar_select 0, %s6, %s4
  // Predicated region
  $region2: #{condition_forward.3} parent=0 // pred_check
    _
  $region3: #{condition_forward.3} parent=0 // pred_check_branch
    %9 = sbr.rel (0) target = $region5
  $region4: #{condition_forward.3} parent=0 // pred_region
    _
  $region5: #{condition_forward.3} parent=0 // pred_fallthru
    _
  // Predicated region
  $region6: #{condition_forward.3} parent=0 // pred_check
    _
  $region7: #{condition_forward.3} parent=0 // pred_check_branch
    %11 = sbr.rel (0) target = $region9
  $region8: #{condition_forward.3} parent=0 // pred_region
    _
  $region9: #{condition_forward.3} parent=0 // pred_fallthru
    _
  // Predicated region
  $region10: #{condition_forward.3} parent=0 // pred_check
    _
  $region11: #{condition_forward.3} parent=0 // pred_check_branch
    %13 = sbr.rel (0) target = $region13
  $region12: #{condition_forward.3} parent=0 // pred_region
    _
  $region13: #{condition_forward.3} parent=0 // pred_fallthru
    _
  %v14 = vld [vmem:[%s0] sm:$0xf]
  %v15 = vld [vmem:[%s0 + $0x4] sm:$0xf]
  %v16 = vld [vmem:[%s0 + $0x8] sm:$0xf]
  %v17 = vld [vmem:[%s0 + $0xc] sm:$0xf]
  %v18 = vld [vmem:[%s0 + $0x10] sm:$0xf]
  %v19 = vld [vmem:[%s0 + $0x14] sm:$0xf]
  %v20 = vld [vmem:[%s0 + $0x18] sm:$0xf]
  %v21 = vld [vmem:[%s0 + $0x1c] sm:$0xf]
  %v22 = vld [vmem:[%s0 + $0x20] sm:$0xf]
  %v23 = vld [vmem:[%s0 + $0x24] sm:$0xf]
  %v24 = vld [vmem:[%s0 + $0x28] sm:$0xf]
  %v25 = vld [vmem:[%s0 + $0x2c] sm:$0xf]
  %v26 = vld [vmem:[%s0 + $0x30] sm:$0xf]
  %v27 = vld [vmem:[%s0 + $0x34] sm:$0xf]
  %v28 = vld [vmem:[%s0 + $0x38] sm:$0xf]
  %v29 = vld [vmem:[%s0 + $0x3c] sm:$0xf]
  %v30 = vld [vmem:[%s0 + $0x40] sm:$0xf]
  %v31 = vld [vmem:[%s0 + $0x44] sm:$0xf]
  %v32 = vld [vmem:[%s0 + $0x48] sm:$0xf]
  %v33 = vld [vmem:[%s0 + $0x4c] sm:$0xf]
  %v34 = vld [vmem:[%s0 + $0x50] sm:$0x1]
  %v35 = vld [vmem:[%s1] sm:$0xf]
  %v36 = vld [vmem:[%s1 + $0x4] sm:$0xf]
  %v37 = vld [vmem:[%s1 + $0x8] sm:$0xf]
  %v38 = vld [vmem:[%s1 + $0xc] sm:$0xf]
  %v39 = vld [vmem:[%s1 + $0x10] sm:$0xf]
  %v40 = vld [vmem:[%s1 + $0x14] sm:$0xf]
  %v41 = vld [vmem:[%s1 + $0x18] sm:$0xf]
  %v42 = vld [vmem:[%s1 + $0x1c] sm:$0xf]
  %v43 = vld [vmem:[%s1 + $0x20] sm:$0xf]
  %v44 = vld [vmem:[%s1 + $0x24] sm:$0xf]
  %v45 = vld [vmem:[%s1 + $0x28] sm:$0xf]
  %v46 = vld [vmem:[%s1 + $0x2c] sm:$0xf]
  %v47 = vld [vmem:[%s1 + $0x30] sm:$0xf]
  %v48 = vld [vmem:[%s1 + $0x34] sm:$0xf]
  %v49 = vld [vmem:[%s1 + $0x38] sm:$0xf]
  %v50 = vld [vmem:[%s1 + $0x3c] sm:$0xf]
  %v51 = vld [vmem:[%s2] sm:$0x1]
  %v53 = vperm.slane %v51, 0
  %v76 = vunpack.c.l.b16 %v14
  %v77 = vunpack.c.l.b16 %v15
  %v78 = vunpack.c.l.b16 %v16
  %v79 = vunpack.c.l.b16 %v17
  %v80 = vunpack.c.l.b16 %v18
  %v81 = vunpack.c.l.b16 %v19
  %v82 = vunpack.c.l.b16 %v20
  %v83 = vunpack.c.l.b16 %v21
  %v84 = vunpack.c.l.b16 %v22
  %v85 = vunpack.c.l.b16 %v23
  %v86 = vunpack.c.l.b16 %v24
  %v87 = vunpack.c.l.b16 %v25
  %v88 = vunpack.c.l.b16 %v26
  %v89 = vunpack.c.l.b16 %v27
  %v90 = vunpack.c.l.b16 %v28
  %v91 = vunpack.c.l.b16 %v29
  %v92 = vunpack.c.l.b16 %v30
  %v93 = vunpack.c.l.b16 %v31
  %v94 = vunpack.c.l.b16 %v32
  %v95 = vunpack.c.l.b16 %v33
  %v96 = vunpack.c.l.b16 %v34
  %v97 = vpack.c.b16 %v77, %v76
  %v98 = vpack.c.b16 %v79, %v78
  %v99 = vpack.c.b16 %v81, %v80
  %v100 = vpack.c.b16 %v83, %v82
  %v101 = vpack.c.b16 %v85, %v84
  %v102 = vpack.c.b16 %v87, %v86
  %v103 = vpack.c.b16 %v89, %v88
  %v104 = vpack.c.b16 %v91, %v90
  %v105 = vpack.c.b16 %v93, %v92
  %v106 = vpack.c.b16 %v95, %v94
  %v107 = vpack.c.b16 %v96, %v96
  %v135 = vunpack.c.l.b16 %v35
  %v136 = vunpack.c.l.b16 %v36
  %v137 = vunpack.c.l.b16 %v37
  %v138 = vunpack.c.l.b16 %v38
  %v139 = vunpack.c.l.b16 %v39
  %v140 = vunpack.c.l.b16 %v40
  %v141 = vunpack.c.l.b16 %v41
  %v142 = vunpack.c.l.b16 %v42
  %v143 = vunpack.c.l.b16 %v43
  %v144 = vunpack.c.l.b16 %v44
  %v145 = vunpack.c.l.b16 %v45
  %v146 = vunpack.c.l.b16 %v46
  %v147 = vunpack.c.l.b16 %v47
  %v148 = vunpack.c.l.b16 %v48
  %v149 = vunpack.c.l.b16 %v49
  %v150 = vunpack.c.l.b16 %v50
  %v151 = vpack.c.b16 %v136, %v135
  %v152 = vpack.c.b16 %v138, %v137
  %v153 = vpack.c.b16 %v140, %v139
  %v154 = vpack.c.b16 %v142, %v141
  %v155 = vpack.c.b16 %v144, %v143
  %v156 = vpack.c.b16 %v146, %v145
  %v157 = vpack.c.b16 %v148, %v147
  %v158 = vpack.c.b16 %v150, %v149
  %167 = vmatpush.bf16.msra.mxu0 %v158
  %168 = vmatpush.bf16.msra.mxu0 %v157
  %169 = vmatpush.bf16.msra.mxu0 %v156
  %170 = vmatpush.bf16.msra.mxu0 %v155
  %171 = vmatpush.bf16.msra.mxu0 %v154
  %172 = vmatpush.bf16.msra.mxu0 %v153
  %173 = vmatpush.bf16.msra.mxu0 %v152
  %174 = vmatpush.bf16.msra.mxu0 %v151
  %175 = vmatmul.bf16.gmra.mxu0 %v97
  %v176 = vpop.f32.mrf.mxu0
  %v177 = vadd.f32 %v53, %v176
  %v178 = vpop.f32.mrf.mxu0
  %v179 = vadd.f32 %v53, %v178
  %180 = vmatmul.bf16.gmra.mxu0 %v98
  %v181 = vpop.f32.mrf.mxu0
  %v182 = vadd.f32 %v53, %v181
  %v183 = vpop.f32.mrf.mxu0
  %v184 = vadd.f32 %v53, %v183
  %185 = vmatmul.bf16.gmra.mxu0 %v99
  %v186 = vpop.f32.mrf.mxu0
  %v187 = vadd.f32 %v53, %v186
  %v188 = vpop.f32.mrf.mxu0
  %v189 = vadd.f32 %v53, %v188
  %190 = vmatmul.bf16.gmra.mxu0 %v100
  %v191 = vpop.f32.mrf.mxu0
  %v192 = vadd.f32 %v53, %v191
  %v193 = vpop.f32.mrf.mxu0
  %v194 = vadd.f32 %v53, %v193
  %195 = vmatmul.bf16.gmra.mxu0 %v101
  %v196 = vpop.f32.mrf.mxu0
  %v197 = vadd.f32 %v53, %v196
  %v198 = vpop.f32.mrf.mxu0
  %v199 = vadd.f32 %v53, %v198
  %200 = vmatmul.bf16.gmra.mxu0 %v102
  %v201 = vpop.f32.mrf.mxu0
  %v202 = vadd.f32 %v53, %v201
  %v203 = vpop.f32.mrf.mxu0
  %v204 = vadd.f32 %v53, %v203
  %205 = vmatmul.bf16.gmra.mxu0 %v103
  %v206 = vpop.f32.mrf.mxu0
  %v207 = vadd.f32 %v53, %v206
  %v208 = vpop.f32.mrf.mxu0
  %v209 = vadd.f32 %v53, %v208
  %210 = vmatmul.bf16.gmra.mxu0 %v104
  %v211 = vpop.f32.mrf.mxu0
  %v212 = vadd.f32 %v53, %v211
  %v213 = vpop.f32.mrf.mxu0
  %v214 = vadd.f32 %v53, %v213
  %215 = vmatmul.bf16.gmra.mxu0 %v105
  %v216 = vpop.f32.mrf.mxu0
  %v217 = vadd.f32 %v53, %v216
  %v218 = vpop.f32.mrf.mxu0
  %v219 = vadd.f32 %v53, %v218
  %220 = vmatmul.bf16.gmra.mxu0 %v106
  %v221 = vpop.f32.mrf.mxu0
  %v222 = vadd.f32 %v53, %v221
  %v223 = vpop.f32.mrf.mxu0
  %v224 = vadd.f32 %v53, %v223
  %225 = vmatmul.bf16.gmra.mxu0 %v107
  %v226 = vpop.f32.mrf.mxu0
  %v227 = vadd.f32 %v53, %v226
  %v228 = vpop.f32.mrf.mxu0
  %229 = vdwg.mxu0
  %vm230 = vcmp.ge.f32.partialorder %v177, 0.0
  %vm231 = vcmp.ge.f32.partialorder %v179, 0.0
  %vm232 = vcmp.ge.f32.partialorder %v182, 0.0
  %vm233 = vcmp.ge.f32.partialorder %v184, 0.0
  %vm234 = vcmp.ge.f32.partialorder %v187, 0.0
  %vm235 = vcmp.ge.f32.partialorder %v189, 0.0
  %vm236 = vcmp.ge.f32.partialorder %v192, 0.0
  %vm237 = vcmp.ge.f32.partialorder %v194, 0.0
  %vm238 = vcmp.ge.f32.partialorder %v197, 0.0
  %vm239 = vcmp.ge.f32.partialorder %v199, 0.0
  %vm240 = vcmp.ge.f32.partialorder %v202, 0.0
  %vm241 = vcmp.ge.f32.partialorder %v204, 0.0
  %vm242 = vcmp.ge.f32.partialorder %v207, 0.0
  %vm243 = vcmp.ge.f32.partialorder %v209, 0.0
  %vm244 = vcmp.ge.f32.partialorder %v212, 0.0
  %vm245 = vcmp.ge.f32.partialorder %v214, 0.0
  %vm246 = vcmp.ge.f32.partialorder %v217, 0.0
  %vm247 = vcmp.ge.f32.partialorder %v219, 0.0
  %vm248 = vcmp.ge.f32.partialorder %v222, 0.0
  %vm249 = vcmp.ge.f32.partialorder %v224, 0.0
  %vm250 = vcmp.ge.f32.partialorder %v227, 0.0
  %v251 = vmul.f32 %v177, 0.2
  %v252 = vmul.f32 %v179, 0.2
  %v253 = vmul.f32 %v182, 0.2
  %v254 = vmul.f32 %v184, 0.2
  %v255 = vmul.f32 %v187, 0.2
  %v256 = vmul.f32 %v189, 0.2
  %v257 = vmul.f32 %v192, 0.2
  %v258 = vmul.f32 %v194, 0.2
  %v259 = vmul.f32 %v197, 0.2
  %v260 = vmul.f32 %v199, 0.2
  %v261 = vmul.f32 %v202, 0.2
  %v262 = vmul.f32 %v204, 0.2
  %v263 = vmul.f32 %v207, 0.2
  %v264 = vmul.f32 %v209, 0.2
  %v265 = vmul.f32 %v212, 0.2
  %v266 = vmul.f32 %v214, 0.2
  %v267 = vmul.f32 %v217, 0.2
  %v268 = vmul.f32 %v219, 0.2
  %v269 = vmul.f32 %v222, 0.2
  %v270 = vmul.f32 %v224, 0.2
  %v271 = vmul.f32 %v227, 0.2
  %v272 = vsel %vm230, %v177, %v251
  %v273 = vsel %vm231, %v179, %v252
  %v274 = vsel %vm232, %v182, %v253
  %v275 = vsel %vm233, %v184, %v254
  %v276 = vsel %vm234, %v187, %v255
  %v277 = vsel %vm235, %v189, %v256
  %v278 = vsel %vm236, %v192, %v257
  %v279 = vsel %vm237, %v194, %v258
  %v280 = vsel %vm238, %v197, %v259
  %v281 = vsel %vm239, %v199, %v260
  %v282 = vsel %vm240, %v202, %v261
  %v283 = vsel %vm241, %v204, %v262
  %v284 = vsel %vm242, %v207, %v263
  %v285 = vsel %vm243, %v209, %v264
  %v286 = vsel %vm244, %v212, %v265
  %v287 = vsel %vm245, %v214, %v266
  %v288 = vsel %vm246, %v217, %v267
  %v289 = vsel %vm247, %v219, %v268
  %v290 = vsel %vm248, %v222, %v269
  %v291 = vsel %vm249, %v224, %v270
  %v292 = vsel %vm250, %v227, %v271
  %v293 = vpack.c.bf16 %v272, %v272
  %v294 = vpack.c.bf16 %v273, %v273
  %v295 = vpack.c.bf16 %v274, %v274
  %v296 = vpack.c.bf16 %v275, %v275
  %v297 = vpack.c.bf16 %v276, %v276
  %v298 = vpack.c.bf16 %v277, %v277
  %v299 = vpack.c.bf16 %v278, %v278
  %v300 = vpack.c.bf16 %v279, %v279
  %v301 = vpack.c.bf16 %v280, %v280
  %v302 = vpack.c.bf16 %v281, %v281
  %v303 = vpack.c.bf16 %v282, %v282
  %v304 = vpack.c.bf16 %v283, %v283
  %v305 = vpack.c.bf16 %v284, %v284
  %v306 = vpack.c.bf16 %v285, %v285
  %v307 = vpack.c.bf16 %v286, %v286
  %v308 = vpack.c.bf16 %v287, %v287
  %v309 = vpack.c.bf16 %v288, %v288
  %v310 = vpack.c.bf16 %v289, %v289
  %v311 = vpack.c.bf16 %v290, %v290
  %v312 = vpack.c.bf16 %v291, %v291
  %v313 = vpack.c.bf16 %v292, %v292
  %vm314 = vcmask 519168
  %315 = vst.msk [vmem:[%s3] sm:$0xf] %vm314, %v293
  %316 = vst.msk [vmem:[%s3 + $0x4] sm:$0xf] %vm314, %v294
  %317 = vst.msk [vmem:[%s3 + $0x8] sm:$0xf] %vm314, %v295
  %318 = vst.msk [vmem:[%s3 + $0xc] sm:$0xf] %vm314, %v296
  %319 = vst.msk [vmem:[%s3 + $0x10] sm:$0xf] %vm314, %v297
  %320 = vst.msk [vmem:[%s3 + $0x14] sm:$0xf] %vm314, %v298
  %321 = vst.msk [vmem:[%s3 + $0x18] sm:$0xf] %vm314, %v299
  %322 = vst.msk [vmem:[%s3 + $0x1c] sm:$0xf] %vm314, %v300
  %323 = vst.msk [vmem:[%s3 + $0x20] sm:$0xf] %vm314, %v301
  %324 = vst.msk [vmem:[%s3 + $0x24] sm:$0xf] %vm314, %v302
  %325 = vst.msk [vmem:[%s3 + $0x28] sm:$0xf] %vm314, %v303
  %326 = vst.msk [vmem:[%s3 + $0x2c] sm:$0xf] %vm314, %v304
  %327 = vst.msk [vmem:[%s3 + $0x30] sm:$0xf] %vm314, %v305
  %328 = vst.msk [vmem:[%s3 + $0x34] sm:$0xf] %vm314, %v306
  %329 = vst.msk [vmem:[%s3 + $0x38] sm:$0xf] %vm314, %v307
  %330 = vst.msk [vmem:[%s3 + $0x3c] sm:$0xf] %vm314, %v308
  %331 = vst.msk [vmem:[%s3 + $0x40] sm:$0xf] %vm314, %v309
  %332 = vst.msk [vmem:[%s3 + $0x44] sm:$0xf] %vm314, %v310
  %333 = vst.msk [vmem:[%s3 + $0x48] sm:$0xf] %vm314, %v311
  %334 = vst.msk [vmem:[%s3 + $0x4c] sm:$0xf] %vm314, %v312
  %vm335 = vcmask 516096
  %336 = vst.msk [vmem:[%s3 + $0x50] sm:$0x1] %vm335, %v313
  // Predicated region
  $region14: #{condition_forward.3} parent=0 // pred_check
    _
  $region15: #{condition_forward.3} parent=0 // pred_check_branch
    %338 = sbr.rel (0) target = $region17
  $region16: #{condition_forward.3} parent=0 // pred_region
    _
  $region17: #{condition_forward.3} parent=0 // pred_fallthru
    _
  // Predicated region
  $region18: #{condition_forward.3} parent=0 // pred_check
    _
  $region19: #{condition_forward.3} parent=0 // pred_check_branch
    %340 = sbr.rel (0) target = $region21
  $region20: #{condition_forward.3} parent=0 // pred_region
    _
  $region21: #{condition_forward.3} parent=0 // pred_fallthru
    _

// kernel: condition_forward.5
$region0: #{condition_forward.5}
  #allocation0 [shape = 'u32[]', space=smem, size = 0x4, offset = 0x4, fixed_abs, tag = 'smem constant byte address 0x4 - core index']
  #allocation1 [shape = 'u32[72,128]{1,0:T(1,128)}', space=vmem, size = 0x9000, scoped, tag = 'internal scratch']
  #allocation2 [shape = 'bf16[3,2,3,128]{3,2,1,0:T(4,128)(2,1)}', space=vmem, size = 0x1800, scoped, tag = 'scratch operand']
  #allocation3 [shape = 'bf16[2,2,1024]{2,1,0:T(2,128)(2,1)}', space=vmem, size = 0x2000, scoped, tag = 'scratch operand']
  %s0 = inlined_call_operand.vmem [shape: bf16[2,6,3,128], index: 0, kind: input, shape index: {}, may-alias: {0,1}]
  %s1 = inlined_call_operand.vmem [shape: bf16[2,6,3,128], index: 1, kind: input, shape index: {}, may-alias: {0,1}]
  %s2 = inlined_call_operand.vmem [shape: bf16[1024,64], index: 2, kind: input, shape index: {}]
  %s3 = inlined_call_operand.vmem [shape: f32[1,64], index: 3, kind: input, shape index: {}]
  %s4 = inlined_call_operand.hbm [shape: f32[2,2,2,64], index: 4, kind: output, shape index: {}]
  %s5 = sld [smem:[#allocation0]]
  $region49: #{condition_forward.5} parent=0
    _
  %s7 = ssub.s32 1, %s5
  %s8 = scalar_select 0, %s7, %s5
  $region1: #{condition_forward.5} parent=0
    #allocation4 [shape = 'u8[4096]{0}', space=vmem, size = 0x1000, scoped, tag = 'output window, operand 0']
    #allocation5 [shape = 's32[2]{0}', space=sflag, size = 0x8, scoped, tag = 'scoped memory for condition_forward.5']
    %9 = vsyncpa [#allocation5], 0
    %s10 = scalar_lea.sflag [#allocation5], 1
    %11 = vsyncpa %s10, 0
    loop: start=0, step=1, limit=4
    $region2: #{condition_forward.5} parent=1 // loop_pre_header
      _
    $region3: #{condition_forward.5} parent=1 // loop_header
      %s13 = sphi 0, %s17
      %p14 = scmp.ge.s32.totalorder %s13, 4
      %s20 = sphi 0, %s32
      %s21 = sphi 0, %s28
      %s22 = sphi 0, %s20
      %s23 = sphi 0, %s21
      %s24 = sphi 0, %s22
      %s25 = sphi 0, %s23
      %s37 = sphi 0, %s39
      %s40 = sphi 0, %s37
      %s41 = sphi 0, %s40
      %s57 = sphi 0, %s41
      %s73 = sphi 0, %s75
      %s76 = sphi 0, %s73
      %s77 = sphi 0, %s76
      %s93 = sphi 0, %s77
      %s97 = sphi 0, %s97
      %s99 = sphi 0, %s97
      %s100 = sphi 0, %s99
      %s114 = sphi 0, %s100
      %s118 = sphi 0, %s118
      %s120 = sphi 0, %s118
      %s121 = sphi 0, %s120
      %s135 = sphi 0, %s121
      %s143 = sphi 0, %s145
      %s146 = sphi 0, %s143
      %s147 = sphi 0, %s146
      %s163 = sphi 0, %s147
    $region4: #{condition_forward.5} parent=1 // loop_header_branch
      %16 = sbr.rel (%p14) target = $region8
    $region5: #{condition_forward.5} parent=1 // loop_body
      %s18 = ssub.s32 %s13, 1
      %s19 = ssub.s32 %s13, 2
      %s26 = sadd.s32 1, %s21
      %p27 = scmp.ge.s32.totalorder %s26, 1
      %s28 = scalar_select %p27, 0, %s26
      %s29 = sadd.s32 1, %s20
      %s30 = scalar_select %p27, %s29, %s20
      %p31 = scmp.ge.s32.totalorder %s30, 2
      %s32 = scalar_select %p31, 0, %s30
      %s33 = ssub.s32 %s20, %s32
      %s34 = ssub.s32 %s21, %s28
      %s35 = sor.u32 %s33, %s34
      %p36 = scmp.eq.s32.totalorder %s35, 0
      %s38 = sadd.s32 %s37, 1
      %s39 = scalar_select %p36, %s37, %s38
      %p42 = pneg %p36
      %p43 = scmp.eq.s32.totalorder %s13, 1
      %p44 = por %p42, %p43
      %p45 = scmp.ne.s32.totalorder %s37, %s40
      %p46 = scmp.eq.s32.totalorder %s13, 0
      %p47 = por %p45, %p46
      %p48 = scmp.ne.s32.totalorder %s37, %s40
      %p49 = scmp.eq.s32.totalorder %s18, 1
      %p50 = por %p48, %p49
      %p51 = scmp.ne.s32.totalorder %s40, %s41
      %p52 = scmp.eq.s32.totalorder %s18, 0
      %p53 = por %p51, %p52
      %p54 = scmp.ne.s32.totalorder %s40, %s41
      %p55 = scmp.eq.s32.totalorder %s19, 1
      %p56 = por %p54, %p55
      %p58 = scmp.ne.s32.totalorder %s41, %s57
      %p59 = scmp.eq.s32.totalorder %s19, 0
      %p60 = por %p58, %p59
      %s61 = smul.u32 %s21, 2
      %s62 = sadd.s32 %s61, 2
      %p63 = scmp.lt.s32.totalorder %s62, 2
      %s64 = scalar_select %p63, %s62, 2
      %s65 = smul.u32 %s28, 2
      %s66 = sadd.s32 %s65, 2
      %p67 = scmp.lt.s32.totalorder %s66, 2
      %s68 = scalar_select %p67, %s66, 2
      %s69 = ssub.s32 %s20, %s32
      %s70 = ssub.s32 %s64, %s68
      %s71 = sor.u32 %s69, %s70
      %p72 = scmp.eq.s32.totalorder %s71, 0
      %s74 = sadd.s32 %s73, 1
      %s75 = scalar_select %p72, %s73, %s74
      %p78 = pneg %p72
      %p79 = scmp.eq.s32.totalorder %s13, 1
      %p80 = por %p78, %p79
      %p81 = scmp.ne.s32.totalorder %s73, %s76
      %p82 = scmp.eq.s32.totalorder %s13, 0
      %p83 = por %p81, %p82
      %p84 = scmp.ne.s32.totalorder %s73, %s76
      %p85 = scmp.eq.s32.totalorder %s18, 1
      %p86 = por %p84, %p85
      %p87 = scmp.ne.s32.totalorder %s76, %s77
      %p88 = scmp.eq.s32.totalorder %s18, 0
      %p89 = por %p87, %p88
      %p90 = scmp.ne.s32.totalorder %s76, %s77
      %p91 = scmp.eq.s32.totalorder %s19, 1
      %p92 = por %p90, %p91
      %p94 = scmp.ne.s32.totalorder %s77, %s93
      %p95 = scmp.eq.s32.totalorder %s19, 0
      %p96 = por %p94, %p95
      %s98 = sadd.s32 %s97, 1
      %p101 = scmp.eq.s32.totalorder %s13, 1
      %p102 = scmp.ne.s32.totalorder %s97, %s99
      %p103 = scmp.eq.s32.totalorder %s13, 0
      %p104 = por %p102, %p103
      %p105 = scmp.ne.s32.totalorder %s97, %s99
      %p106 = scmp.eq.s32.totalorder %s18, 1
      %p107 = por %p105, %p106
      %p108 = scmp.ne.s32.totalorder %s99, %s100
      %p109 = scmp.eq.s32.totalorder %s18, 0
      %p110 = por %p108, %p109
      %p111 = scmp.ne.s32.totalorder %s99, %s100
      %p112 = scmp.eq.s32.totalorder %s19, 1
      %p113 = por %p111, %p112
      %p115 = scmp.ne.s32.totalorder %s100, %s114
      %p116 = scmp.eq.s32.totalorder %s19, 0
      %p117 = por %p115, %p116
      %s119 = sadd.s32 %s118, 1
      %p122 = scmp.eq.s32.totalorder %s13, 1
      %p123 = scmp.ne.s32.totalorder %s118, %s120
      %p124 = scmp.eq.s32.totalorder %s13, 0
      %p125 = por %p123, %p124
      %p126 = scmp.ne.s32.totalorder %s118, %s120
      %p127 = scmp.eq.s32.totalorder %s18, 1
      %p128 = por %p126, %p127
      %p129 = scmp.ne.s32.totalorder %s120, %s121
      %p130 = scmp.eq.s32.totalorder %s18, 0
      %p131 = por %p129, %p130
      %p132 = scmp.ne.s32.totalorder %s120, %s121
      %p133 = scmp.eq.s32.totalorder %s19, 1
      %p134 = por %p132, %p133
      %p136 = scmp.ne.s32.totalorder %s121, %s135
      %p137 = scmp.eq.s32.totalorder %s19, 0
      %p138 = por %p136, %p137
      %s139 = ssub.s32 %s20, %s32
      %s140 = ssub.s32 %s21, %s28
      %s141 = sor.u32 %s139, %s140
      %p142 = scmp.eq.s32.totalorder %s141, 0
      %s144 = sadd.s32 %s143, 1
      %s145 = scalar_select %p142, %s143, %s144
      %p148 = pneg %p142
      %p149 = scmp.eq.s32.totalorder %s13, 1
      %p150 = por %p148, %p149
      %p151 = scmp.ne.s32.totalorder %s143, %s146
      %p152 = scmp.eq.s32.totalorder %s13, 0
      %p153 = por %p151, %p152
      %p154 = scmp.ne.s32.totalorder %s143, %s146
      %p155 = scmp.eq.s32.totalorder %s18, 1
      %p156 = por %p154, %p155
      %p157 = scmp.ne.s32.totalorder %s146, %s147
      %p158 = scmp.eq.s32.totalorder %s18, 0
      %p159 = por %p157, %p158
      %p160 = scmp.ne.s32.totalorder %s146, %s147
      %p161 = scmp.eq.s32.totalorder %s19, 1
      %p162 = por %p160, %p161
      %p164 = scmp.ne.s32.totalorder %s147, %s163
      %p165 = scmp.eq.s32.totalorder %s19, 0
      %p166 = por %p164, %p165
      %p167 = scmp.le.s32.totalorder 1, %s13
      %p168 = scmp.lt.s32.totalorder %s13, 3
      %p169 = pnand %p167, %p168
      %p170 = pneg %p169
      // Predicated region
      $region9: #{condition_forward.5} parent=5 // pred_check
        _
      $region10: #{condition_forward.5} parent=5 // pred_check_branch
        %172 = sbr.rel (%p169) target = $region12
      $region11: #{condition_forward.5} parent=5 // pred_region
        %s173 = ssub.s32 %s13, 1
        // Predicated region
        $region13: #{condition_forward.5} parent=11 // pred_check
          %p174 = pneg %p110
        $region14: #{condition_forward.5} parent=11 // pred_check_branch
          %176 = sbr.rel (%p174) target = $region16
        $region15: #{condition_forward.5} parent=11 // pred_region
          _
        $region16: #{condition_forward.5} parent=11 // pred_fallthru
          _
        // Predicated region
        $region17: #{condition_forward.5} parent=11 // pred_check
          %p177 = pneg %p131
        $region18: #{condition_forward.5} parent=11 // pred_check_branch
          %179 = sbr.rel (%p177) target = $region20
        $region19: #{condition_forward.5} parent=11 // pred_region
          _
        $region20: #{condition_forward.5} parent=11 // pred_fallthru
          _
      $region12: #{condition_forward.5} parent=5 // pred_fallthru
        _
      %p180 = scmp.lt.s32.totalorder %s13, 2
      // Predicated region
      $region21: #{condition_forward.5} parent=5 // pred_check
        %p181 = pneg %p180
      $region22: #{condition_forward.5} parent=5 // pred_check_branch
        %183 = sbr.rel (%p181) target = $region24
      $region23: #{condition_forward.5} parent=5 // pred_region
        // Predicated region
        $region25: #{condition_forward.5} parent=23 // pred_check
          %p184 = pneg %p47
        $region26: #{condition_forward.5} parent=23 // pred_check_branch
          %186 = sbr.rel (%p184) target = $region28
        $region27: #{condition_forward.5} parent=23 // pred_region
          %s187 = smul.u32 4, %s21
          %s188 = ssub.s32 6, %s187
          %p189 = scmp.lt.s32.totalorder %s188, 4
          %s190 = scalar_select %p189, %s188, 4
          %s191 = smul.u32 2, %s190
          %p192 = scmp.lt.s32.totalorder %s20, 1
          %s193 = scalar_select %p192, %s20, 1
          %p194 = scmp.lt.s32.totalorder %s187, 5
          %s195 = scalar_select %p194, %s187, 5
          %s196 = smul.addr %s193, 6
          %s197 = sadd.s32 %s195, %s196
          %s198 = smul.addr %s197, 2
          %s199 = scalar_lea.vmem %s0, %s198
          %s200 = smul.u32 4, %s21
          %s201 = ssub.s32 6, %s200
          %p202 = scmp.lt.s32.totalorder %s201, 4
          %s203 = scalar_select %p202, %s201, 4
          %s204 = smul.u32 2, %s203
        $region28: #{condition_forward.5} parent=23 // pred_fallthru
          _
        // Predicated region
        $region29: #{condition_forward.5} parent=23 // pred_check
          %p205 = pneg %p83
        $region30: #{condition_forward.5} parent=23 // pred_check_branch
          %207 = sbr.rel (%p205) target = $region32
        $region31: #{condition_forward.5} parent=23 // pred_region
          %s208 = smul.u32 %s21, 2
          %s209 = sadd.s32 %s208, 2
          %p210 = scmp.lt.s32.totalorder %s209, 2
          %s211 = scalar_select %p210, %s209, 2
          %s212 = smul.u32 2, %s211
          %p213 = scmp.lt.s32.totalorder %s20, 1
          %s214 = scalar_select %p213, %s20, 1
          %p215 = scmp.lt.s32.totalorder %s212, 5
          %s216 = scalar_select %p215, %s212, 5
          %s217 = smul.addr %s214, 6
          %s218 = sadd.s32 %s216, %s217
          %s219 = smul.addr %s218, 2
          %s220 = scalar_lea.vmem %s1, %s219
          %s221 = smul.u32 %s21, 2
          %s222 = sadd.s32 %s221, 2
          %p223 = scmp.lt.s32.totalorder %s222, 2
          %s224 = scalar_select %p223, %s222, 2
          %s225 = smul.u32 2, %s224
        $region32: #{condition_forward.5} parent=23 // pred_fallthru
          _
      $region24: #{condition_forward.5} parent=5 // pred_fallthru
        _
      %p226 = scmp.le.s32.totalorder 1, %s13
      %p227 = scmp.lt.s32.totalorder %s13, 3
      %p228 = pnand %p226, %p227
      %p229 = pneg %p228
      // Predicated region
      $region33: #{condition_forward.5} parent=5 // pred_check
        _
      $region34: #{condition_forward.5} parent=5 // pred_check_branch
        %231 = sbr.rel (%p228) target = $region36
      $region35: #{condition_forward.5} parent=5 // pred_region
        %s232 = ssub.s32 %s13, 1
        %s233 = smul.u32 4, %s23
        %s234 = ssub.s32 6, %s233
        %p235 = scmp.lt.s32.totalorder %s234, 4
        %s236 = scalar_select %p235, %s234, 4
        %s237 = smul.u32 2, %s236
        %p238 = scmp.lt.s32.totalorder %s22, 1
        %s239 = scalar_select %p238, %s22, 1
        %p240 = scmp.lt.s32.totalorder %s233, 5
        %s241 = scalar_select %p240, %s233, 5
        %s242 = smul.addr %s239, 6
        %s243 = sadd.s32 %s241, %s242
        %s244 = smul.addr %s243, 2
        %s245 = scalar_lea.vmem %s0, %s244
        %p246 = pneg %p53
        %p247 = pneg %p50
        %s248 = smul.u32 %s23, 2
        %s249 = sadd.s32 %s248, 2
        %p250 = scmp.lt.s32.totalorder %s249, 2
        %s251 = scalar_select %p250, %s249, 2
        %s252 = smul.u32 2, %s251
        %p253 = scmp.lt.s32.totalorder %s22, 1
        %s254 = scalar_select %p253, %s22, 1
        %p255 = scmp.lt.s32.totalorder %s252, 5
        %s256 = scalar_select %p255, %s252, 5
        %s257 = smul.addr %s254, 6
        %s258 = sadd.s32 %s256, %s257
        %s259 = smul.addr %s258, 2
        %s260 = scalar_lea.vmem %s1, %s259
        %p261 = pneg %p89
        %p262 = pneg %p86
        %p263 = pneg %p110
        %p264 = pneg %p107
        %p265 = pneg %p131
        %p266 = pneg %p128
        %p267 = pneg %p159
        %p268 = pneg %p156
        %s269 = sand.u32 %s146, 1
        %s270 = scalar_lea.sflag [#allocation5], %s269
        %s271 = sand.u32 %s146, 1
        %s272 = smul.addr %s271, 4
        %s273 = scalar_lea.vmem [#allocation4], %s272
        %s274 = smul.u32 4, %s23
        %s275 = ssub.s32 6, %s274
        %p276 = scmp.lt.s32.totalorder %s275, 4
        %s277 = scalar_select %p276, %s275, 4
        %s278 = smul.u32 2, %s277
        %p279 = scmp.lt.s32.totalorder %s22, 1
        %s280 = scalar_select %p279, %s22, 1
        %p281 = scmp.lt.s32.totalorder %s274, 5
        %s282 = scalar_select %p281, %s274, 5
        %s283 = smul.addr %s280, 6
        %s284 = sadd.s32 %s282, %s283
        %s285 = smul.addr %s284, 2
        %s286 = scalar_lea.vmem %s0, %s285
        %s287 = smul.u32 4, %s23
        %s288 = ssub.s32 6, %s287
        %p289 = scmp.lt.s32.totalorder %s288, 4
        %s290 = scalar_select %p289, %s288, 4
        %s291 = smul.u32 2, %s290
        %s292 = smul.u32 %s23, 2
        %s293 = sadd.s32 %s292, 2
        %p294 = scmp.lt.s32.totalorder %s293, 2
        %s295 = scalar_select %p294, %s293, 2
        %s296 = smul.u32 2, %s295
        %p297 = scmp.lt.s32.totalorder %s22, 1
        %s298 = scalar_select %p297, %s22, 1
        %p299 = scmp.lt.s32.totalorder %s296, 5
        %s300 = scalar_select %p299, %s296, 5
        %s301 = smul.addr %s298, 6
        %s302 = sadd.s32 %s300, %s301
        %s303 = smul.addr %s302, 2
        %s304 = scalar_lea.vmem %s1, %s303
        %s305 = smul.u32 %s23, 2
        %s306 = sadd.s32 %s305, 2
        %p307 = scmp.lt.s32.totalorder %s306, 2
        %s308 = scalar_select %p307, %s306, 2
        %s309 = smul.u32 2, %s308
        %s310 = smul.u32 2, %s23
        %v311 = vld [vmem:[%s286] sm:$0x3]
        %v312 = vld [vmem:[%s286 + $0x2] sm:$0x3]
        %v313 = vld [vmem:[%s286 + $0x4] sm:$0x3]
        %v314 = vld [vmem:[%s286 + $0x6] sm:$0x3]
        %vm315 = vcmask 1041408
        %vm316 = vsmask.f32 1280
        %vm317 = vmand %vm315, %vm316
        %v318 = vld [vmem:[#allocation2] sm:$0x3]
        %v319 = vsel %vm317, %v311, %v318
        %320 = vst [vmem:[#allocation2] sm:$0x3] %v319
        %v321 = vld [vmem:[#allocation2 + $0x2] sm:$0x3]
        %v322 = vsel %vm317, %v312, %v321
        %323 = vst [vmem:[#allocation2 + $0x2] sm:$0x3] %v322
        %v324 = vld [vmem:[#allocation2 + $0x4] sm:$0x3]
        %v325 = vsel %vm317, %v313, %v324
        %326 = vst [vmem:[#allocation2 + $0x4] sm:$0x3] %v325
        %v327 = vld [vmem:[#allocation2 + $0x6] sm:$0x3]
        %v328 = vsel %vm317, %v314, %v327
        %329 = vst [vmem:[#allocation2 + $0x6] sm:$0x3] %v328
        %v330 = vld [vmem:[%s304] sm:$0x3]
        %v331 = vld [vmem:[%s304 + $0x2] sm:$0x3]
        %s332 = scalar_lea.vmem [#allocation2], 8
        %v333 = vld [vmem:[%s332] sm:$0x3]
        %v334 = vsel %vm317, %v330, %v333
        %335 = vst [vmem:[%s332] sm:$0x3] %v334
        %v336 = vld [vmem:[%s332 + $0x2] sm:$0x3]
        %v337 = vsel %vm317, %v331, %v336
        %338 = vst [vmem:[%s332 + $0x2] sm:$0x3] %v337
        %v339 = vld [vmem:[#allocation2] sm:$0x3]
        %v340 = vld [vmem:[#allocation2 + $0x4] sm:$0x3]
        %341 = vst [vmem:[#allocation3] sm:$0x1] %v339
        %342 = vst [vmem:[#allocation3 + $0x8] sm:$0x1] %v340
        %v345 = vrot.slane %v339, 1
        %v346 = vrot.slane %v339, 2
        %v347 = vrot.slane %v339, 3
        %v348 = vrot.slane %v340, 1
        %v349 = vrot.slane %v340, 2
        %v350 = vrot.slane %v340, 3
        %vm351 = vcmask 1040384
        %v354 = vsel %vm351, %v339, %v345
        %vm355 = vcmask 1042434
        %v358 = vsel %vm355, %v346, %v347
        %vm359 = vcmask 1041408
        %v360 = vsel %vm359, %v354, %v358
        %vm361 = vcmask 1041409
        %v362 = vsel %vm361, %v339, %v345
        %vm363 = vcmask 1043459
        %v364 = vsel %vm363, %v346, %v347
        %vm365 = vcmask 1042433
        %v366 = vsel %vm365, %v362, %v364
        %v368 = vrot.slane %v366, 1
        %v371 = vsel %vm351, %v340, %v348
        %v374 = vsel %vm355, %v349, %v350
        %v375 = vsel %vm359, %v371, %v374
        %v376 = vsel %vm361, %v340, %v348
        %v377 = vsel %vm363, %v349, %v350
        %v378 = vsel %vm365, %v376, %v377
        %v380 = vrot.slane %v378, 1
        %vm381 = vsmask.f32 256
        %vm382 = vsmask.f32 1284
        %vm383 = vmor %vm381, %vm382
        %vm384 = vsmask.f32 2312
        %vm385 = vmor %vm383, %vm384
        %vm386 = vsmask.f32 3340
        %vm387 = vmor %vm385, %vm386
        %vm388 = vsmask.f32 4368
        %vm389 = vmor %vm387, %vm388
        %vm390 = vsmask.f32 5396
        %vm391 = vmor %vm389, %vm390
        %vm392 = vsmask.f32 6424
        %vm393 = vmor %vm391, %vm392
        %vm394 = vsmask.f32 7452
        %vm395 = vmor %vm393, %vm394
        %v396 = vshrl.u32 %v360, 16
        %v398 = vrot.slane %v396, 7
        %v399 = vrot.slane %v398, 1
        %v401 = vshll.u32 %v368, 16
        %v403 = vsel %vm395, %v399, %v401
        %v404 = vshrl.u32 %v375, 16
        %v406 = vrot.slane %v404, 7
        %v407 = vrot.slane %v406, 1
        %v409 = vshll.u32 %v380, 16
        %v411 = vsel %vm395, %v407, %v409
        %414 = vst [vmem:[#allocation3 + $0x1] sm:$0x1] %v403
        %415 = vst [vmem:[#allocation3 + $0x9] sm:$0x1] %v411
        %s416 = scalar_lea.vmem [#allocation2], 2
        %v417 = vld [vmem:[%s416] sm:$0x3]
        %v418 = vld [vmem:[%s416 + $0x4] sm:$0x3]
        %419 = vst [vmem:[#allocation3 + $0x2] sm:$0x1] %v417
        %420 = vst [vmem:[#allocation3 + $0xa] sm:$0x1] %v418
        %v423 = vrot.slane %v417, 1
        %v424 = vrot.slane %v417, 2
        %v425 = vrot.slane %v417, 3
        %v426 = vrot.slane %v418, 1
        %v427 = vrot.slane %v418, 2
        %v428 = vrot.slane %v418, 3
        %v431 = vsel %vm351, %v417, %v423
        %v434 = vsel %vm355, %v424, %v425
        %v435 = vsel %vm359, %v431, %v434
        %v436 = vsel %vm361, %v417, %v423
        %v437 = vsel %vm363, %v424, %v425
        %v438 = vsel %vm365, %v436, %v437
        %v440 = vrot.slane %v438, 1
        %v443 = vsel %vm351, %v418, %v426
        %v446 = vsel %vm355, %v427, %v428
        %v447 = vsel %vm359, %v443, %v446
        %v448 = vsel %vm361, %v418, %v426
        %v449 = vsel %vm363, %v427, %v428
        %v450 = vsel %vm365, %v448, %v449
        %v452 = vrot.slane %v450, 1
        %v453 = vshrl.u32 %v435, 16
        %v455 = vrot.slane %v453, 7
        %v456 = vrot.slane %v455, 1
        %v458 = vshll.u32 %v440, 16
        %v460 = vsel %vm395, %v456, %v458
        %v461 = vshrl.u32 %v447, 16
        %v463 = vrot.slane %v461, 7
        %v464 = vrot.slane %v463, 1
        %v466 = vshll.u32 %v452, 16
        %v468 = vsel %vm395, %v464, %v466
        %471 = vst [vmem:[#allocation3 + $0x3] sm:$0x1] %v460
        %472 = vst [vmem:[#allocation3 + $0xb] sm:$0x1] %v468
        %s473 = scalar_lea.vmem [#allocation2], 4
        %v474 = vld [vmem:[%s473] sm:$0x3]
        %v475 = vld [vmem:[%s473 + $0x4] sm:$0x3]
        %476 = vst [vmem:[#allocation3 + $0x4] sm:$0x1] %v474
        %477 = vst [vmem:[#allocation3 + $0xc] sm:$0x1] %v475
        %v480 = vrot.slane %v474, 1
        %v481 = vrot.slane %v474, 2
        %v482 = vrot.slane %v474, 3
        %v483 = vrot.slane %v475, 1
        %v484 = vrot.slane %v475, 2
        %v485 = vrot.slane %v475, 3
        %v488 = vsel %vm351, %v474, %v480
        %v491 = vsel %vm355, %v481, %v482
        %v492 = vsel %vm359, %v488, %v491
        %v493 = vsel %vm361, %v474, %v480
        %v494 = vsel %vm363, %v481, %v482
        %v495 = vsel %vm365, %v493, %v494
        %v497 = vrot.slane %v495, 1
        %v500 = vsel %vm351, %v475, %v483
        %v503 = vsel %vm355, %v484, %v485
        %v504 = vsel %vm359, %v500, %v503
        %v505 = vsel %vm361, %v475, %v483
        %v506 = vsel %vm363, %v484, %v485
        %v507 = vsel %vm365, %v505, %v506
        %v509 = vrot.slane %v507, 1
        %v510 = vshrl.u32 %v492, 16
        %v512 = vrot.slane %v510, 7
        %v513 = vrot.slane %v512, 1
        %v515 = vshll.u32 %v497, 16
        %v517 = vsel %vm395, %v513, %v515
        %v518 = vshrl.u32 %v504, 16
        %v520 = vrot.slane %v518, 7
        %v521 = vrot.slane %v520, 1
        %v523 = vshll.u32 %v509, 16
        %v525 = vsel %vm395, %v521, %v523
        %528 = vst [vmem:[#allocation3 + $0x5] sm:$0x1] %v517
        %529 = vst [vmem:[#allocation3 + $0xd] sm:$0x1] %v525
        %s530 = scalar_lea.vmem [#allocation2], 6
        %v531 = vld [vmem:[%s530] sm:$0x3]
        %v532 = vld [vmem:[%s530 + $0x4] sm:$0x3]
        %533 = vst [vmem:[#allocation3 + $0x6] sm:$0x1] %v531
        %534 = vst [vmem:[#allocation3 + $0xe] sm:$0x1] %v532
        %v537 = vrot.slane %v531, 1
        %v538 = vrot.slane %v531, 2
        %v539 = vrot.slane %v531, 3
        %v540 = vrot.slane %v532, 1
        %v541 = vrot.slane %v532, 2
        %v542 = vrot.slane %v532, 3
        %v545 = vsel %vm351, %v531, %v537
        %v548 = vsel %vm355, %v538, %v539
        %v549 = vsel %vm359, %v545, %v548
        %v550 = vsel %vm361, %v531, %v537
        %v551 = vsel %vm363, %v538, %v539
        %v552 = vsel %vm365, %v550, %v551
        %v554 = vrot.slane %v552, 1
        %v557 = vsel %vm351, %v532, %v540
        %v560 = vsel %vm355, %v541, %v542
        %v561 = vsel %vm359, %v557, %v560
        %v562 = vsel %vm361, %v532, %v540
        %v563 = vsel %vm363, %v541, %v542
        %v564 = vsel %vm365, %v562, %v563
        %v566 = vrot.slane %v564, 1
        %v567 = vshrl.u32 %v549, 16
        %v569 = vrot.slane %v567, 7
        %v570 = vrot.slane %v569, 1
        %v572 = vshll.u32 %v554, 16
        %v574 = vsel %vm395, %v570, %v572
        %v575 = vshrl.u32 %v561, 16
        %v577 = vrot.slane %v575, 7
        %v578 = vrot.slane %v577, 1
        %v580 = vshll.u32 %v566, 16
        %v582 = vsel %vm395, %v578, %v580
        %585 = vst [vmem:[#allocation3 + $0x7] sm:$0x1] %v574
        %586 = vst [vmem:[#allocation3 + $0xf] sm:$0x1] %v582
        %v587 = vld [vmem:[#allocation3] sm:$0xff]
        %v588 = vld [vmem:[%s2] sm:$0xf]
        %v589 = vld [vmem:[%s2 + $0x4] sm:$0xf]
        %v590 = vld [vmem:[%s2 + $0x8] sm:$0xf]
        %v591 = vld [vmem:[%s2 + $0xc] sm:$0xf]
        %v592 = vld [vmem:[%s2 + $0x10] sm:$0xf]
        %v593 = vld [vmem:[%s2 + $0x14] sm:$0xf]
        %v594 = vld [vmem:[%s2 + $0x18] sm:$0xf]
        %v595 = vld [vmem:[%s2 + $0x1c] sm:$0xf]
        %v596 = vld [vmem:[%s2 + $0x20] sm:$0xf]
        %v597 = vld [vmem:[%s2 + $0x24] sm:$0xf]
        %v598 = vld [vmem:[%s2 + $0x28] sm:$0xf]
        %v599 = vld [vmem:[%s2 + $0x2c] sm:$0xf]
        %v600 = vld [vmem:[%s2 + $0x30] sm:$0xf]
        %v601 = vld [vmem:[%s2 + $0x34] sm:$0xf]
        %v602 = vld [vmem:[%s2 + $0x38] sm:$0xf]
        %v603 = vld [vmem:[%s2 + $0x3c] sm:$0xf]
        %v604 = vld [vmem:[%s2 + $0x40] sm:$0xf]
        %v605 = vld [vmem:[%s2 + $0x44] sm:$0xf]
        %v606 = vld [vmem:[%s2 + $0x48] sm:$0xf]
        %v607 = vld [vmem:[%s2 + $0x4c] sm:$0xf]
        %v608 = vld [vmem:[%s2 + $0x50] sm:$0xf]
        %v609 = vld [vmem:[%s2 + $0x54] sm:$0xf]
        %v610 = vld [vmem:[%s2 + $0x58] sm:$0xf]
        %v611 = vld [vmem:[%s2 + $0x5c] sm:$0xf]
        %v612 = vld [vmem:[%s2 + $0x60] sm:$0xf]
        %v613 = vld [vmem:[%s2 + $0x64] sm:$0xf]
        %v614 = vld [vmem:[%s2 + $0x68] sm:$0xf]
        %v615 = vld [vmem:[%s2 + $0x6c] sm:$0xf]
        %v616 = vld [vmem:[%s2 + $0x70] sm:$0xf]
        %v617 = vld [vmem:[%s2 + $0x74] sm:$0xf]
        %v618 = vld [vmem:[%s2 + $0x78] sm:$0xf]
        %v619 = vld [vmem:[%s2 + $0x7c] sm:$0xf]
        %v620 = vld [vmem:[%s2 + $0x80] sm:$0xf]
        %v621 = vld [vmem:[%s2 + $0x84] sm:$0xf]
        %v622 = vld [vmem:[%s2 + $0x88] sm:$0xf]
        %v623 = vld [vmem:[%s2 + $0x8c] sm:$0xf]
        %v624 = vld [vmem:[%s2 + $0x90] sm:$0xf]
        %v625 = vld [vmem:[%s2 + $0x94] sm:$0xf]
        %v626 = vld [vmem:[%s2 + $0x98] sm:$0xf]
        %v627 = vld [vmem:[%s2 + $0x9c] sm:$0xf]
        %v628 = vld [vmem:[%s2 + $0xa0] sm:$0xf]
        %v629 = vld [vmem:[%s2 + $0xa4] sm:$0xf]
        %v630 = vld [vmem:[%s2 + $0xa8] sm:$0xf]
        %v631 = vld [vmem:[%s2 + $0xac] sm:$0xf]
        %v632 = vld [vmem:[%s2 + $0xb0] sm:$0xf]
        %v633 = vld [vmem:[%s2 + $0xb4] sm:$0xf]
        %v634 = vld [vmem:[%s2 + $0xb8] sm:$0xf]
        %v635 = vld [vmem:[%s2 + $0xbc] sm:$0xf]
        %v636 = vld [vmem:[%s2 + $0xc0] sm:$0xf]
        %v637 = vld [vmem:[%s2 + $0xc4] sm:$0xf]
        %v638 = vld [vmem:[%s2 + $0xc8] sm:$0xf]
        %v639 = vld [vmem:[%s2 + $0xcc] sm:$0xf]
        %v640 = vld [vmem:[%s2 + $0xd0] sm:$0xf]
        %v641 = vld [vmem:[%s2 + $0xd4] sm:$0xf]
        %v642 = vld [vmem:[%s2 + $0xd8] sm:$0xf]
        %v643 = vld [vmem:[%s2 + $0xdc] sm:$0xf]
        %v644 = vld [vmem:[%s2 + $0xe0] sm:$0xf]
        %v645 = vld [vmem:[%s2 + $0xe4] sm:$0xf]
        %v646 = vld [vmem:[%s2 + $0xe8] sm:$0xf]
        %v647 = vld [vmem:[%s2 + $0xec] sm:$0xf]
        %v648 = vld [vmem:[%s2 + $0xf0] sm:$0xf]
        %v649 = vld [vmem:[%s2 + $0xf4] sm:$0xf]
        %v650 = vld [vmem:[%s2 + $0xf8] sm:$0xf]
        %v651 = vld [vmem:[%s2 + $0xfc] sm:$0xf]
        %v652 = vld [vmem:[%s2 + $0x100] sm:$0xf]
        %v653 = vld [vmem:[%s2 + $0x104] sm:$0xf]
        %v654 = vld [vmem:[%s2 + $0x108] sm:$0xf]
        %v655 = vld [vmem:[%s2 + $0x10c] sm:$0xf]
        %v656 = vld [vmem:[%s2 + $0x110] sm:$0xf]
        %v657 = vld [vmem:[%s2 + $0x114] sm:$0xf]
        %v658 = vld [vmem:[%s2 + $0x118] sm:$0xf]
        %v659 = vld [vmem:[%s2 + $0x11c] sm:$0xf]
        %v660 = vld [vmem:[%s2 + $0x120] sm:$0xf]
        %v661 = vld [vmem:[%s2 + $0x124] sm:$0xf]
        %v662 = vld [vmem:[%s2 + $0x128] sm:$0xf]
        %v663 = vld [vmem:[%s2 + $0x12c] sm:$0xf]
        %v664 = vld [vmem:[%s2 + $0x130] sm:$0xf]
        %v665 = vld [vmem:[%s2 + $0x134] sm:$0xf]
        %v666 = vld [vmem:[%s2 + $0x138] sm:$0xf]
        %v667 = vld [vmem:[%s2 + $0x13c] sm:$0xf]
        %v668 = vld [vmem:[%s2 + $0x140] sm:$0xf]
        %v669 = vld [vmem:[%s2 + $0x144] sm:$0xf]
        %v670 = vld [vmem:[%s2 + $0x148] sm:$0xf]
        %v671 = vld [vmem:[%s2 + $0x14c] sm:$0xf]
        %v672 = vld [vmem:[%s2 + $0x150] sm:$0xf]
        %v673 = vld [vmem:[%s2 + $0x154] sm:$0xf]
        %v674 = vld [vmem:[%s2 + $0x158] sm:$0xf]
        %v675 = vld [vmem:[%s2 + $0x15c] sm:$0xf]
        %v676 = vld [vmem:[%s2 + $0x160] sm:$0xf]
        %v677 = vld [vmem:[%s2 + $0x164] sm:$0xf]
        %v678 = vld [vmem:[%s2 + $0x168] sm:$0xf]
        %v679 = vld [vmem:[%s2 + $0x16c] sm:$0xf]
        %v680 = vld [vmem:[%s2 + $0x170] sm:$0xf]
        %v681 = vld [vmem:[%s2 + $0x174] sm:$0xf]
        %v682 = vld [vmem:[%s2 + $0x178] sm:$0xf]
        %v683 = vld [vmem:[%s2 + $0x17c] sm:$0xf]
        %v684 = vld [vmem:[%s2 + $0x180] sm:$0xf]
        %v685 = vld [vmem:[%s2 + $0x184] sm:$0xf]
        %v686 = vld [vmem:[%s2 + $0x188] sm:$0xf]
        %v687 = vld [vmem:[%s2 + $0x18c] sm:$0xf]
        %v688 = vld [vmem:[%s2 + $0x190] sm:$0xf]
        %v689 = vld [vmem:[%s2 + $0x194] sm:$0xf]
        %v690 = vld [vmem:[%s2 + $0x198] sm:$0xf]
        %v691 = vld [vmem:[%s2 + $0x19c] sm:$0xf]
        %v692 = vld [vmem:[%s2 + $0x1a0] sm:$0xf]
        %v693 = vld [vmem:[%s2 + $0x1a4] sm:$0xf]
        %v694 = vld [vmem:[%s2 + $0x1a8] sm:$0xf]
        %v695 = vld [vmem:[%s2 + $0x1ac] sm:$0xf]
        %v696 = vld [vmem:[%s2 + $0x1b0] sm:$0xf]
        %v697 = vld [vmem:[%s2 + $0x1b4] sm:$0xf]
        %v698 = vld [vmem:[%s2 + $0x1b8] sm:$0xf]
        %v699 = vld [vmem:[%s2 + $0x1bc] sm:$0xf]
        %v700 = vld [vmem:[%s2 + $0x1c0] sm:$0xf]
        %v701 = vld [vmem:[%s2 + $0x1c4] sm:$0xf]
        %v702 = vld [vmem:[%s2 + $0x1c8] sm:$0xf]
        %v703 = vld [vmem:[%s2 + $0x1cc] sm:$0xf]
        %v704 = vld [vmem:[%s2 + $0x1d0] sm:$0xf]
        %v705 = vld [vmem:[%s2 + $0x1d4] sm:$0xf]
        %v706 = vld [vmem:[%s2 + $0x1d8] sm:$0xf]
        %v707 = vld [vmem:[%s2 + $0x1dc] sm:$0xf]
        %v708 = vld [vmem:[%s2 + $0x1e0] sm:$0xf]
        %v709 = vld [vmem:[%s2 + $0x1e4] sm:$0xf]
        %v710 = vld [vmem:[%s2 + $0x1e8] sm:$0xf]
        %v711 = vld [vmem:[%s2 + $0x1ec] sm:$0xf]
        %v712 = vld [vmem:[%s2 + $0x1f0] sm:$0xf]
        %v713 = vld [vmem:[%s2 + $0x1f4] sm:$0xf]
        %v714 = vld [vmem:[%s2 + $0x1f8] sm:$0xf]
        %v715 = vld [vmem:[%s2 + $0x1fc] sm:$0xf]
        %v716 = vld [vmem:[%s3] sm:$0x1]
        %v718 = vperm.slane %v716, 0
        %721 = vst [vmem:[#allocation1] ss:$9 sm:$0xff] %v587
        %v722 = vld [vmem:[#allocation1] sm:$0xff]
        %v723 = vld [vmem:[#allocation1 + $0x9] sm:$0xff]
        %v724 = vld [vmem:[#allocation1 + $0x12] sm:$0xff]
        %v725 = vld [vmem:[#allocation1 + $0x1b] sm:$0xff]
        %v726 = vld [vmem:[#allocation1 + $0x24] sm:$0xff]
        %v727 = vld [vmem:[#allocation1 + $0x2d] sm:$0xff]
        %v728 = vld [vmem:[#allocation1 + $0x36] sm:$0xff]
        %v729 = vld [vmem:[#allocation1 + $0x3f] sm:$0xff]
        %v866 = vunpack.c.l.b16 %v588
        %v867 = vunpack.c.l.b16 %v589
        %v868 = vunpack.c.l.b16 %v590
        %v869 = vunpack.c.l.b16 %v591
        %v870 = vunpack.c.l.b16 %v592
        %v871 = vunpack.c.l.b16 %v593
        %v872 = vunpack.c.l.b16 %v594
        %v873 = vunpack.c.l.b16 %v595
        %v874 = vunpack.c.l.b16 %v596
        %v875 = vunpack.c.l.b16 %v597
        %v876 = vunpack.c.l.b16 %v598
        %v877 = vunpack.c.l.b16 %v599
        %v878 = vunpack.c.l.b16 %v600
        %v879 = vunpack.c.l.b16 %v601
        %v880 = vunpack.c.l.b16 %v602
        %v881 = vunpack.c.l.b16 %v603
        %v882 = vunpack.c.l.b16 %v604
        %v883 = vunpack.c.l.b16 %v605
        %v884 = vunpack.c.l.b16 %v606
        %v885 = vunpack.c.l.b16 %v607
        %v886 = vunpack.c.l.b16 %v608
        %v887 = vunpack.c.l.b16 %v609
        %v888 = vunpack.c.l.b16 %v610
        %v889 = vunpack.c.l.b16 %v611
        %v890 = vunpack.c.l.b16 %v612
        %v891 = vunpack.c.l.b16 %v613
        %v892 = vunpack.c.l.b16 %v614
        %v893 = vunpack.c.l.b16 %v615
        %v894 = vunpack.c.l.b16 %v616
        %v895 = vunpack.c.l.b16 %v617
        %v896 = vunpack.c.l.b16 %v618
        %v897 = vunpack.c.l.b16 %v619
        %v898 = vunpack.c.l.b16 %v620
        %v899 = vunpack.c.l.b16 %v621
        %v900 = vunpack.c.l.b16 %v622
        %v901 = vunpack.c.l.b16 %v623
        %v902 = vunpack.c.l.b16 %v624
        %v903 = vunpack.c.l.b16 %v625
        %v904 = vunpack.c.l.b16 %v626
        %v905 = vunpack.c.l.b16 %v627
        %v906 = vunpack.c.l.b16 %v628
        %v907 = vunpack.c.l.b16 %v629
        %v908 = vunpack.c.l.b16 %v630
        %v909 = vunpack.c.l.b16 %v631
        %v910 = vunpack.c.l.b16 %v632
        %v911 = vunpack.c.l.b16 %v633
        %v912 = vunpack.c.l.b16 %v634
        %v913 = vunpack.c.l.b16 %v635
        %v914 = vunpack.c.l.b16 %v636
        %v915 = vunpack.c.l.b16 %v637
        %v916 = vunpack.c.l.b16 %v638
        %v917 = vunpack.c.l.b16 %v639
        %v918 = vunpack.c.l.b16 %v640
        %v919 = vunpack.c.l.b16 %v641
        %v920 = vunpack.c.l.b16 %v642
        %v921 = vunpack.c.l.b16 %v643
        %v922 = vunpack.c.l.b16 %v644
        %v923 = vunpack.c.l.b16 %v645
        %v924 = vunpack.c.l.b16 %v646
        %v925 = vunpack.c.l.b16 %v647
        %v926 = vunpack.c.l.b16 %v648
        %v927 = vunpack.c.l.b16 %v649
        %v928 = vunpack.c.l.b16 %v650
        %v929 = vunpack.c.l.b16 %v651
        %v930 = vunpack.c.l.b16 %v652
        %v931 = vunpack.c.l.b16 %v653
        %v932 = vunpack.c.l.b16 %v654
        %v933 = vunpack.c.l.b16 %v655
        %v934 = vunpack.c.l.b16 %v656
        %v935 = vunpack.c.l.b16 %v657
        %v936 = vunpack.c.l.b16 %v658
        %v937 = vunpack.c.l.b16 %v659
        %v938 = vunpack.c.l.b16 %v660
        %v939 = vunpack.c.l.b16 %v661
        %v940 = vunpack.c.l.b16 %v662
        %v941 = vunpack.c.l.b16 %v663
        %v942 = vunpack.c.l.b16 %v664
        %v943 = vunpack.c.l.b16 %v665
        %v944 = vunpack.c.l.b16 %v666
        %v945 = vunpack.c.l.b16 %v667
        %v946 = vunpack.c.l.b16 %v668
        %v947 = vunpack.c.l.b16 %v669
        %v948 = vunpack.c.l.b16 %v670
        %v949 = vunpack.c.l.b16 %v671
        %v950 = vunpack.c.l.b16 %v672
        %v951 = vunpack.c.l.b16 %v673
        %v952 = vunpack.c.l.b16 %v674
        %v953 = vunpack.c.l.b16 %v675
        %v954 = vunpack.c.l.b16 %v676
        %v955 = vunpack.c.l.b16 %v677
        %v956 = vunpack.c.l.b16 %v678
        %v957 = vunpack.c.l.b16 %v679
        %v958 = vunpack.c.l.b16 %v680
        %v959 = vunpack.c.l.b16 %v681
        %v960 = vunpack.c.l.b16 %v682
        %v961 = vunpack.c.l.b16 %v683
        %v962 = vunpack.c.l.b16 %v684
        %v963 = vunpack.c.l.b16 %v685
        %v964 = vunpack.c.l.b16 %v686
        %v965 = vunpack.c.l.b16 %v687
        %v966 = vunpack.c.l.b16 %v688
        %v967 = vunpack.c.l.b16 %v689
        %v968 = vunpack.c.l.b16 %v690
        %v969 = vunpack.c.l.b16 %v691
        %v970 = vunpack.c.l.b16 %v692
        %v971 = vunpack.c.l.b16 %v693
        %v972 = vunpack.c.l.b16 %v694
        %v973 = vunpack.c.l.b16 %v695
        %v974 = vunpack.c.l.b16 %v696
        %v975 = vunpack.c.l.b16 %v697
        %v976 = vunpack.c.l.b16 %v698
        %v977 = vunpack.c.l.b16 %v699
        %v978 = vunpack.c.l.b16 %v700
        %v979 = vunpack.c.l.b16 %v701
        %v980 = vunpack.c.l.b16 %v702
        %v981 = vunpack.c.l.b16 %v703
        %v982 = vunpack.c.l.b16 %v704
        %v983 = vunpack.c.l.b16 %v705
        %v984 = vunpack.c.l.b16 %v706
        %v985 = vunpack.c.l.b16 %v707
        %v986 = vunpack.c.l.b16 %v708
        %v987 = vunpack.c.l.b16 %v709
        %v988 = vunpack.c.l.b16 %v710
        %v989 = vunpack.c.l.b16 %v711
        %v990 = vunpack.c.l.b16 %v712
        %v991 = vunpack.c.l.b16 %v713
        %v992 = vunpack.c.l.b16 %v714
        %v993 = vunpack.c.l.b16 %v715
        %v994 = vpack.c.b16 %v867, %v866
        %v995 = vpack.c.b16 %v869, %v868
        %v996 = vpack.c.b16 %v871, %v870
        %v997 = vpack.c.b16 %v873, %v872
        %v998 = vpack.c.b16 %v875, %v874
        %v999 = vpack.c.b16 %v877, %v876
        %v1000 = vpack.c.b16 %v879, %v878
        %v1001 = vpack.c.b16 %v881, %v880
        %v1002 = vpack.c.b16 %v883, %v882
        %v1003 = vpack.c.b16 %v885, %v884
        %v1004 = vpack.c.b16 %v887, %v886
        %v1005 = vpack.c.b16 %v889, %v888
        %v1006 = vpack.c.b16 %v891, %v890
        %v1007 = vpack.c.b16 %v893, %v892
        %v1008 = vpack.c.b16 %v895, %v894
        %v1009 = vpack.c.b16 %v897, %v896
        %v1010 = vpack.c.b16 %v899, %v898
        %v1011 = vpack.c.b16 %v901, %v900
        %v1012 = vpack.c.b16 %v903, %v902
        %v1013 = vpack.c.b16 %v905, %v904
        %v1014 = vpack.c.b16 %v907, %v906
        %v1015 = vpack.c.b16 %v909, %v908
        %v1016 = vpack.c.b16 %v911, %v910
        %v1017 = vpack.c.b16 %v913, %v912
        %v1018 = vpack.c.b16 %v915, %v914
        %v1019 = vpack.c.b16 %v917, %v916
        %v1020 = vpack.c.b16 %v919, %v918
        %v1021 = vpack.c.b16 %v921, %v920
        %v1022 = vpack.c.b16 %v923, %v922
        %v1023 = vpack.c.b16 %v925, %v924
        %v1024 = vpack.c.b16 %v927, %v926
        %v1025 = vpack.c.b16 %v929, %v928
        %v1026 = vpack.c.b16 %v931, %v930
        %v1027 = vpack.c.b16 %v933, %v932
        %v1028 = vpack.c.b16 %v935, %v934
        %v1029 = vpack.c.b16 %v937, %v936
        %v1030 = vpack.c.b16 %v939, %v938
        %v1031 = vpack.c.b16 %v941, %v940
        %v1032 = vpack.c.b16 %v943, %v942
        %v1033 = vpack.c.b16 %v945, %v944
        %v1034 = vpack.c.b16 %v947, %v946
        %v1035 = vpack.c.b16 %v949, %v948
        %v1036 = vpack.c.b16 %v951, %v950
        %v1037 = vpack.c.b16 %v953, %v952
        %v1038 = vpack.c.b16 %v955, %v954
        %v1039 = vpack.c.b16 %v957, %v956
        %v1040 = vpack.c.b16 %v959, %v958
        %v1041 = vpack.c.b16 %v961, %v960
        %v1042 = vpack.c.b16 %v963, %v962
        %v1043 = vpack.c.b16 %v965, %v964
        %v1044 = vpack.c.b16 %v967, %v966
        %v1045 = vpack.c.b16 %v969, %v968
        %v1046 = vpack.c.b16 %v971, %v970
        %v1047 = vpack.c.b16 %v973, %v972
        %v1048 = vpack.c.b16 %v975, %v974
        %v1049 = vpack.c.b16 %v977, %v976
        %v1050 = vpack.c.b16 %v979, %v978
        %v1051 = vpack.c.b16 %v981, %v980
        %v1052 = vpack.c.b16 %v983, %v982
        %v1053 = vpack.c.b16 %v985, %v984
        %v1054 = vpack.c.b16 %v987, %v986
        %v1055 = vpack.c.b16 %v989, %v988
        %v1056 = vpack.c.b16 %v991, %v990
        %v1057 = vpack.c.b16 %v993, %v992
        %1122 = vmatpush.bf16.msra.mxu0 %v1001
        %1123 = vmatpush.bf16.msra.mxu0 %v1000
        %1124 = vmatpush.bf16.msra.mxu0 %v999
        %1125 = vmatpush.bf16.msra.mxu0 %v998
        %1126 = vmatpush.bf16.msra.mxu0 %v997
        %1127 = vmatpush.bf16.msra.mxu0 %v996
        %1128 = vmatpush.bf16.msra.mxu0 %v995
        %1129 = vmatpush.bf16.msra.mxu0 %v994
        %1130 = vmatmul.bf16.gmra.mxu0 %v722
        %v1131 = vpop.f32.mrf.mxu0
        %v1132 = vadd.f32 %v718, %v1131
        %v1133 = vpop.f32.mrf.mxu0
        %1134 = vdwg.mxu0
        %1135 = vmatpush.bf16.msra.mxu0 %v1009
        %1136 = vmatpush.bf16.msra.mxu0 %v1008
        %1137 = vmatpush.bf16.msra.mxu0 %v1007
        %1138 = vmatpush.bf16.msra.mxu0 %v1006
        %1139 = vmatpush.bf16.msra.mxu0 %v1005
        %1140 = vmatpush.bf16.msra.mxu0 %v1004
        %1141 = vmatpush.bf16.msra.mxu0 %v1003
        %1142 = vmatpush.bf16.msra.mxu0 %v1002
        %1143 = vmatmul.bf16.gmra.mxu0 %v723
        %v1144 = vpop.f32.mrf.mxu0
        %v1145 = vadd.f32 %v1132, %v1144
        %v1146 = vpop.f32.mrf.mxu0
        %1147 = vdwg.mxu0
        %1148 = vmatpush.bf16.msra.mxu0 %v1017
        %1149 = vmatpush.bf16.msra.mxu0 %v1016
        %1150 = vmatpush.bf16.msra.mxu0 %v1015
        %1151 = vmatpush.bf16.msra.mxu0 %v1014
        %1152 = vmatpush.bf16.msra.mxu0 %v1013
        %1153 = vmatpush.bf16.msra.mxu0 %v1012
        %1154 = vmatpush.bf16.msra.mxu0 %v1011
        %1155 = vmatpush.bf16.msra.mxu0 %v1010
        %1156 = vmatmul.bf16.gmra.mxu0 %v724
        %v1157 = vpop.f32.mrf.mxu0
        %v1158 = vadd.f32 %v1145, %v1157
        %v1159 = vpop.f32.mrf.mxu0
        %1160 = vdwg.mxu0
        %1161 = vmatpush.bf16.msra.mxu0 %v1025
        %1162 = vmatpush.bf16.msra.mxu0 %v1024
        %1163 = vmatpush.bf16.msra.mxu0 %v1023
        %1164 = vmatpush.bf16.msra.mxu0 %v1022
        %1165 = vmatpush.bf16.msra.mxu0 %v1021
        %1166 = vmatpush.bf16.msra.mxu0 %v1020
        %1167 = vmatpush.bf16.msra.mxu0 %v1019
        %1168 = vmatpush.bf16.msra.mxu0 %v1018
        %1169 = vmatmul.bf16.gmra.mxu0 %v725
        %v1170 = vpop.f32.mrf.mxu0
        %v1171 = vadd.f32 %v1158, %v1170
        %v1172 = vpop.f32.mrf.mxu0
        %1173 = vdwg.mxu0
        %1174 = vmatpush.bf16.msra.mxu0 %v1033
        %1175 = vmatpush.bf16.msra.mxu0 %v1032
        %1176 = vmatpush.bf16.msra.mxu0 %v1031
        %1177 = vmatpush.bf16.msra.mxu0 %v1030
        %1178 = vmatpush.bf16.msra.mxu0 %v1029
        %1179 = vmatpush.bf16.msra.mxu0 %v1028
        %1180 = vmatpush.bf16.msra.mxu0 %v1027
        %1181 = vmatpush.bf16.msra.mxu0 %v1026
        %1182 = vmatmul.bf16.gmra.mxu0 %v726
        %v1183 = vpop.f32.mrf.mxu0
        %v1184 = vadd.f32 %v1171, %v1183
        %v1185 = vpop.f32.mrf.mxu0
        %1186 = vdwg.mxu0
        %1187 = vmatpush.bf16.msra.mxu0 %v1041
        %1188 = vmatpush.bf16.msra.mxu0 %v1040
        %1189 = vmatpush.bf16.msra.mxu0 %v1039
        %1190 = vmatpush.bf16.msra.mxu0 %v1038
        %1191 = vmatpush.bf16.msra.mxu0 %v1037
        %1192 = vmatpush.bf16.msra.mxu0 %v1036
        %1193 = vmatpush.bf16.msra.mxu0 %v1035
        %1194 = vmatpush.bf16.msra.mxu0 %v1034
        %1195 = vmatmul.bf16.gmra.mxu0 %v727
        %v1196 = vpop.f32.mrf.mxu0
        %v1197 = vadd.f32 %v1184, %v1196
        %v1198 = vpop.f32.mrf.mxu0
        %1199 = vdwg.mxu0
        %1200 = vmatpush.bf16.msra.mxu0 %v1049
        %1201 = vmatpush.bf16.msra.mxu0 %v1048
        %1202 = vmatpush.bf16.msra.mxu0 %v1047
        %1203 = vmatpush.bf16.msra.mxu0 %v1046
        %1204 = vmatpush.bf16.msra.mxu0 %v1045
        %1205 = vmatpush.bf16.msra.mxu0 %v1044
        %1206 = vmatpush.bf16.msra.mxu0 %v1043
        %1207 = vmatpush.bf16.msra.mxu0 %v1042
        %1208 = vmatmul.bf16.gmra.mxu0 %v728
        %v1209 = vpop.f32.mrf.mxu0
        %v1210 = vadd.f32 %v1197, %v1209
        %v1211 = vpop.f32.mrf.mxu0
        %1212 = vdwg.mxu0
        %1213 = vmatpush.bf16.msra.mxu0 %v1057
        %1214 = vmatpush.bf16.msra.mxu0 %v1056
        %1215 = vmatpush.bf16.msra.mxu0 %v1055
        %1216 = vmatpush.bf16.msra.mxu0 %v1054
        %1217 = vmatpush.bf16.msra.mxu0 %v1053
        %1218 = vmatpush.bf16.msra.mxu0 %v1052
        %1219 = vmatpush.bf16.msra.mxu0 %v1051
        %1220 = vmatpush.bf16.msra.mxu0 %v1050
        %1221 = vmatmul.bf16.gmra.mxu0 %v729
        %v1222 = vpop.f32.mrf.mxu0
        %v1223 = vadd.f32 %v1210, %v1222
        %v1224 = vpop.f32.mrf.mxu0
        %1225 = vdwg.mxu0
        %vm1226 = vcmp.ge.f32.partialorder %v1223, 0.0
        %v1227 = vmul.f32 %v1223, 0.02
        %v1228 = vsel %vm1226, %v1223, %v1227
        %vm1229 = vcmask 517120
        %1230 = vst.msk [vmem:[%s273] sm:$0x3] %vm1229, %v1228
        %s1231 = scalar_lea.vmem [#allocation3], 8
        %v1232 = vld [vmem:[%s1231] sm:$0xff]
        %v1233 = vld [vmem:[%s2] sm:$0xf]
        %v1234 = vld [vmem:[%s2 + $0x4] sm:$0xf]
        %v1235 = vld [vmem:[%s2 + $0x8] sm:$0xf]
        %v1236 = vld [vmem:[%s2 + $0xc] sm:$0xf]
        %v1237 = vld [vmem:[%s2 + $0x10] sm:$0xf]
        %v1238 = vld [vmem:[%s2 + $0x14] sm:$0xf]
        %v1239 = vld [vmem:[%s2 + $0x18] sm:$0xf]
        %v1240 = vld [vmem:[%s2 + $0x1c] sm:$0xf]
        %v1241 = vld [vmem:[%s2 + $0x20] sm:$0xf]
        %v1242 = vld [vmem:[%s2 + $0x24] sm:$0xf]
        %v1243 = vld [vmem:[%s2 + $0x28] sm:$0xf]
        %v1244 = vld [vmem:[%s2 + $0x2c] sm:$0xf]
        %v1245 = vld [vmem:[%s2 + $0x30] sm:$0xf]
        %v1246 = vld [vmem:[%s2 + $0x34] sm:$0xf]
        %v1247 = vld [vmem:[%s2 + $0x38] sm:$0xf]
        %v1248 = vld [vmem:[%s2 + $0x3c] sm:$0xf]
        %v1249 = vld [vmem:[%s2 + $0x40] sm:$0xf]
        %v1250 = vld [vmem:[%s2 + $0x44] sm:$0xf]
        %v1251 = vld [vmem:[%s2 + $0x48] sm:$0xf]
        %v1252 = vld [vmem:[%s2 + $0x4c] sm:$0xf]
        %v1253 = vld [vmem:[%s2 + $0x50] sm:$0xf]
        %v1254 = vld [vmem:[%s2 + $0x54] sm:$0xf]
        %v1255 = vld [vmem:[%s2 + $0x58] sm:$0xf]
        %v1256 = vld [vmem:[%s2 + $0x5c] sm:$0xf]
        %v1257 = vld [vmem:[%s2 + $0x60] sm:$0xf]
        %v1258 = vld [vmem:[%s2 + $0x64] sm:$0xf]
        %v1259 = vld [vmem:[%s2 + $0x68] sm:$0xf]
        %v1260 = vld [vmem:[%s2 + $0x6c] sm:$0xf]
        %v1261 = vld [vmem:[%s2 + $0x70] sm:$0xf]
        %v1262 = vld [vmem:[%s2 + $0x74] sm:$0xf]
        %v1263 = vld [vmem:[%s2 + $0x78] sm:$0xf]
        %v1264 = vld [vmem:[%s2 + $0x7c] sm:$0xf]
        %v1265 = vld [vmem:[%s2 + $0x80] sm:$0xf]
        %v1266 = vld [vmem:[%s2 + $0x84] sm:$0xf]
        %v1267 = vld [vmem:[%s2 + $0x88] sm:$0xf]
        %v1268 = vld [vmem:[%s2 + $0x8c] sm:$0xf]
        %v1269 = vld [vmem:[%s2 + $0x90] sm:$0xf]
        %v1270 = vld [vmem:[%s2 + $0x94] sm:$0xf]
        %v1271 = vld [vmem:[%s2 + $0x98] sm:$0xf]
        %v1272 = vld [vmem:[%s2 + $0x9c] sm:$0xf]
        %v1273 = vld [vmem:[%s2 + $0xa0] sm:$0xf]
        %v1274 = vld [vmem:[%s2 + $0xa4] sm:$0xf]
        %v1275 = vld [vmem:[%s2 + $0xa8] sm:$0xf]
        %v1276 = vld [vmem:[%s2 + $0xac] sm:$0xf]
        %v1277 = vld [vmem:[%s2 + $0xb0] sm:$0xf]
        %v1278 = vld [vmem:[%s2 + $0xb4] sm:$0xf]
        %v1279 = vld [vmem:[%s2 + $0xb8] sm:$0xf]
        %v1280 = vld [vmem:[%s2 + $0xbc] sm:$0xf]
        %v1281 = vld [vmem:[%s2 + $0xc0] sm:$0xf]
        %v1282 = vld [vmem:[%s2 + $0xc4] sm:$0xf]
        %v1283 = vld [vmem:[%s2 + $0xc8] sm:$0xf]
        %v1284 = vld [vmem:[%s2 + $0xcc] sm:$0xf]
        %v1285 = vld [vmem:[%s2 + $0xd0] sm:$0xf]
        %v1286 = vld [vmem:[%s2 + $0xd4] sm:$0xf]
        %v1287 = vld [vmem:[%s2 + $0xd8] sm:$0xf]
        %v1288 = vld [vmem:[%s2 + $0xdc] sm:$0xf]
        %v1289 = vld [vmem:[%s2 + $0xe0] sm:$0xf]
        %v1290 = vld [vmem:[%s2 + $0xe4] sm:$0xf]
        %v1291 = vld [vmem:[%s2 + $0xe8] sm:$0xf]
        %v1292 = vld [vmem:[%s2 + $0xec] sm:$0xf]
        %v1293 = vld [vmem:[%s2 + $0xf0] sm:$0xf]
        %v1294 = vld [vmem:[%s2 + $0xf4] sm:$0xf]
        %v1295 = vld [vmem:[%s2 + $0xf8] sm:$0xf]
        %v1296 = vld [vmem:[%s2 + $0xfc] sm:$0xf]
        %v1297 = vld [vmem:[%s2 + $0x100] sm:$0xf]
        %v1298 = vld [vmem:[%s2 + $0x104] sm:$0xf]
        %v1299 = vld [vmem:[%s2 + $0x108] sm:$0xf]
        %v1300 = vld [vmem:[%s2 + $0x10c] sm:$0xf]
        %v1301 = vld [vmem:[%s2 + $0x110] sm:$0xf]
        %v1302 = vld [vmem:[%s2 + $0x114] sm:$0xf]
        %v1303 = vld [vmem:[%s2 + $0x118] sm:$0xf]
        %v1304 = vld [vmem:[%s2 + $0x11c] sm:$0xf]
        %v1305 = vld [vmem:[%s2 + $0x120] sm:$0xf]
        %v1306 = vld [vmem:[%s2 + $0x124] sm:$0xf]
        %v1307 = vld [vmem:[%s2 + $0x128] sm:$0xf]
        %v1308 = vld [vmem:[%s2 + $0x12c] sm:$0xf]
        %v1309 = vld [vmem:[%s2 + $0x130] sm:$0xf]
        %v1310 = vld [vmem:[%s2 + $0x134] sm:$0xf]
        %v1311 = vld [vmem:[%s2 + $0x138] sm:$0xf]
        %v1312 = vld [vmem:[%s2 + $0x13c] sm:$0xf]
        %v1313 = vld [vmem:[%s2 + $0x140] sm:$0xf]
        %v1314 = vld [vmem:[%s2 + $0x144] sm:$0xf]
        %v1315 = vld [vmem:[%s2 + $0x148] sm:$0xf]
        %v1316 = vld [vmem:[%s2 + $0x14c] sm:$0xf]
        %v1317 = vld [vmem:[%s2 + $0x150] sm:$0xf]
        %v1318 = vld [vmem:[%s2 + $0x154] sm:$0xf]
        %v1319 = vld [vmem:[%s2 + $0x158] sm:$0xf]
        %v1320 = vld [vmem:[%s2 + $0x15c] sm:$0xf]
        %v1321 = vld [vmem:[%s2 + $0x160] sm:$0xf]
        %v1322 = vld [vmem:[%s2 + $0x164] sm:$0xf]
        %v1323 = vld [vmem:[%s2 + $0x168] sm:$0xf]
        %v1324 = vld [vmem:[%s2 + $0x16c] sm:$0xf]
        %v1325 = vld [vmem:[%s2 + $0x170] sm:$0xf]
        %v1326 = vld [vmem:[%s2 + $0x174] sm:$0xf]
        %v1327 = vld [vmem:[%s2 + $0x178] sm:$0xf]
        %v1328 = vld [vmem:[%s2 + $0x17c] sm:$0xf]
        %v1329 = vld [vmem:[%s2 + $0x180] sm:$0xf]
        %v1330 = vld [vmem:[%s2 + $0x184] sm:$0xf]
        %v1331 = vld [vmem:[%s2 + $0x188] sm:$0xf]
        %v1332 = vld [vmem:[%s2 + $0x18c] sm:$0xf]
        %v1333 = vld [vmem:[%s2 + $0x190] sm:$0xf]
        %v1334 = vld [vmem:[%s2 + $0x194] sm:$0xf]
        %v1335 = vld [vmem:[%s2 + $0x198] sm:$0xf]
        %v1336 = vld [vmem:[%s2 + $0x19c] sm:$0xf]
        %v1337 = vld [vmem:[%s2 + $0x1a0] sm:$0xf]
        %v1338 = vld [vmem:[%s2 + $0x1a4] sm:$0xf]
        %v1339 = vld [vmem:[%s2 + $0x1a8] sm:$0xf]
        %v1340 = vld [vmem:[%s2 + $0x1ac] sm:$0xf]
        %v1341 = vld [vmem:[%s2 + $0x1b0] sm:$0xf]
        %v1342 = vld [vmem:[%s2 + $0x1b4] sm:$0xf]
        %v1343 = vld [vmem:[%s2 + $0x1b8] sm:$0xf]
        %v1344 = vld [vmem:[%s2 + $0x1bc] sm:$0xf]
        %v1345 = vld [vmem:[%s2 + $0x1c0] sm:$0xf]
        %v1346 = vld [vmem:[%s2 + $0x1c4] sm:$0xf]
        %v1347 = vld [vmem:[%s2 + $0x1c8] sm:$0xf]
        %v1348 = vld [vmem:[%s2 + $0x1cc] sm:$0xf]
        %v1349 = vld [vmem:[%s2 + $0x1d0] sm:$0xf]
        %v1350 = vld [vmem:[%s2 + $0x1d4] sm:$0xf]
        %v1351 = vld [vmem:[%s2 + $0x1d8] sm:$0xf]
        %v1352 = vld [vmem:[%s2 + $0x1dc] sm:$0xf]
        %v1353 = vld [vmem:[%s2 + $0x1e0] sm:$0xf]
        %v1354 = vld [vmem:[%s2 + $0x1e4] sm:$0xf]
        %v1355 = vld [vmem:[%s2 + $0x1e8] sm:$0xf]
        %v1356 = vld [vmem:[%s2 + $0x1ec] sm:$0xf]
        %v1357 = vld [vmem:[%s2 + $0x1f0] sm:$0xf]
        %v1358 = vld [vmem:[%s2 + $0x1f4] sm:$0xf]
        %v1359 = vld [vmem:[%s2 + $0x1f8] sm:$0xf]
        %v1360 = vld [vmem:[%s2 + $0x1fc] sm:$0xf]
        %v1361 = vld [vmem:[%s3] sm:$0x1]
        %v1363 = vperm.slane %v1361, 0
        %1366 = vst [vmem:[#allocation1] ss:$9 sm:$0xff] %v1232
        %v1367 = vld [vmem:[#allocation1] sm:$0xff]
        %v1368 = vld [vmem:[#allocation1 + $0x9] sm:$0xff]
        %v1369 = vld [vmem:[#allocation1 + $0x12] sm:$0xff]
        %v1370 = vld [vmem:[#allocation1 + $0x1b] sm:$0xff]
        %v1371 = vld [vmem:[#allocation1 + $0x24] sm:$0xff]
        %v1372 = vld [vmem:[#allocation1 + $0x2d] sm:$0xff]
        %v1373 = vld [vmem:[#allocation1 + $0x36] sm:$0xff]
        %v1374 = vld [vmem:[#allocation1 + $0x3f] sm:$0xff]
        %v1511 = vunpack.c.l.b16 %v1233
        %v1512 = vunpack.c.l.b16 %v1234
        %v1513 = vunpack.c.l.b16 %v1235
        %v1514 = vunpack.c.l.b16 %v1236
        %v1515 = vunpack.c.l.b16 %v1237
        %v1516 = vunpack.c.l.b16 %v1238
        %v1517 = vunpack.c.l.b16 %v1239
        %v1518 = vunpack.c.l.b16 %v1240
        %v1519 = vunpack.c.l.b16 %v1241
        %v1520 = vunpack.c.l.b16 %v1242
        %v1521 = vunpack.c.l.b16 %v1243
        %v1522 = vunpack.c.l.b16 %v1244
        %v1523 = vunpack.c.l.b16 %v1245
        %v1524 = vunpack.c.l.b16 %v1246
        %v1525 = vunpack.c.l.b16 %v1247
        %v1526 = vunpack.c.l.b16 %v1248
        %v1527 = vunpack.c.l.b16 %v1249
        %v1528 = vunpack.c.l.b16 %v1250
        %v1529 = vunpack.c.l.b16 %v1251
        %v1530 = vunpack.c.l.b16 %v1252
        %v1531 = vunpack.c.l.b16 %v1253
        %v1532 = vunpack.c.l.b16 %v1254
        %v1533 = vunpack.c.l.b16 %v1255
        %v1534 = vunpack.c.l.b16 %v1256
        %v1535 = vunpack.c.l.b16 %v1257
        %v1536 = vunpack.c.l.b16 %v1258
        %v1537 = vunpack.c.l.b16 %v1259
        %v1538 = vunpack.c.l.b16 %v1260
        %v1539 = vunpack.c.l.b16 %v1261
        %v1540 = vunpack.c.l.b16 %v1262
        %v1541 = vunpack.c.l.b16 %v1263
        %v1542 = vunpack.c.l.b16 %v1264
        %v1543 = vunpack.c.l.b16 %v1265
        %v1544 = vunpack.c.l.b16 %v1266
        %v1545 = vunpack.c.l.b16 %v1267
        %v1546 = vunpack.c.l.b16 %v1268
        %v1547 = vunpack.c.l.b16 %v1269
        %v1548 = vunpack.c.l.b16 %v1270
        %v1549 = vunpack.c.l.b16 %v1271
        %v1550 = vunpack.c.l.b16 %v1272
        %v1551 = vunpack.c.l.b16 %v1273
        %v1552 = vunpack.c.l.b16 %v1274
        %v1553 = vunpack.c.l.b16 %v1275
        %v1554 = vunpack.c.l.b16 %v1276
        %v1555 = vunpack.c.l.b16 %v1277
        %v1556 = vunpack.c.l.b16 %v1278
        %v1557 = vunpack.c.l.b16 %v1279
        %v1558 = vunpack.c.l.b16 %v1280
        %v1559 = vunpack.c.l.b16 %v1281
        %v1560 = vunpack.c.l.b16 %v1282
        %v1561 = vunpack.c.l.b16 %v1283
        %v1562 = vunpack.c.l.b16 %v1284
        %v1563 = vunpack.c.l.b16 %v1285
        %v1564 = vunpack.c.l.b16 %v1286
        %v1565 = vunpack.c.l.b16 %v1287
        %v1566 = vunpack.c.l.b16 %v1288
        %v1567 = vunpack.c.l.b16 %v1289
        %v1568 = vunpack.c.l.b16 %v1290
        %v1569 = vunpack.c.l.b16 %v1291
        %v1570 = vunpack.c.l.b16 %v1292
        %v1571 = vunpack.c.l.b16 %v1293
        %v1572 = vunpack.c.l.b16 %v1294
        %v1573 = vunpack.c.l.b16 %v1295
        %v1574 = vunpack.c.l.b16 %v1296
        %v1575 = vunpack.c.l.b16 %v1297
        %v1576 = vunpack.c.l.b16 %v1298
        %v1577 = vunpack.c.l.b16 %v1299
        %v1578 = vunpack.c.l.b16 %v1300
        %v1579 = vunpack.c.l.b16 %v1301
        %v1580 = vunpack.c.l.b16 %v1302
        %v1581 = vunpack.c.l.b16 %v1303
        %v1582 = vunpack.c.l.b16 %v1304
        %v1583 = vunpack.c.l.b16 %v1305
        %v1584 = vunpack.c.l.b16 %v1306
        %v1585 = vunpack.c.l.b16 %v1307
        %v1586 = vunpack.c.l.b16 %v1308
        %v1587 = vunpack.c.l.b16 %v1309
        %v1588 = vunpack.c.l.b16 %v1310
        %v1589 = vunpack.c.l.b16 %v1311
        %v1590 = vunpack.c.l.b16 %v1312
        %v1591 = vunpack.c.l.b16 %v1313
        %v1592 = vunpack.c.l.b16 %v1314
        %v1593 = vunpack.c.l.b16 %v1315
        %v1594 = vunpack.c.l.b16 %v1316
        %v1595 = vunpack.c.l.b16 %v1317
        %v1596 = vunpack.c.l.b16 %v1318
        %v1597 = vunpack.c.l.b16 %v1319
        %v1598 = vunpack.c.l.b16 %v1320
        %v1599 = vunpack.c.l.b16 %v1321
        %v1600 = vunpack.c.l.b16 %v1322
        %v1601 = vunpack.c.l.b16 %v1323
        %v1602 = vunpack.c.l.b16 %v1324
        %v1603 = vunpack.c.l.b16 %v1325
        %v1604 = vunpack.c.l.b16 %v1326
        %v1605 = vunpack.c.l.b16 %v1327
        %v1606 = vunpack.c.l.b16 %v1328
        %v1607 = vunpack.c.l.b16 %v1329
        %v1608 = vunpack.c.l.b16 %v1330
        %v1609 = vunpack.c.l.b16 %v1331
        %v1610 = vunpack.c.l.b16 %v1332
        %v1611 = vunpack.c.l.b16 %v1333
        %v1612 = vunpack.c.l.b16 %v1334
        %v1613 = vunpack.c.l.b16 %v1335
        %v1614 = vunpack.c.l.b16 %v1336
        %v1615 = vunpack.c.l.b16 %v1337
        %v1616 = vunpack.c.l.b16 %v1338
        %v1617 = vunpack.c.l.b16 %v1339
        %v1618 = vunpack.c.l.b16 %v1340
        %v1619 = vunpack.c.l.b16 %v1341
        %v1620 = vunpack.c.l.b16 %v1342
        %v1621 = vunpack.c.l.b16 %v1343
        %v1622 = vunpack.c.l.b16 %v1344
        %v1623 = vunpack.c.l.b16 %v1345
        %v1624 = vunpack.c.l.b16 %v1346
        %v1625 = vunpack.c.l.b16 %v1347
        %v1626 = vunpack.c.l.b16 %v1348
        %v1627 = vunpack.c.l.b16 %v1349
        %v1628 = vunpack.c.l.b16 %v1350
        %v1629 = vunpack.c.l.b16 %v1351
        %v1630 = vunpack.c.l.b16 %v1352
        %v1631 = vunpack.c.l.b16 %v1353
        %v1632 = vunpack.c.l.b16 %v1354
        %v1633 = vunpack.c.l.b16 %v1355
        %v1634 = vunpack.c.l.b16 %v1356
        %v1635 = vunpack.c.l.b16 %v1357
        %v1636 = vunpack.c.l.b16 %v1358
        %v1637 = vunpack.c.l.b16 %v1359
        %v1638 = vunpack.c.l.b16 %v1360
        %v1639 = vpack.c.b16 %v1512, %v1511
        %v1640 = vpack.c.b16 %v1514, %v1513
        %v1641 = vpack.c.b16 %v1516, %v1515
        %v1642 = vpack.c.b16 %v1518, %v1517
        %v1643 = vpack.c.b16 %v1520, %v1519
        %v1644 = vpack.c.b16 %v1522, %v1521
        %v1645 = vpack.c.b16 %v1524, %v1523
        %v1646 = vpack.c.b16 %v1526, %v1525
        %v1647 = vpack.c.b16 %v1528, %v1527
        %v1648 = vpack.c.b16 %v1530, %v1529
        %v1649 = vpack.c.b16 %v1532, %v1531
        %v1650 = vpack.c.b16 %v1534, %v1533
        %v1651 = vpack.c.b16 %v1536, %v1535
        %v1652 = vpack.c.b16 %v1538, %v1537
        %v1653 = vpack.c.b16 %v1540, %v1539
        %v1654 = vpack.c.b16 %v1542, %v1541
        %v1655 = vpack.c.b16 %v1544, %v1543
        %v1656 = vpack.c.b16 %v1546, %v1545
        %v1657 = vpack.c.b16 %v1548, %v1547
        %v1658 = vpack.c.b16 %v1550, %v1549
        %v1659 = vpack.c.b16 %v1552, %v1551
        %v1660 = vpack.c.b16 %v1554, %v1553
        %v1661 = vpack.c.b16 %v1556, %v1555
        %v1662 = vpack.c.b16 %v1558, %v1557
        %v1663 = vpack.c.b16 %v1560, %v1559
        %v1664 = vpack.c.b16 %v1562, %v1561
        %v1665 = vpack.c.b16 %v1564, %v1563
        %v1666 = vpack.c.b16 %v1566, %v1565
        %v1667 = vpack.c.b16 %v1568, %v1567
        %v1668 = vpack.c.b16 %v1570, %v1569
        %v1669 = vpack.c.b16 %v1572, %v1571
        %v1670 = vpack.c.b16 %v1574, %v1573
        %v1671 = vpack.c.b16 %v1576, %v1575
        %v1672 = vpack.c.b16 %v1578, %v1577
        %v1673 = vpack.c.b16 %v1580, %v1579
        %v1674 = vpack.c.b16 %v1582, %v1581
        %v1675 = vpack.c.b16 %v1584, %v1583
        %v1676 = vpack.c.b16 %v1586, %v1585
        %v1677 = vpack.c.b16 %v1588, %v1587
        %v1678 = vpack.c.b16 %v1590, %v1589
        %v1679 = vpack.c.b16 %v1592, %v1591
        %v1680 = vpack.c.b16 %v1594, %v1593
        %v1681 = vpack.c.b16 %v1596, %v1595
        %v1682 = vpack.c.b16 %v1598, %v1597
        %v1683 = vpack.c.b16 %v1600, %v1599
        %v1684 = vpack.c.b16 %v1602, %v1601
        %v1685 = vpack.c.b16 %v1604, %v1603
        %v1686 = vpack.c.b16 %v1606, %v1605
        %v1687 = vpack.c.b16 %v1608, %v1607
        %v1688 = vpack.c.b16 %v1610, %v1609
        %v1689 = vpack.c.b16 %v1612, %v1611
        %v1690 = vpack.c.b16 %v1614, %v1613
        %v1691 = vpack.c.b16 %v1616, %v1615
        %v1692 = vpack.c.b16 %v1618, %v1617
        %v1693 = vpack.c.b16 %v1620, %v1619
        %v1694 = vpack.c.b16 %v1622, %v1621
        %v1695 = vpack.c.b16 %v1624, %v1623
        %v1696 = vpack.c.b16 %v1626, %v1625
        %v1697 = vpack.c.b16 %v1628, %v1627
        %v1698 = vpack.c.b16 %v1630, %v1629
        %v1699 = vpack.c.b16 %v1632, %v1631
        %v1700 = vpack.c.b16 %v1634, %v1633
        %v1701 = vpack.c.b16 %v1636, %v1635
        %v1702 = vpack.c.b16 %v1638, %v1637
        %1767 = vmatpush.bf16.msra.mxu0 %v1646
        %1768 = vmatpush.bf16.msra.mxu0 %v1645
        %1769 = vmatpush.bf16.msra.mxu0 %v1644
        %1770 = vmatpush.bf16.msra.mxu0 %v1643
        %1771 = vmatpush.bf16.msra.mxu0 %v1642
        %1772 = vmatpush.bf16.msra.mxu0 %v1641
        %1773 = vmatpush.bf16.msra.mxu0 %v1640
        %1774 = vmatpush.bf16.msra.mxu0 %v1639
        %1775 = vmatmul.bf16.gmra.mxu0 %v1367
        %v1776 = vpop.f32.mrf.mxu0
        %v1777 = vadd.f32 %v1363, %v1776
        %v1778 = vpop.f32.mrf.mxu0
        %1779 = vdwg.mxu0
        %1780 = vmatpush.bf16.msra.mxu0 %v1654
        %1781 = vmatpush.bf16.msra.mxu0 %v1653
        %1782 = vmatpush.bf16.msra.mxu0 %v1652
        %1783 = vmatpush.bf16.msra.mxu0 %v1651
        %1784 = vmatpush.bf16.msra.mxu0 %v1650
        %1785 = vmatpush.bf16.msra.mxu0 %v1649
        %1786 = vmatpush.bf16.msra.mxu0 %v1648
        %1787 = vmatpush.bf16.msra.mxu0 %v1647
        %1788 = vmatmul.bf16.gmra.mxu0 %v1368
        %v1789 = vpop.f32.mrf.mxu0
        %v1790 = vadd.f32 %v1777, %v1789
        %v1791 = vpop.f32.mrf.mxu0
        %1792 = vdwg.mxu0
        %1793 = vmatpush.bf16.msra.mxu0 %v1662
        %1794 = vmatpush.bf16.msra.mxu0 %v1661
        %1795 = vmatpush.bf16.msra.mxu0 %v1660
        %1796 = vmatpush.bf16.msra.mxu0 %v1659
        %1797 = vmatpush.bf16.msra.mxu0 %v1658
        %1798 = vmatpush.bf16.msra.mxu0 %v1657
        %1799 = vmatpush.bf16.msra.mxu0 %v1656
        %1800 = vmatpush.bf16.msra.mxu0 %v1655
        %1801 = vmatmul.bf16.gmra.mxu0 %v1369
        %v1802 = vpop.f32.mrf.mxu0
        %v1803 = vadd.f32 %v1790, %v1802
        %v1804 = vpop.f32.mrf.mxu0
        %1805 = vdwg.mxu0
        %1806 = vmatpush.bf16.msra.mxu0 %v1670
        %1807 = vmatpush.bf16.msra.mxu0 %v1669
        %1808 = vmatpush.bf16.msra.mxu0 %v1668
        %1809 = vmatpush.bf16.msra.mxu0 %v1667
        %1810 = vmatpush.bf16.msra.mxu0 %v1666
        %1811 = vmatpush.bf16.msra.mxu0 %v1665
        %1812 = vmatpush.bf16.msra.mxu0 %v1664
        %1813 = vmatpush.bf16.msra.mxu0 %v1663
        %1814 = vmatmul.bf16.gmra.mxu0 %v1370
        %v1815 = vpop.f32.mrf.mxu0
        %v1816 = vadd.f32 %v1803, %v1815
        %v1817 = vpop.f32.mrf.mxu0
        %1818 = vdwg.mxu0
        %1819 = vmatpush.bf16.msra.mxu0 %v1678
        %1820 = vmatpush.bf16.msra.mxu0 %v1677
        %1821 = vmatpush.bf16.msra.mxu0 %v1676
        %1822 = vmatpush.bf16.msra.mxu0 %v1675
        %1823 = vmatpush.bf16.msra.mxu0 %v1674
        %1824 = vmatpush.bf16.msra.mxu0 %v1673
        %1825 = vmatpush.bf16.msra.mxu0 %v1672
        %1826 = vmatpush.bf16.msra.mxu0 %v1671
        %1827 = vmatmul.bf16.gmra.mxu0 %v1371
        %v1828 = vpop.f32.mrf.mxu0
        %v1829 = vadd.f32 %v1816, %v1828
        %v1830 = vpop.f32.mrf.mxu0
        %1831 = vdwg.mxu0
        %1832 = vmatpush.bf16.msra.mxu0 %v1686
        %1833 = vmatpush.bf16.msra.mxu0 %v1685
        %1834 = vmatpush.bf16.msra.mxu0 %v1684
        %1835 = vmatpush.bf16.msra.mxu0 %v1683
        %1836 = vmatpush.bf16.msra.mxu0 %v1682
        %1837 = vmatpush.bf16.msra.mxu0 %v1681
        %1838 = vmatpush.bf16.msra.mxu0 %v1680
        %1839 = vmatpush.bf16.msra.mxu0 %v1679
        %1840 = vmatmul.bf16.gmra.mxu0 %v1372
        %v1841 = vpop.f32.mrf.mxu0
        %v1842 = vadd.f32 %v1829, %v1841
        %v1843 = vpop.f32.mrf.mxu0
        %1844 = vdwg.mxu0
        %1845 = vmatpush.bf16.msra.mxu0 %v1694
        %1846 = vmatpush.bf16.msra.mxu0 %v1693
        %1847 = vmatpush.bf16.msra.mxu0 %v1692
        %1848 = vmatpush.bf16.msra.mxu0 %v1691
        %1849 = vmatpush.bf16.msra.mxu0 %v1690
        %1850 = vmatpush.bf16.msra.mxu0 %v1689
        %1851 = vmatpush.bf16.msra.mxu0 %v1688
        %1852 = vmatpush.bf16.msra.mxu0 %v1687
        %1853 = vmatmul.bf16.gmra.mxu0 %v1373
        %v1854 = vpop.f32.mrf.mxu0
        %v1855 = vadd.f32 %v1842, %v1854
        %v1856 = vpop.f32.mrf.mxu0
        %1857 = vdwg.mxu0
        %1858 = vmatpush.bf16.msra.mxu0 %v1702
        %1859 = vmatpush.bf16.msra.mxu0 %v1701
        %1860 = vmatpush.bf16.msra.mxu0 %v1700
        %1861 = vmatpush.bf16.msra.mxu0 %v1699
        %1862 = vmatpush.bf16.msra.mxu0 %v1698
        %1863 = vmatpush.bf16.msra.mxu0 %v1697
        %1864 = vmatpush.bf16.msra.mxu0 %v1696
        %1865 = vmatpush.bf16.msra.mxu0 %v1695
        %1866 = vmatmul.bf16.gmra.mxu0 %v1374
        %v1867 = vpop.f32.mrf.mxu0
        %v1868 = vadd.f32 %v1855, %v1867
        %v1869 = vpop.f32.mrf.mxu0
        %1870 = vdwg.mxu0
        %vm1871 = vcmp.ge.f32.partialorder %v1868, 0.0
        %v1872 = vmul.f32 %v1868, 0.02
        %v1873 = vsel %vm1871, %v1868, %v1872
        %s1874 = scalar_lea.vmem %s273, 2 [#allocation4]
        %1875 = vst.msk [vmem:[%s1874] sm:$0x3] %vm1229, %v1873
        %s1876 = sand.u32 %s146, 1
        %s1877 = scalar_lea.sflag [#allocation5], %s1876
        %s1878 = sand.u32 %s146, 1
        %s1879 = smul.addr %s1878, 4
        %s1880 = scalar_lea.vmem [#allocation4], %s1879
        // Predicated region
        $region37: #{condition_forward.5} parent=35 // pred_check
          %p1881 = pneg %p156
        $region38: #{condition_forward.5} parent=35 // pred_check_branch
          %1883 = sbr.rel (%p1881) target = $region40
        $region39: #{condition_forward.5} parent=35 // pred_region
          %s1884 = smul.u32 2, %s23
          %1886 = vsyncadd %s1877, 0
          %s1887 = smul.addr %s22, 2
          %s1888 = sadd.s32 %s1884, %s1887
          %s1889 = smul.addr %s1888, 2
          %s1890 = scalar_lea.hbm %s4, %s1889
          %s1891 = sshll.u32 %s1880, 4
          %s1892 = int_to_ptr.vmem [resolvable:$true] %s1891
          %s1893 = sshll.u32 %s1890, 4
          %s1894 = int_to_ptr.hbm [resolvable:$true] %s1893
          %1899 = dma.vmem_to_hbm [thread:$0]  %s1892, 64, %s1894, %s1877, 32, 32, 2
        $region40: #{condition_forward.5} parent=35 // pred_fallthru
          _
      $region36: #{condition_forward.5} parent=5 // pred_fallthru
        _
      %p1900 = scmp.le.s32.totalorder 2, %s13
      // Predicated region
      $region41: #{condition_forward.5} parent=5 // pred_check
        %p1901 = pneg %p1900
      $region42: #{condition_forward.5} parent=5 // pred_check_branch
        %1903 = sbr.rel (%p1901) target = $region44
      $region43: #{condition_forward.5} parent=5 // pred_region
        %s1904 = ssub.s32 %s13, 2
        // Predicated region
        $region45: #{condition_forward.5} parent=43 // pred_check
          %p1905 = pneg %p162
        $region46: #{condition_forward.5} parent=43 // pred_check_branch
          %1907 = sbr.rel (%p1905) target = $region48
        $region47: #{condition_forward.5} parent=43 // pred_region
          %s1908 = sand.u32 %s147, 1
          %s1909 = scalar_lea.sflag [#allocation5], %s1908
          %s1910 = sand.u32 %s147, 1
          %s1911 = smul.addr %s1910, 4
          %s1912 = scalar_lea.vmem [#allocation4], %s1911
          %1914 = dma.done %s1909, 64
        $region48: #{condition_forward.5} parent=43 // pred_fallthru
          _
      $region44: #{condition_forward.5} parent=5 // pred_fallthru
        _
    $region6: #{condition_forward.5} parent=1 // loop_footer
      %s17 = sadd.s32 1, %s13
    $region7: #{condition_forward.5} parent=1 // loop_footer_branch
      %12 = sbr.rel target = $region3
    $region8: #{condition_forward.5} parent=1 // loop_exit
      _
    %1915 = vsyncpa [#allocation5], 1
    %s1916 = scalar_lea.sflag [#allocation5], 1
    %1917 = vsyncpa %s1916, 1

// kernel: condition_forward.4
$region0: #{condition_forward.4}
  #allocation0 [shape = 'u32[]', space=smem, size = 0x4, offset = 0x4, fixed_abs, tag = 'smem constant byte address 0x4 - core index']
  #allocation1 [shape = 'u32[72,128]{1,0:T(1,128)}', space=vmem, size = 0x9000, scoped, tag = 'internal scratch']
  #allocation2 [shape = 'bf16[5,2,5,128]{3,2,1,0:T(8,128)(2,1)}', space=vmem, size = 0x5000, scoped, tag = 'scratch operand']
  #allocation3 [shape = 'bf16[4,4,1024]{2,1,0:T(4,128)(2,1)}', space=vmem, size = 0x8000, scoped, tag = 'scratch operand']
  %s0 = inlined_call_operand.vmem [shape: bf16[2,10,5,128], index: 0, kind: input, shape index: {}, may-alias: {0,1}]
  %s1 = inlined_call_operand.vmem [shape: bf16[2,10,5,128], index: 1, kind: input, shape index: {}, may-alias: {0,1}]
  %s2 = inlined_call_operand.vmem [shape: bf16[1024,64], index: 2, kind: input, shape index: {}]
  %s3 = inlined_call_operand.vmem [shape: f32[1,64], index: 3, kind: input, shape index: {}]
  %s4 = inlined_call_operand.vmem [shape: bf16[2,4,4,64], index: 4, kind: output, shape index: {}]
  %s5 = sld [smem:[#allocation0]]
  $region49: #{condition_forward.4} parent=0
    _
  %s7 = ssub.s32 1, %s5
  %s8 = scalar_select 0, %s7, %s5
  loop: start=0, step=1, limit=4
  $region2: #{condition_forward.4} parent=0 // loop_pre_header
    _
  $region3: #{condition_forward.4} parent=0 // loop_header
    %s10 = sphi 0, %s14
    %p11 = scmp.ge.s32.totalorder %s10, 4
    %s17 = sphi 0, %s29
    %s18 = sphi 0, %s25
    %s19 = sphi 0, %s17
    %s20 = sphi 0, %s18
    %s21 = sphi 0, %s19
    %s22 = sphi 0, %s20
    %s34 = sphi 0, %s36
    %s37 = sphi 0, %s34
    %s38 = sphi 0, %s37
    %s54 = sphi 0, %s38
    %s70 = sphi 0, %s72
    %s73 = sphi 0, %s70
    %s74 = sphi 0, %s73
    %s90 = sphi 0, %s74
    %s94 = sphi 0, %s94
    %s96 = sphi 0, %s94
    %s97 = sphi 0, %s96
    %s111 = sphi 0, %s97
    %s115 = sphi 0, %s115
    %s117 = sphi 0, %s115
    %s118 = sphi 0, %s117
    %s132 = sphi 0, %s118
    %s140 = sphi 0, %s142
    %s143 = sphi 0, %s140
    %s144 = sphi 0, %s143
    %s160 = sphi 0, %s144
  $region4: #{condition_forward.4} parent=0 // loop_header_branch
    %13 = sbr.rel (%p11) target = $region8
  $region5: #{condition_forward.4} parent=0 // loop_body
    %s15 = ssub.s32 %s10, 1
    %s16 = ssub.s32 %s10, 2
    %s23 = sadd.s32 1, %s18
    %p24 = scmp.ge.s32.totalorder %s23, 1
    %s25 = scalar_select %p24, 0, %s23
    %s26 = sadd.s32 1, %s17
    %s27 = scalar_select %p24, %s26, %s17
    %p28 = scmp.ge.s32.totalorder %s27, 2
    %s29 = scalar_select %p28, 0, %s27
    %s30 = ssub.s32 %s17, %s29
    %s31 = ssub.s32 %s18, %s25
    %s32 = sor.u32 %s30, %s31
    %p33 = scmp.eq.s32.totalorder %s32, 0
    %s35 = sadd.s32 %s34, 1
    %s36 = scalar_select %p33, %s34, %s35
    %p39 = pneg %p33
    %p40 = scmp.eq.s32.totalorder %s10, 1
    %p41 = por %p39, %p40
    %p42 = scmp.ne.s32.totalorder %s34, %s37
    %p43 = scmp.eq.s32.totalorder %s10, 0
    %p44 = por %p42, %p43
    %p45 = scmp.ne.s32.totalorder %s34, %s37
    %p46 = scmp.eq.s32.totalorder %s15, 1
    %p47 = por %p45, %p46
    %p48 = scmp.ne.s32.totalorder %s37, %s38
    %p49 = scmp.eq.s32.totalorder %s15, 0
    %p50 = por %p48, %p49
    %p51 = scmp.ne.s32.totalorder %s37, %s38
    %p52 = scmp.eq.s32.totalorder %s16, 1
    %p53 = por %p51, %p52
    %p55 = scmp.ne.s32.totalorder %s38, %s54
    %p56 = scmp.eq.s32.totalorder %s16, 0
    %p57 = por %p55, %p56
    %s58 = smul.u32 %s18, 4
    %s59 = sadd.s32 %s58, 4
    %p60 = scmp.lt.s32.totalorder %s59, 4
    %s61 = scalar_select %p60, %s59, 4
    %s62 = smul.u32 %s25, 4
    %s63 = sadd.s32 %s62, 4
    %p64 = scmp.lt.s32.totalorder %s63, 4
    %s65 = scalar_select %p64, %s63, 4
    %s66 = ssub.s32 %s17, %s29
    %s67 = ssub.s32 %s61, %s65
    %s68 = sor.u32 %s66, %s67
    %p69 = scmp.eq.s32.totalorder %s68, 0
    %s71 = sadd.s32 %s70, 1
    %s72 = scalar_select %p69, %s70, %s71
    %p75 = pneg %p69
    %p76 = scmp.eq.s32.totalorder %s10, 1
    %p77 = por %p75, %p76
    %p78 = scmp.ne.s32.totalorder %s70, %s73
    %p79 = scmp.eq.s32.totalorder %s10, 0
    %p80 = por %p78, %p79
    %p81 = scmp.ne.s32.totalorder %s70, %s73
    %p82 = scmp.eq.s32.totalorder %s15, 1
    %p83 = por %p81, %p82
    %p84 = scmp.ne.s32.totalorder %s73, %s74
    %p85 = scmp.eq.s32.totalorder %s15, 0
    %p86 = por %p84, %p85
    %p87 = scmp.ne.s32.totalorder %s73, %s74
    %p88 = scmp.eq.s32.totalorder %s16, 1
    %p89 = por %p87, %p88
    %p91 = scmp.ne.s32.totalorder %s74, %s90
    %p92 = scmp.eq.s32.totalorder %s16, 0
    %p93 = por %p91, %p92
    %s95 = sadd.s32 %s94, 1
    %p98 = scmp.eq.s32.totalorder %s10, 1
    %p99 = scmp.ne.s32.totalorder %s94, %s96
    %p100 = scmp.eq.s32.totalorder %s10, 0
    %p101 = por %p99, %p100
    %p102 = scmp.ne.s32.totalorder %s94, %s96
    %p103 = scmp.eq.s32.totalorder %s15, 1
    %p104 = por %p102, %p103
    %p105 = scmp.ne.s32.totalorder %s96, %s97
    %p106 = scmp.eq.s32.totalorder %s15, 0
    %p107 = por %p105, %p106
    %p108 = scmp.ne.s32.totalorder %s96, %s97
    %p109 = scmp.eq.s32.totalorder %s16, 1
    %p110 = por %p108, %p109
    %p112 = scmp.ne.s32.totalorder %s97, %s111
    %p113 = scmp.eq.s32.totalorder %s16, 0
    %p114 = por %p112, %p113
    %s116 = sadd.s32 %s115, 1
    %p119 = scmp.eq.s32.totalorder %s10, 1
    %p120 = scmp.ne.s32.totalorder %s115, %s117
    %p121 = scmp.eq.s32.totalorder %s10, 0
    %p122 = por %p120, %p121
    %p123 = scmp.ne.s32.totalorder %s115, %s117
    %p124 = scmp.eq.s32.totalorder %s15, 1
    %p125 = por %p123, %p124
    %p126 = scmp.ne.s32.totalorder %s117, %s118
    %p127 = scmp.eq.s32.totalorder %s15, 0
    %p128 = por %p126, %p127
    %p129 = scmp.ne.s32.totalorder %s117, %s118
    %p130 = scmp.eq.s32.totalorder %s16, 1
    %p131 = por %p129, %p130
    %p133 = scmp.ne.s32.totalorder %s118, %s132
    %p134 = scmp.eq.s32.totalorder %s16, 0
    %p135 = por %p133, %p134
    %s136 = ssub.s32 %s17, %s29
    %s137 = ssub.s32 %s18, %s25
    %s138 = sor.u32 %s136, %s137
    %p139 = scmp.eq.s32.totalorder %s138, 0
    %s141 = sadd.s32 %s140, 1
    %s142 = scalar_select %p139, %s140, %s141
    %p145 = pneg %p139
    %p146 = scmp.eq.s32.totalorder %s10, 1
    %p147 = por %p145, %p146
    %p148 = scmp.ne.s32.totalorder %s140, %s143
    %p149 = scmp.eq.s32.totalorder %s10, 0
    %p150 = por %p148, %p149
    %p151 = scmp.ne.s32.totalorder %s140, %s143
    %p152 = scmp.eq.s32.totalorder %s15, 1
    %p153 = por %p151, %p152
    %p154 = scmp.ne.s32.totalorder %s143, %s144
    %p155 = scmp.eq.s32.totalorder %s15, 0
    %p156 = por %p154, %p155
    %p157 = scmp.ne.s32.totalorder %s143, %s144
    %p158 = scmp.eq.s32.totalorder %s16, 1
    %p159 = por %p157, %p158
    %p161 = scmp.ne.s32.totalorder %s144, %s160
    %p162 = scmp.eq.s32.totalorder %s16, 0
    %p163 = por %p161, %p162
    %p164 = scmp.le.s32.totalorder 1, %s10
    %p165 = scmp.lt.s32.totalorder %s10, 3
    %p166 = pnand %p164, %p165
    %p167 = pneg %p166
    // Predicated region
    $region9: #{condition_forward.4} parent=5 // pred_check
      _
    $region10: #{condition_forward.4} parent=5 // pred_check_branch
      %169 = sbr.rel (%p166) target = $region12
    $region11: #{condition_forward.4} parent=5 // pred_region
      %s170 = ssub.s32 %s10, 1
      // Predicated region
      $region13: #{condition_forward.4} parent=11 // pred_check
        %p171 = pneg %p107
      $region14: #{condition_forward.4} parent=11 // pred_check_branch
        %173 = sbr.rel (%p171) target = $region16
      $region15: #{condition_forward.4} parent=11 // pred_region
        _
      $region16: #{condition_forward.4} parent=11 // pred_fallthru
        _
      // Predicated region
      $region17: #{condition_forward.4} parent=11 // pred_check
        %p174 = pneg %p128
      $region18: #{condition_forward.4} parent=11 // pred_check_branch
        %176 = sbr.rel (%p174) target = $region20
      $region19: #{condition_forward.4} parent=11 // pred_region
        _
      $region20: #{condition_forward.4} parent=11 // pred_fallthru
        _
    $region12: #{condition_forward.4} parent=5 // pred_fallthru
      _
    %p177 = scmp.lt.s32.totalorder %s10, 2
    // Predicated region
    $region21: #{condition_forward.4} parent=5 // pred_check
      %p178 = pneg %p177
    $region22: #{condition_forward.4} parent=5 // pred_check_branch
      %180 = sbr.rel (%p178) target = $region24
    $region23: #{condition_forward.4} parent=5 // pred_region
      // Predicated region
      $region25: #{condition_forward.4} parent=23 // pred_check
        %p181 = pneg %p44
      $region26: #{condition_forward.4} parent=23 // pred_check_branch
        %183 = sbr.rel (%p181) target = $region28
      $region27: #{condition_forward.4} parent=23 // pred_region
        %s184 = smul.u32 8, %s18
        %s185 = ssub.s32 10, %s184
        %p186 = scmp.lt.s32.totalorder %s185, 8
        %s187 = scalar_select %p186, %s185, 8
        %s188 = smul.u32 4, %s187
        %p189 = scmp.lt.s32.totalorder %s17, 1
        %s190 = scalar_select %p189, %s17, 1
        %p191 = scmp.lt.s32.totalorder %s184, 9
        %s192 = scalar_select %p191, %s184, 9
        %s193 = smul.addr %s190, 10
        %s194 = sadd.s32 %s192, %s193
        %s195 = smul.addr %s194, 4
        %s196 = scalar_lea.vmem %s0, %s195
        %s197 = smul.u32 8, %s18
        %s198 = ssub.s32 10, %s197
        %p199 = scmp.lt.s32.totalorder %s198, 8
        %s200 = scalar_select %p199, %s198, 8
        %s201 = smul.u32 4, %s200
      $region28: #{condition_forward.4} parent=23 // pred_fallthru
        _
      // Predicated region
      $region29: #{condition_forward.4} parent=23 // pred_check
        %p202 = pneg %p80
      $region30: #{condition_forward.4} parent=23 // pred_check_branch
        %204 = sbr.rel (%p202) target = $region32
      $region31: #{condition_forward.4} parent=23 // pred_region
        %s205 = smul.u32 %s18, 4
        %s206 = sadd.s32 %s205, 4
        %p207 = scmp.lt.s32.totalorder %s206, 4
        %s208 = scalar_select %p207, %s206, 4
        %s209 = smul.u32 2, %s208
        %p210 = scmp.lt.s32.totalorder %s17, 1
        %s211 = scalar_select %p210, %s17, 1
        %p212 = scmp.lt.s32.totalorder %s209, 9
        %s213 = scalar_select %p212, %s209, 9
        %s214 = smul.addr %s211, 10
        %s215 = sadd.s32 %s213, %s214
        %s216 = smul.addr %s215, 4
        %s217 = scalar_lea.vmem %s1, %s216
        %s218 = smul.u32 %s18, 4
        %s219 = sadd.s32 %s218, 4
        %p220 = scmp.lt.s32.totalorder %s219, 4
        %s221 = scalar_select %p220, %s219, 4
        %s222 = smul.u32 2, %s221
      $region32: #{condition_forward.4} parent=23 // pred_fallthru
        _
    $region24: #{condition_forward.4} parent=5 // pred_fallthru
      _
    %p223 = scmp.le.s32.totalorder 1, %s10
    %p224 = scmp.lt.s32.totalorder %s10, 3
    %p225 = pnand %p223, %p224
    %p226 = pneg %p225
    // Predicated region
    $region33: #{condition_forward.4} parent=5 // pred_check
      _
    $region34: #{condition_forward.4} parent=5 // pred_check_branch
      %228 = sbr.rel (%p225) target = $region36
    $region35: #{condition_forward.4} parent=5 // pred_region
      %s229 = ssub.s32 %s10, 1
      %s230 = smul.u32 8, %s20
      %s231 = ssub.s32 10, %s230
      %p232 = scmp.lt.s32.totalorder %s231, 8
      %s233 = scalar_select %p232, %s231, 8
      %s234 = smul.u32 4, %s233
      %p235 = scmp.lt.s32.totalorder %s19, 1
      %s236 = scalar_select %p235, %s19, 1
      %p237 = scmp.lt.s32.totalorder %s230, 9
      %s238 = scalar_select %p237, %s230, 9
      %s239 = smul.addr %s236, 10
      %s240 = sadd.s32 %s238, %s239
      %s241 = smul.addr %s240, 4
      %s242 = scalar_lea.vmem %s0, %s241
      %p243 = pneg %p50
      %p244 = pneg %p47
      %s245 = smul.u32 %s20, 4
      %s246 = sadd.s32 %s245, 4
      %p247 = scmp.lt.s32.totalorder %s246, 4
      %s248 = scalar_select %p247, %s246, 4
      %s249 = smul.u32 2, %s248
      %p250 = scmp.lt.s32.totalorder %s19, 1
      %s251 = scalar_select %p250, %s19, 1
      %p252 = scmp.lt.s32.totalorder %s249, 9
      %s253 = scalar_select %p252, %s249, 9
      %s254 = smul.addr %s251, 10
      %s255 = sadd.s32 %s253, %s254
      %s256 = smul.addr %s255, 4
      %s257 = scalar_lea.vmem %s1, %s256
      %p258 = pneg %p86
      %p259 = pneg %p83
      %p260 = pneg %p107
      %p261 = pneg %p104
      %p262 = pneg %p128
      %p263 = pneg %p125
      %p264 = pneg %p156
      %p265 = pneg %p153
      %s266 = smul.u32 4, %s20
      %p267 = scmp.lt.s32.totalorder %s19, 1
      %s268 = scalar_select %p267, %s19, 1
      %p269 = scmp.lt.s32.totalorder %s266, 3
      %s270 = scalar_select %p269, %s266, 3
      %s271 = smul.addr %s268, 4
      %s272 = sadd.s32 %s270, %s271
      %s273 = smul.addr %s272, 2
      %s274 = scalar_lea.vmem %s4, %s273
      %s275 = smul.u32 8, %s20
      %s276 = ssub.s32 10, %s275
      %p277 = scmp.lt.s32.totalorder %s276, 8
      %s278 = scalar_select %p277, %s276, 8
      %s279 = smul.u32 4, %s278
      %p280 = scmp.lt.s32.totalorder %s19, 1
      %s281 = scalar_select %p280, %s19, 1
      %p282 = scmp.lt.s32.totalorder %s275, 9
      %s283 = scalar_select %p282, %s275, 9
      %s284 = smul.addr %s281, 10
      %s285 = sadd.s32 %s283, %s284
      %s286 = smul.addr %s285, 4
      %s287 = scalar_lea.vmem %s0, %s286
      %s288 = smul.u32 8, %s20
      %s289 = ssub.s32 10, %s288
      %p290 = scmp.lt.s32.totalorder %s289, 8
      %s291 = scalar_select %p290, %s289, 8
      %s292 = smul.u32 4, %s291
      %s293 = smul.u32 %s20, 4
      %s294 = sadd.s32 %s293, 4
      %p295 = scmp.lt.s32.totalorder %s294, 4
      %s296 = scalar_select %p295, %s294, 4
      %s297 = smul.u32 2, %s296
      %p298 = scmp.lt.s32.totalorder %s19, 1
      %s299 = scalar_select %p298, %s19, 1
      %p300 = scmp.lt.s32.totalorder %s297, 9
      %s301 = scalar_select %p300, %s297, 9
      %s302 = smul.addr %s299, 10
      %s303 = sadd.s32 %s301, %s302
      %s304 = smul.addr %s303, 4
      %s305 = scalar_lea.vmem %s1, %s304
      %s306 = smul.u32 %s20, 4
      %s307 = sadd.s32 %s306, 4
      %p308 = scmp.lt.s32.totalorder %s307, 4
      %s309 = scalar_select %p308, %s307, 4
      %s310 = smul.u32 2, %s309
      %s311 = smul.u32 4, %s20
      %p312 = scmp.lt.s32.totalorder %s19, 1
      %s313 = scalar_select %p312, %s19, 1
      %p314 = scmp.lt.s32.totalorder %s311, 3
      %s315 = scalar_select %p314, %s311, 3
      %s316 = smul.addr %s313, 4
      %s317 = sadd.s32 %s315, %s316
      %s318 = smul.addr %s317, 2
      %s319 = scalar_lea.vmem %s4, %s318
      %s320 = smul.u32 4, %s20
      %v321 = vld [vmem:[%s287] sm:$0x7]
      %v322 = vld [vmem:[%s287 + $0x4] sm:$0x7]
      %v323 = vld [vmem:[%s287 + $0x8] sm:$0x7]
      %v324 = vld [vmem:[%s287 + $0xc] sm:$0x7]
      %v325 = vld [vmem:[%s287 + $0x10] sm:$0x7]
      %v326 = vld [vmem:[%s287 + $0x14] sm:$0x7]
      %v327 = vld [vmem:[%s287 + $0x18] sm:$0x7]
      %v328 = vld [vmem:[%s287 + $0x1c] sm:$0x7]
      %vm329 = vcmask 1042432
      %vm330 = vsmask.f32 2304
      %vm331 = vmand %vm329, %vm330
      %v332 = vld [vmem:[#allocation2] sm:$0x7]
      %v333 = vsel %vm331, %v321, %v332
      %334 = vst [vmem:[#allocation2] sm:$0x7] %v333
      %v335 = vld [vmem:[#allocation2 + $0x4] sm:$0x7]
      %v336 = vsel %vm331, %v322, %v335
      %337 = vst [vmem:[#allocation2 + $0x4] sm:$0x7] %v336
      %v338 = vld [vmem:[#allocation2 + $0x8] sm:$0x7]
      %v339 = vsel %vm331, %v323, %v338
      %340 = vst [vmem:[#allocation2 + $0x8] sm:$0x7] %v339
      %v341 = vld [vmem:[#allocation2 + $0xc] sm:$0x7]
      %v342 = vsel %vm331, %v324, %v341
      %343 = vst [vmem:[#allocation2 + $0xc] sm:$0x7] %v342
      %v344 = vld [vmem:[#allocation2 + $0x10] sm:$0x7]
      %v345 = vsel %vm331, %v325, %v344
      %346 = vst [vmem:[#allocation2 + $0x10] sm:$0x7] %v345
      %v347 = vld [vmem:[#allocation2 + $0x14] sm:$0x7]
      %v348 = vsel %vm331, %v326, %v347
      %349 = vst [vmem:[#allocation2 + $0x14] sm:$0x7] %v348
      %v350 = vld [vmem:[#allocation2 + $0x18] sm:$0x7]
      %v351 = vsel %vm331, %v327, %v350
      %352 = vst [vmem:[#allocation2 + $0x18] sm:$0x7] %v351
      %v353 = vld [vmem:[#allocation2 + $0x1c] sm:$0x7]
      %v354 = vsel %vm331, %v328, %v353
      %355 = vst [vmem:[#allocation2 + $0x1c] sm:$0x7] %v354
      %v356 = vld [vmem:[%s305] sm:$0x7]
      %v357 = vld [vmem:[%s305 + $0x4] sm:$0x7]
      %s358 = scalar_lea.vmem [#allocation2], 32
      %v359 = vld [vmem:[%s358] sm:$0x7]
      %v360 = vsel %vm331, %v356, %v359
      %361 = vst [vmem:[%s358] sm:$0x7] %v360
      %v362 = vld [vmem:[%s358 + $0x4] sm:$0x7]
      %v363 = vsel %vm331, %v357, %v362
      %364 = vst [vmem:[%s358 + $0x4] sm:$0x7] %v363
      %v365 = vld [vmem:[#allocation2] sm:$0x7]
      %v366 = vld [vmem:[#allocation2 + $0x8] sm:$0x7]
      %v367 = vld [vmem:[#allocation2 + $0x10] sm:$0x7]
      %v368 = vld [vmem:[#allocation2 + $0x18] sm:$0x7]
      %369 = vst [vmem:[#allocation3] sm:$0x3] %v365
      %370 = vst [vmem:[#allocation3 + $0x10] sm:$0x3] %v366
      %371 = vst [vmem:[#allocation3 + $0x20] sm:$0x3] %v367
      %372 = vst [vmem:[#allocation3 + $0x30] sm:$0x3] %v368
      %v377 = vrot.slane %v365, 2
      %v378 = vrot.slane %v366, 2
      %v379 = vrot.slane %v367, 2
      %v380 = vrot.slane %v368, 2
      %vm381 = vcmask 1041408
      %v384 = vsel %vm381, %v365, %v377
      %vm385 = vcmask 1043458
      %v386 = vsel %vm385, %v365, %v377
      %v388 = vrot.slane %v386, 2
      %v391 = vsel %vm381, %v366, %v378
      %v392 = vsel %vm385, %v366, %v378
      %v394 = vrot.slane %v392, 2
      %v397 = vsel %vm381, %v367, %v379
      %v398 = vsel %vm385, %v367, %v379
      %v400 = vrot.slane %v398, 2
      %v403 = vsel %vm381, %v368, %v380
      %v404 = vsel %vm385, %v368, %v380
      %v406 = vrot.slane %v404, 2
      %vm407 = vsmask.f32 1280
      %vm408 = vsmask.f32 3336
      %vm409 = vmor %vm407, %vm408
      %vm410 = vsmask.f32 5392
      %vm411 = vmor %vm409, %vm410
      %vm412 = vsmask.f32 7448
      %vm413 = vmor %vm411, %vm412
      %v414 = vshrl.u32 %v384, 16
      %v416 = vrot.slane %v414, 6
      %v417 = vshll.u32 %v384, 16
      %v419 = vrot.slane %v417, 7
      %v420 = vor.u32 %v416, %v419
      %v421 = vrot.slane %v420, 2
      %v423 = vshll.u32 %v388, 16
      %v425 = vrot.slane %v423, 7
      %v426 = vsel %vm413, %v421, %v425
      %v427 = vshrl.u32 %v391, 16
      %v429 = vrot.slane %v427, 6
      %v430 = vshll.u32 %v391, 16
      %v432 = vrot.slane %v430, 7
      %v433 = vor.u32 %v429, %v432
      %v434 = vrot.slane %v433, 2
      %v436 = vshll.u32 %v394, 16
      %v438 = vrot.slane %v436, 7
      %v439 = vsel %vm413, %v434, %v438
      %v440 = vshrl.u32 %v397, 16
      %v442 = vrot.slane %v440, 6
      %v443 = vshll.u32 %v397, 16
      %v445 = vrot.slane %v443, 7
      %v446 = vor.u32 %v442, %v445
      %v447 = vrot.slane %v446, 2
      %v449 = vshll.u32 %v400, 16
      %v451 = vrot.slane %v449, 7
      %v452 = vsel %vm413, %v447, %v451
      %v453 = vshrl.u32 %v403, 16
      %v455 = vrot.slane %v453, 6
      %v456 = vshll.u32 %v403, 16
      %v458 = vrot.slane %v456, 7
      %v459 = vor.u32 %v455, %v458
      %v460 = vrot.slane %v459, 2
      %v462 = vshll.u32 %v406, 16
      %v464 = vrot.slane %v462, 7
      %v465 = vsel %vm413, %v460, %v464
      %470 = vst [vmem:[#allocation3 + $0x2] sm:$0x3] %v426
      %471 = vst [vmem:[#allocation3 + $0x12] sm:$0x3] %v439
      %472 = vst [vmem:[#allocation3 + $0x22] sm:$0x3] %v452
      %473 = vst [vmem:[#allocation3 + $0x32] sm:$0x3] %v465
      %s474 = scalar_lea.vmem [#allocation2], 4
      %v475 = vld [vmem:[%s474] sm:$0x7]
      %v476 = vld [vmem:[%s474 + $0x8] sm:$0x7]
      %v477 = vld [vmem:[%s474 + $0x10] sm:$0x7]
      %v478 = vld [vmem:[%s474 + $0x18] sm:$0x7]
      %479 = vst [vmem:[#allocation3 + $0x4] sm:$0x3] %v475
      %480 = vst [vmem:[#allocation3 + $0x14] sm:$0x3] %v476
      %481 = vst [vmem:[#allocation3 + $0x24] sm:$0x3] %v477
      %482 = vst [vmem:[#allocation3 + $0x34] sm:$0x3] %v478
      %v487 = vrot.slane %v475, 2
      %v488 = vrot.slane %v476, 2
      %v489 = vrot.slane %v477, 2
      %v490 = vrot.slane %v478, 2
      %v493 = vsel %vm381, %v475, %v487
      %v494 = vsel %vm385, %v475, %v487
      %v496 = vrot.slane %v494, 2
      %v499 = vsel %vm381, %v476, %v488
      %v500 = vsel %vm385, %v476, %v488
      %v502 = vrot.slane %v500, 2
      %v505 = vsel %vm381, %v477, %v489
      %v506 = vsel %vm385, %v477, %v489
      %v508 = vrot.slane %v506, 2
      %v511 = vsel %vm381, %v478, %v490
      %v512 = vsel %vm385, %v478, %v490
      %v514 = vrot.slane %v512, 2
      %v515 = vshrl.u32 %v493, 16
      %v517 = vrot.slane %v515, 6
      %v518 = vshll.u32 %v493, 16
      %v520 = vrot.slane %v518, 7
      %v521 = vor.u32 %v517, %v520
      %v522 = vrot.slane %v521, 2
      %v524 = vshll.u32 %v496, 16
      %v526 = vrot.slane %v524, 7
      %v527 = vsel %vm413, %v522, %v526
      %v528 = vshrl.u32 %v499, 16
      %v530 = vrot.slane %v528, 6
      %v531 = vshll.u32 %v499, 16
      %v533 = vrot.slane %v531, 7
      %v534 = vor.u32 %v530, %v533
      %v535 = vrot.slane %v534, 2
      %v537 = vshll.u32 %v502, 16
      %v539 = vrot.slane %v537, 7
      %v540 = vsel %vm413, %v535, %v539
      %v541 = vshrl.u32 %v505, 16
      %v543 = vrot.slane %v541, 6
      %v544 = vshll.u32 %v505, 16
      %v546 = vrot.slane %v544, 7
      %v547 = vor.u32 %v543, %v546
      %v548 = vrot.slane %v547, 2
      %v550 = vshll.u32 %v508, 16
      %v552 = vrot.slane %v550, 7
      %v553 = vsel %vm413, %v548, %v552
      %v554 = vshrl.u32 %v511, 16
      %v556 = vrot.slane %v554, 6
      %v557 = vshll.u32 %v511, 16
      %v559 = vrot.slane %v557, 7
      %v560 = vor.u32 %v556, %v559
      %v561 = vrot.slane %v560, 2
      %v563 = vshll.u32 %v514, 16
      %v565 = vrot.slane %v563, 7
      %v566 = vsel %vm413, %v561, %v565
      %571 = vst [vmem:[#allocation3 + $0x6] sm:$0x3] %v527
      %572 = vst [vmem:[#allocation3 + $0x16] sm:$0x3] %v540
      %573 = vst [vmem:[#allocation3 + $0x26] sm:$0x3] %v553
      %574 = vst [vmem:[#allocation3 + $0x36] sm:$0x3] %v566
      %s575 = scalar_lea.vmem [#allocation2], 8
      %v576 = vld [vmem:[%s575] sm:$0x7]
      %v577 = vld [vmem:[%s575 + $0x8] sm:$0x7]
      %v578 = vld [vmem:[%s575 + $0x10] sm:$0x7]
      %v579 = vld [vmem:[%s575 + $0x18] sm:$0x7]
      %580 = vst [vmem:[#allocation3 + $0x8] sm:$0x3] %v576
      %581 = vst [vmem:[#allocation3 + $0x18] sm:$0x3] %v577
      %582 = vst [vmem:[#allocation3 + $0x28] sm:$0x3] %v578
      %583 = vst [vmem:[#allocation3 + $0x38] sm:$0x3] %v579
      %v588 = vrot.slane %v576, 2
      %v589 = vrot.slane %v577, 2
      %v590 = vrot.slane %v578, 2
      %v591 = vrot.slane %v579, 2
      %v594 = vsel %vm381, %v576, %v588
      %v595 = vsel %vm385, %v576, %v588
      %v597 = vrot.slane %v595, 2
      %v600 = vsel %vm381, %v577, %v589
      %v601 = vsel %vm385, %v577, %v589
      %v603 = vrot.slane %v601, 2
      %v606 = vsel %vm381, %v578, %v590
      %v607 = vsel %vm385, %v578, %v590
      %v609 = vrot.slane %v607, 2
      %v612 = vsel %vm381, %v579, %v591
      %v613 = vsel %vm385, %v579, %v591
      %v615 = vrot.slane %v613, 2
      %v616 = vshrl.u32 %v594, 16
      %v618 = vrot.slane %v616, 6
      %v619 = vshll.u32 %v594, 16
      %v621 = vrot.slane %v619, 7
      %v622 = vor.u32 %v618, %v621
      %v623 = vrot.slane %v622, 2
      %v625 = vshll.u32 %v597, 16
      %v627 = vrot.slane %v625, 7
      %v628 = vsel %vm413, %v623, %v627
      %v629 = vshrl.u32 %v600, 16
      %v631 = vrot.slane %v629, 6
      %v632 = vshll.u32 %v600, 16
      %v634 = vrot.slane %v632, 7
      %v635 = vor.u32 %v631, %v634
      %v636 = vrot.slane %v635, 2
      %v638 = vshll.u32 %v603, 16
      %v640 = vrot.slane %v638, 7
      %v641 = vsel %vm413, %v636, %v640
      %v642 = vshrl.u32 %v606, 16
      %v644 = vrot.slane %v642, 6
      %v645 = vshll.u32 %v606, 16
      %v647 = vrot.slane %v645, 7
      %v648 = vor.u32 %v644, %v647
      %v649 = vrot.slane %v648, 2
      %v651 = vshll.u32 %v609, 16
      %v653 = vrot.slane %v651, 7
      %v654 = vsel %vm413, %v649, %v653
      %v655 = vshrl.u32 %v612, 16
      %v657 = vrot.slane %v655, 6
      %v658 = vshll.u32 %v612, 16
      %v660 = vrot.slane %v658, 7
      %v661 = vor.u32 %v657, %v660
      %v662 = vrot.slane %v661, 2
      %v664 = vshll.u32 %v615, 16
      %v666 = vrot.slane %v664, 7
      %v667 = vsel %vm413, %v662, %v666
      %672 = vst [vmem:[#allocation3 + $0xa] sm:$0x3] %v628
      %673 = vst [vmem:[#allocation3 + $0x1a] sm:$0x3] %v641
      %674 = vst [vmem:[#allocation3 + $0x2a] sm:$0x3] %v654
      %675 = vst [vmem:[#allocation3 + $0x3a] sm:$0x3] %v667
      %s676 = scalar_lea.vmem [#allocation2], 12
      %v677 = vld [vmem:[%s676] sm:$0x7]
      %v678 = vld [vmem:[%s676 + $0x8] sm:$0x7]
      %v679 = vld [vmem:[%s676 + $0x10] sm:$0x7]
      %v680 = vld [vmem:[%s676 + $0x18] sm:$0x7]
      %681 = vst [vmem:[#allocation3 + $0xc] sm:$0x3] %v677
      %682 = vst [vmem:[#allocation3 + $0x1c] sm:$0x3] %v678
      %683 = vst [vmem:[#allocation3 + $0x2c] sm:$0x3] %v679
      %684 = vst [vmem:[#allocation3 + $0x3c] sm:$0x3] %v680
      %v689 = vrot.slane %v677, 2
      %v690 = vrot.slane %v678, 2
      %v691 = vrot.slane %v679, 2
      %v692 = vrot.slane %v680, 2
      %v695 = vsel %vm381, %v677, %v689
      %v696 = vsel %vm385, %v677, %v689
      %v698 = vrot.slane %v696, 2
      %v701 = vsel %vm381, %v678, %v690
      %v702 = vsel %vm385, %v678, %v690
      %v704 = vrot.slane %v702, 2
      %v707 = vsel %vm381, %v679, %v691
      %v708 = vsel %vm385, %v679, %v691
      %v710 = vrot.slane %v708, 2
      %v713 = vsel %vm381, %v680, %v692
      %v714 = vsel %vm385, %v680, %v692
      %v716 = vrot.slane %v714, 2
      %v717 = vshrl.u32 %v695, 16
      %v719 = vrot.slane %v717, 6
      %v720 = vshll.u32 %v695, 16
      %v722 = vrot.slane %v720, 7
      %v723 = vor.u32 %v719, %v722
      %v724 = vrot.slane %v723, 2
      %v726 = vshll.u32 %v698, 16
      %v728 = vrot.slane %v726, 7
      %v729 = vsel %vm413, %v724, %v728
      %v730 = vshrl.u32 %v701, 16
      %v732 = vrot.slane %v730, 6
      %v733 = vshll.u32 %v701, 16
      %v735 = vrot.slane %v733, 7
      %v736 = vor.u32 %v732, %v735
      %v737 = vrot.slane %v736, 2
      %v739 = vshll.u32 %v704, 16
      %v741 = vrot.slane %v739, 7
      %v742 = vsel %vm413, %v737, %v741
      %v743 = vshrl.u32 %v707, 16
      %v745 = vrot.slane %v743, 6
      %v746 = vshll.u32 %v707, 16
      %v748 = vrot.slane %v746, 7
      %v749 = vor.u32 %v745, %v748
      %v750 = vrot.slane %v749, 2
      %v752 = vshll.u32 %v710, 16
      %v754 = vrot.slane %v752, 7
      %v755 = vsel %vm413, %v750, %v754
      %v756 = vshrl.u32 %v713, 16
      %v758 = vrot.slane %v756, 6
      %v759 = vshll.u32 %v713, 16
      %v761 = vrot.slane %v759, 7
      %v762 = vor.u32 %v758, %v761
      %v763 = vrot.slane %v762, 2
      %v765 = vshll.u32 %v716, 16
      %v767 = vrot.slane %v765, 7
      %v768 = vsel %vm413, %v763, %v767
      %773 = vst [vmem:[#allocation3 + $0xe] sm:$0x3] %v729
      %774 = vst [vmem:[#allocation3 + $0x1e] sm:$0x3] %v742
      %775 = vst [vmem:[#allocation3 + $0x2e] sm:$0x3] %v755
      %776 = vst [vmem:[#allocation3 + $0x3e] sm:$0x3] %v768
      %v777 = vld [vmem:[#allocation3] sm:$0xff]
      %v778 = vld [vmem:[#allocation3 + $0x8] sm:$0xff]
      %v779 = vld [vmem:[%s2] sm:$0xf]
      %v780 = vld [vmem:[%s2 + $0x4] sm:$0xf]
      %v781 = vld [vmem:[%s2 + $0x8] sm:$0xf]
      %v782 = vld [vmem:[%s2 + $0xc] sm:$0xf]
      %v783 = vld [vmem:[%s2 + $0x10] sm:$0xf]
      %v784 = vld [vmem:[%s2 + $0x14] sm:$0xf]
      %v785 = vld [vmem:[%s2 + $0x18] sm:$0xf]
      %v786 = vld [vmem:[%s2 + $0x1c] sm:$0xf]
      %v787 = vld [vmem:[%s2 + $0x20] sm:$0xf]
      %v788 = vld [vmem:[%s2 + $0x24] sm:$0xf]
      %v789 = vld [vmem:[%s2 + $0x28] sm:$0xf]
      %v790 = vld [vmem:[%s2 + $0x2c] sm:$0xf]
      %v791 = vld [vmem:[%s2 + $0x30] sm:$0xf]
      %v792 = vld [vmem:[%s2 + $0x34] sm:$0xf]
      %v793 = vld [vmem:[%s2 + $0x38] sm:$0xf]
      %v794 = vld [vmem:[%s2 + $0x3c] sm:$0xf]
      %v795 = vld [vmem:[%s2 + $0x40] sm:$0xf]
      %v796 = vld [vmem:[%s2 + $0x44] sm:$0xf]
      %v797 = vld [vmem:[%s2 + $0x48] sm:$0xf]
      %v798 = vld [vmem:[%s2 + $0x4c] sm:$0xf]
      %v799 = vld [vmem:[%s2 + $0x50] sm:$0xf]
      %v800 = vld [vmem:[%s2 + $0x54] sm:$0xf]
      %v801 = vld [vmem:[%s2 + $0x58] sm:$0xf]
      %v802 = vld [vmem:[%s2 + $0x5c] sm:$0xf]
      %v803 = vld [vmem:[%s2 + $0x60] sm:$0xf]
      %v804 = vld [vmem:[%s2 + $0x64] sm:$0xf]
      %v805 = vld [vmem:[%s2 + $0x68] sm:$0xf]
      %v806 = vld [vmem:[%s2 + $0x6c] sm:$0xf]
      %v807 = vld [vmem:[%s2 + $0x70] sm:$0xf]
      %v808 = vld [vmem:[%s2 + $0x74] sm:$0xf]
      %v809 = vld [vmem:[%s2 + $0x78] sm:$0xf]
      %v810 = vld [vmem:[%s2 + $0x7c] sm:$0xf]
      %v811 = vld [vmem:[%s2 + $0x80] sm:$0xf]
      %v812 = vld [vmem:[%s2 + $0x84] sm:$0xf]
      %v813 = vld [vmem:[%s2 + $0x88] sm:$0xf]
      %v814 = vld [vmem:[%s2 + $0x8c] sm:$0xf]
      %v815 = vld [vmem:[%s2 + $0x90] sm:$0xf]
      %v816 = vld [vmem:[%s2 + $0x94] sm:$0xf]
      %v817 = vld [vmem:[%s2 + $0x98] sm:$0xf]
      %v818 = vld [vmem:[%s2 + $0x9c] sm:$0xf]
      %v819 = vld [vmem:[%s2 + $0xa0] sm:$0xf]
      %v820 = vld [vmem:[%s2 + $0xa4] sm:$0xf]
      %v821 = vld [vmem:[%s2 + $0xa8] sm:$0xf]
      %v822 = vld [vmem:[%s2 + $0xac] sm:$0xf]
      %v823 = vld [vmem:[%s2 + $0xb0] sm:$0xf]
      %v824 = vld [vmem:[%s2 + $0xb4] sm:$0xf]
      %v825 = vld [vmem:[%s2 + $0xb8] sm:$0xf]
      %v826 = vld [vmem:[%s2 + $0xbc] sm:$0xf]
      %v827 = vld [vmem:[%s2 + $0xc0] sm:$0xf]
      %v828 = vld [vmem:[%s2 + $0xc4] sm:$0xf]
      %v829 = vld [vmem:[%s2 + $0xc8] sm:$0xf]
      %v830 = vld [vmem:[%s2 + $0xcc] sm:$0xf]
      %v831 = vld [vmem:[%s2 + $0xd0] sm:$0xf]
      %v832 = vld [vmem:[%s2 + $0xd4] sm:$0xf]
      %v833 = vld [vmem:[%s2 + $0xd8] sm:$0xf]
      %v834 = vld [vmem:[%s2 + $0xdc] sm:$0xf]
      %v835 = vld [vmem:[%s2 + $0xe0] sm:$0xf]
      %v836 = vld [vmem:[%s2 + $0xe4] sm:$0xf]
      %v837 = vld [vmem:[%s2 + $0xe8] sm:$0xf]
      %v838 = vld [vmem:[%s2 + $0xec] sm:$0xf]
      %v839 = vld [vmem:[%s2 + $0xf0] sm:$0xf]
      %v840 = vld [vmem:[%s2 + $0xf4] sm:$0xf]
      %v841 = vld [vmem:[%s2 + $0xf8] sm:$0xf]
      %v842 = vld [vmem:[%s2 + $0xfc] sm:$0xf]
      %v843 = vld [vmem:[%s2 + $0x100] sm:$0xf]
      %v844 = vld [vmem:[%s2 + $0x104] sm:$0xf]
      %v845 = vld [vmem:[%s2 + $0x108] sm:$0xf]
      %v846 = vld [vmem:[%s2 + $0x10c] sm:$0xf]
      %v847 = vld [vmem:[%s2 + $0x110] sm:$0xf]
      %v848 = vld [vmem:[%s2 + $0x114] sm:$0xf]
      %v849 = vld [vmem:[%s2 + $0x118] sm:$0xf]
      %v850 = vld [vmem:[%s2 + $0x11c] sm:$0xf]
      %v851 = vld [vmem:[%s2 + $0x120] sm:$0xf]
      %v852 = vld [vmem:[%s2 + $0x124] sm:$0xf]
      %v853 = vld [vmem:[%s2 + $0x128] sm:$0xf]
      %v854 = vld [vmem:[%s2 + $0x12c] sm:$0xf]
      %v855 = vld [vmem:[%s2 + $0x130] sm:$0xf]
      %v856 = vld [vmem:[%s2 + $0x134] sm:$0xf]
      %v857 = vld [vmem:[%s2 + $0x138] sm:$0xf]
      %v858 = vld [vmem:[%s2 + $0x13c] sm:$0xf]
      %v859 = vld [vmem:[%s2 + $0x140] sm:$0xf]
      %v860 = vld [vmem:[%s2 + $0x144] sm:$0xf]
      %v861 = vld [vmem:[%s2 + $0x148] sm:$0xf]
      %v862 = vld [vmem:[%s2 + $0x14c] sm:$0xf]
      %v863 = vld [vmem:[%s2 + $0x150] sm:$0xf]
      %v864 = vld [vmem:[%s2 + $0x154] sm:$0xf]
      %v865 = vld [vmem:[%s2 + $0x158] sm:$0xf]
      %v866 = vld [vmem:[%s2 + $0x15c] sm:$0xf]
      %v867 = vld [vmem:[%s2 + $0x160] sm:$0xf]
      %v868 = vld [vmem:[%s2 + $0x164] sm:$0xf]
      %v869 = vld [vmem:[%s2 + $0x168] sm:$0xf]
      %v870 = vld [vmem:[%s2 + $0x16c] sm:$0xf]
      %v871 = vld [vmem:[%s2 + $0x170] sm:$0xf]
      %v872 = vld [vmem:[%s2 + $0x174] sm:$0xf]
      %v873 = vld [vmem:[%s2 + $0x178] sm:$0xf]
      %v874 = vld [vmem:[%s2 + $0x17c] sm:$0xf]
      %v875 = vld [vmem:[%s2 + $0x180] sm:$0xf]
      %v876 = vld [vmem:[%s2 + $0x184] sm:$0xf]
      %v877 = vld [vmem:[%s2 + $0x188] sm:$0xf]
      %v878 = vld [vmem:[%s2 + $0x18c] sm:$0xf]
      %v879 = vld [vmem:[%s2 + $0x190] sm:$0xf]
      %v880 = vld [vmem:[%s2 + $0x194] sm:$0xf]
      %v881 = vld [vmem:[%s2 + $0x198] sm:$0xf]
      %v882 = vld [vmem:[%s2 + $0x19c] sm:$0xf]
      %v883 = vld [vmem:[%s2 + $0x1a0] sm:$0xf]
      %v884 = vld [vmem:[%s2 + $0x1a4] sm:$0xf]
      %v885 = vld [vmem:[%s2 + $0x1a8] sm:$0xf]
      %v886 = vld [vmem:[%s2 + $0x1ac] sm:$0xf]
      %v887 = vld [vmem:[%s2 + $0x1b0] sm:$0xf]
      %v888 = vld [vmem:[%s2 + $0x1b4] sm:$0xf]
      %v889 = vld [vmem:[%s2 + $0x1b8] sm:$0xf]
      %v890 = vld [vmem:[%s2 + $0x1bc] sm:$0xf]
      %v891 = vld [vmem:[%s2 + $0x1c0] sm:$0xf]
      %v892 = vld [vmem:[%s2 + $0x1c4] sm:$0xf]
      %v893 = vld [vmem:[%s2 + $0x1c8] sm:$0xf]
      %v894 = vld [vmem:[%s2 + $0x1cc] sm:$0xf]
      %v895 = vld [vmem:[%s2 + $0x1d0] sm:$0xf]
      %v896 = vld [vmem:[%s2 + $0x1d4] sm:$0xf]
      %v897 = vld [vmem:[%s2 + $0x1d8] sm:$0xf]
      %v898 = vld [vmem:[%s2 + $0x1dc] sm:$0xf]
      %v899 = vld [vmem:[%s2 + $0x1e0] sm:$0xf]
      %v900 = vld [vmem:[%s2 + $0x1e4] sm:$0xf]
      %v901 = vld [vmem:[%s2 + $0x1e8] sm:$0xf]
      %v902 = vld [vmem:[%s2 + $0x1ec] sm:$0xf]
      %v903 = vld [vmem:[%s2 + $0x1f0] sm:$0xf]
      %v904 = vld [vmem:[%s2 + $0x1f4] sm:$0xf]
      %v905 = vld [vmem:[%s2 + $0x1f8] sm:$0xf]
      %v906 = vld [vmem:[%s2 + $0x1fc] sm:$0xf]
      %v907 = vld [vmem:[%s3] sm:$0x1]
      %v909 = vperm.slane %v907, 0
      %912 = vst [vmem:[#allocation1] ss:$4 sm:$0xff] %v777
      %s914 = scalar_lea.vmem [#allocation1], 32
      %915 = vst [vmem:[%s914] ss:$4 sm:$0xff] %v778
      %v916 = vld.sshfl [vmem:[#allocation1] sm:$0xff pattern:$0x73625140]
      %v917 = vld.sshfl [vmem:[#allocation1 + $0x8] sm:$0xff pattern:$0x73625140]
      %v918 = vld.sshfl [vmem:[#allocation1 + $0x10] sm:$0xff pattern:$0x73625140]
      %v919 = vld.sshfl [vmem:[#allocation1 + $0x18] sm:$0xff pattern:$0x73625140]
      %v920 = vld.sshfl [vmem:[#allocation1 + $0x20] sm:$0xff pattern:$0x73625140]
      %v921 = vld.sshfl [vmem:[#allocation1 + $0x28] sm:$0xff pattern:$0x73625140]
      %v922 = vld.sshfl [vmem:[#allocation1 + $0x30] sm:$0xff pattern:$0x73625140]
      %v923 = vld.sshfl [vmem:[#allocation1 + $0x38] sm:$0xff pattern:$0x73625140]
      %v1060 = vunpack.c.l.b16 %v779
      %v1061 = vunpack.c.l.b16 %v780
      %v1062 = vunpack.c.l.b16 %v781
      %v1063 = vunpack.c.l.b16 %v782
      %v1064 = vunpack.c.l.b16 %v783
      %v1065 = vunpack.c.l.b16 %v784
      %v1066 = vunpack.c.l.b16 %v785
      %v1067 = vunpack.c.l.b16 %v786
      %v1068 = vunpack.c.l.b16 %v787
      %v1069 = vunpack.c.l.b16 %v788
      %v1070 = vunpack.c.l.b16 %v789
      %v1071 = vunpack.c.l.b16 %v790
      %v1072 = vunpack.c.l.b16 %v791
      %v1073 = vunpack.c.l.b16 %v792
      %v1074 = vunpack.c.l.b16 %v793
      %v1075 = vunpack.c.l.b16 %v794
      %v1076 = vunpack.c.l.b16 %v795
      %v1077 = vunpack.c.l.b16 %v796
      %v1078 = vunpack.c.l.b16 %v797
      %v1079 = vunpack.c.l.b16 %v798
      %v1080 = vunpack.c.l.b16 %v799
      %v1081 = vunpack.c.l.b16 %v800
      %v1082 = vunpack.c.l.b16 %v801
      %v1083 = vunpack.c.l.b16 %v802
      %v1084 = vunpack.c.l.b16 %v803
      %v1085 = vunpack.c.l.b16 %v804
      %v1086 = vunpack.c.l.b16 %v805
      %v1087 = vunpack.c.l.b16 %v806
      %v1088 = vunpack.c.l.b16 %v807
      %v1089 = vunpack.c.l.b16 %v808
      %v1090 = vunpack.c.l.b16 %v809
      %v1091 = vunpack.c.l.b16 %v810
      %v1092 = vunpack.c.l.b16 %v811
      %v1093 = vunpack.c.l.b16 %v812
      %v1094 = vunpack.c.l.b16 %v813
      %v1095 = vunpack.c.l.b16 %v814
      %v1096 = vunpack.c.l.b16 %v815
      %v1097 = vunpack.c.l.b16 %v816
      %v1098 = vunpack.c.l.b16 %v817
      %v1099 = vunpack.c.l.b16 %v818
      %v1100 = vunpack.c.l.b16 %v819
      %v1101 = vunpack.c.l.b16 %v820
      %v1102 = vunpack.c.l.b16 %v821
      %v1103 = vunpack.c.l.b16 %v822
      %v1104 = vunpack.c.l.b16 %v823
      %v1105 = vunpack.c.l.b16 %v824
      %v1106 = vunpack.c.l.b16 %v825
      %v1107 = vunpack.c.l.b16 %v826
      %v1108 = vunpack.c.l.b16 %v827
      %v1109 = vunpack.c.l.b16 %v828
      %v1110 = vunpack.c.l.b16 %v829
      %v1111 = vunpack.c.l.b16 %v830
      %v1112 = vunpack.c.l.b16 %v831
      %v1113 = vunpack.c.l.b16 %v832
      %v1114 = vunpack.c.l.b16 %v833
      %v1115 = vunpack.c.l.b16 %v834
      %v1116 = vunpack.c.l.b16 %v835
      %v1117 = vunpack.c.l.b16 %v836
      %v1118 = vunpack.c.l.b16 %v837
      %v1119 = vunpack.c.l.b16 %v838
      %v1120 = vunpack.c.l.b16 %v839
      %v1121 = vunpack.c.l.b16 %v840
      %v1122 = vunpack.c.l.b16 %v841
      %v1123 = vunpack.c.l.b16 %v842
      %v1124 = vunpack.c.l.b16 %v843
      %v1125 = vunpack.c.l.b16 %v844
      %v1126 = vunpack.c.l.b16 %v845
      %v1127 = vunpack.c.l.b16 %v846
      %v1128 = vunpack.c.l.b16 %v847
      %v1129 = vunpack.c.l.b16 %v848
      %v1130 = vunpack.c.l.b16 %v849
      %v1131 = vunpack.c.l.b16 %v850
      %v1132 = vunpack.c.l.b16 %v851
      %v1133 = vunpack.c.l.b16 %v852
      %v1134 = vunpack.c.l.b16 %v853
      %v1135 = vunpack.c.l.b16 %v854
      %v1136 = vunpack.c.l.b16 %v855
      %v1137 = vunpack.c.l.b16 %v856
      %v1138 = vunpack.c.l.b16 %v857
      %v1139 = vunpack.c.l.b16 %v858
      %v1140 = vunpack.c.l.b16 %v859
      %v1141 = vunpack.c.l.b16 %v860
      %v1142 = vunpack.c.l.b16 %v861
      %v1143 = vunpack.c.l.b16 %v862
      %v1144 = vunpack.c.l.b16 %v863
      %v1145 = vunpack.c.l.b16 %v864
      %v1146 = vunpack.c.l.b16 %v865
      %v1147 = vunpack.c.l.b16 %v866
      %v1148 = vunpack.c.l.b16 %v867
      %v1149 = vunpack.c.l.b16 %v868
      %v1150 = vunpack.c.l.b16 %v869
      %v1151 = vunpack.c.l.b16 %v870
      %v1152 = vunpack.c.l.b16 %v871
      %v1153 = vunpack.c.l.b16 %v872
      %v1154 = vunpack.c.l.b16 %v873
      %v1155 = vunpack.c.l.b16 %v874
      %v1156 = vunpack.c.l.b16 %v875
      %v1157 = vunpack.c.l.b16 %v876
      %v1158 = vunpack.c.l.b16 %v877
      %v1159 = vunpack.c.l.b16 %v878
      %v1160 = vunpack.c.l.b16 %v879
      %v1161 = vunpack.c.l.b16 %v880
      %v1162 = vunpack.c.l.b16 %v881
      %v1163 = vunpack.c.l.b16 %v882
      %v1164 = vunpack.c.l.b16 %v883
      %v1165 = vunpack.c.l.b16 %v884
      %v1166 = vunpack.c.l.b16 %v885
      %v1167 = vunpack.c.l.b16 %v886
      %v1168 = vunpack.c.l.b16 %v887
      %v1169 = vunpack.c.l.b16 %v888
      %v1170 = vunpack.c.l.b16 %v889
      %v1171 = vunpack.c.l.b16 %v890
      %v1172 = vunpack.c.l.b16 %v891
      %v1173 = vunpack.c.l.b16 %v892
      %v1174 = vunpack.c.l.b16 %v893
      %v1175 = vunpack.c.l.b16 %v894
      %v1176 = vunpack.c.l.b16 %v895
      %v1177 = vunpack.c.l.b16 %v896
      %v1178 = vunpack.c.l.b16 %v897
      %v1179 = vunpack.c.l.b16 %v898
      %v1180 = vunpack.c.l.b16 %v899
      %v1181 = vunpack.c.l.b16 %v900
      %v1182 = vunpack.c.l.b16 %v901
      %v1183 = vunpack.c.l.b16 %v902
      %v1184 = vunpack.c.l.b16 %v903
      %v1185 = vunpack.c.l.b16 %v904
      %v1186 = vunpack.c.l.b16 %v905
      %v1187 = vunpack.c.l.b16 %v906
      %v1188 = vpack.c.b16 %v1061, %v1060
      %v1189 = vpack.c.b16 %v1063, %v1062
      %v1190 = vpack.c.b16 %v1065, %v1064
      %v1191 = vpack.c.b16 %v1067, %v1066
      %v1192 = vpack.c.b16 %v1069, %v1068
      %v1193 = vpack.c.b16 %v1071, %v1070
      %v1194 = vpack.c.b16 %v1073, %v1072
      %v1195 = vpack.c.b16 %v1075, %v1074
      %v1196 = vpack.c.b16 %v1077, %v1076
      %v1197 = vpack.c.b16 %v1079, %v1078
      %v1198 = vpack.c.b16 %v1081, %v1080
      %v1199 = vpack.c.b16 %v1083, %v1082
      %v1200 = vpack.c.b16 %v1085, %v1084
      %v1201 = vpack.c.b16 %v1087, %v1086
      %v1202 = vpack.c.b16 %v1089, %v1088
      %v1203 = vpack.c.b16 %v1091, %v1090
      %v1204 = vpack.c.b16 %v1093, %v1092
      %v1205 = vpack.c.b16 %v1095, %v1094
      %v1206 = vpack.c.b16 %v1097, %v1096
      %v1207 = vpack.c.b16 %v1099, %v1098
      %v1208 = vpack.c.b16 %v1101, %v1100
      %v1209 = vpack.c.b16 %v1103, %v1102
      %v1210 = vpack.c.b16 %v1105, %v1104
      %v1211 = vpack.c.b16 %v1107, %v1106
      %v1212 = vpack.c.b16 %v1109, %v1108
      %v1213 = vpack.c.b16 %v1111, %v1110
      %v1214 = vpack.c.b16 %v1113, %v1112
      %v1215 = vpack.c.b16 %v1115, %v1114
      %v1216 = vpack.c.b16 %v1117, %v1116
      %v1217 = vpack.c.b16 %v1119, %v1118
      %v1218 = vpack.c.b16 %v1121, %v1120
      %v1219 = vpack.c.b16 %v1123, %v1122
      %v1220 = vpack.c.b16 %v1125, %v1124
      %v1221 = vpack.c.b16 %v1127, %v1126
      %v1222 = vpack.c.b16 %v1129, %v1128
      %v1223 = vpack.c.b16 %v1131, %v1130
      %v1224 = vpack.c.b16 %v1133, %v1132
      %v1225 = vpack.c.b16 %v1135, %v1134
      %v1226 = vpack.c.b16 %v1137, %v1136
      %v1227 = vpack.c.b16 %v1139, %v1138
      %v1228 = vpack.c.b16 %v1141, %v1140
      %v1229 = vpack.c.b16 %v1143, %v1142
      %v1230 = vpack.c.b16 %v1145, %v1144
      %v1231 = vpack.c.b16 %v1147, %v1146
      %v1232 = vpack.c.b16 %v1149, %v1148
      %v1233 = vpack.c.b16 %v1151, %v1150
      %v1234 = vpack.c.b16 %v1153, %v1152
      %v1235 = vpack.c.b16 %v1155, %v1154
      %v1236 = vpack.c.b16 %v1157, %v1156
      %v1237 = vpack.c.b16 %v1159, %v1158
      %v1238 = vpack.c.b16 %v1161, %v1160
      %v1239 = vpack.c.b16 %v1163, %v1162
      %v1240 = vpack.c.b16 %v1165, %v1164
      %v1241 = vpack.c.b16 %v1167, %v1166
      %v1242 = vpack.c.b16 %v1169, %v1168
      %v1243 = vpack.c.b16 %v1171, %v1170
      %v1244 = vpack.c.b16 %v1173, %v1172
      %v1245 = vpack.c.b16 %v1175, %v1174
      %v1246 = vpack.c.b16 %v1177, %v1176
      %v1247 = vpack.c.b16 %v1179, %v1178
      %v1248 = vpack.c.b16 %v1181, %v1180
      %v1249 = vpack.c.b16 %v1183, %v1182
      %v1250 = vpack.c.b16 %v1185, %v1184
      %v1251 = vpack.c.b16 %v1187, %v1186
      %1316 = vmatpush.bf16.msra.mxu0 %v1195
      %1317 = vmatpush.bf16.msra.mxu0 %v1194
      %1318 = vmatpush.bf16.msra.mxu0 %v1193
      %1319 = vmatpush.bf16.msra.mxu0 %v1192
      %1320 = vmatpush.bf16.msra.mxu0 %v1191
      %1321 = vmatpush.bf16.msra.mxu0 %v1190
      %1322 = vmatpush.bf16.msra.mxu0 %v1189
      %1323 = vmatpush.bf16.msra.mxu0 %v1188
      %1324 = vmatmul.bf16.gmra.mxu0 %v916
      %v1325 = vpop.f32.mrf.mxu0
      %v1326 = vadd.f32 %v909, %v1325
      %v1327 = vpop.f32.mrf.mxu0
      %1328 = vdwg.mxu0
      %1329 = vmatpush.bf16.msra.mxu0 %v1203
      %1330 = vmatpush.bf16.msra.mxu0 %v1202
      %1331 = vmatpush.bf16.msra.mxu0 %v1201
      %1332 = vmatpush.bf16.msra.mxu0 %v1200
      %1333 = vmatpush.bf16.msra.mxu0 %v1199
      %1334 = vmatpush.bf16.msra.mxu0 %v1198
      %1335 = vmatpush.bf16.msra.mxu0 %v1197
      %1336 = vmatpush.bf16.msra.mxu0 %v1196
      %1337 = vmatmul.bf16.gmra.mxu0 %v917
      %v1338 = vpop.f32.mrf.mxu0
      %v1339 = vadd.f32 %v1326, %v1338
      %v1340 = vpop.f32.mrf.mxu0
      %1341 = vdwg.mxu0
      %1342 = vmatpush.bf16.msra.mxu0 %v1211
      %1343 = vmatpush.bf16.msra.mxu0 %v1210
      %1344 = vmatpush.bf16.msra.mxu0 %v1209
      %1345 = vmatpush.bf16.msra.mxu0 %v1208
      %1346 = vmatpush.bf16.msra.mxu0 %v1207
      %1347 = vmatpush.bf16.msra.mxu0 %v1206
      %1348 = vmatpush.bf16.msra.mxu0 %v1205
      %1349 = vmatpush.bf16.msra.mxu0 %v1204
      %1350 = vmatmul.bf16.gmra.mxu0 %v918
      %v1351 = vpop.f32.mrf.mxu0
      %v1352 = vadd.f32 %v1339, %v1351
      %v1353 = vpop.f32.mrf.mxu0
      %1354 = vdwg.mxu0
      %1355 = vmatpush.bf16.msra.mxu0 %v1219
      %1356 = vmatpush.bf16.msra.mxu0 %v1218
      %1357 = vmatpush.bf16.msra.mxu0 %v1217
      %1358 = vmatpush.bf16.msra.mxu0 %v1216
      %1359 = vmatpush.bf16.msra.mxu0 %v1215
      %1360 = vmatpush.bf16.msra.mxu0 %v1214
      %1361 = vmatpush.bf16.msra.mxu0 %v1213
      %1362 = vmatpush.bf16.msra.mxu0 %v1212
      %1363 = vmatmul.bf16.gmra.mxu0 %v919
      %v1364 = vpop.f32.mrf.mxu0
      %v1365 = vadd.f32 %v1352, %v1364
      %v1366 = vpop.f32.mrf.mxu0
      %1367 = vdwg.mxu0
      %1368 = vmatpush.bf16.msra.mxu0 %v1227
      %1369 = vmatpush.bf16.msra.mxu0 %v1226
      %1370 = vmatpush.bf16.msra.mxu0 %v1225
      %1371 = vmatpush.bf16.msra.mxu0 %v1224
      %1372 = vmatpush.bf16.msra.mxu0 %v1223
      %1373 = vmatpush.bf16.msra.mxu0 %v1222
      %1374 = vmatpush.bf16.msra.mxu0 %v1221
      %1375 = vmatpush.bf16.msra.mxu0 %v1220
      %1376 = vmatmul.bf16.gmra.mxu0 %v920
      %v1377 = vpop.f32.mrf.mxu0
      %v1378 = vadd.f32 %v1365, %v1377
      %v1379 = vpop.f32.mrf.mxu0
      %1380 = vdwg.mxu0
      %1381 = vmatpush.bf16.msra.mxu0 %v1235
      %1382 = vmatpush.bf16.msra.mxu0 %v1234
      %1383 = vmatpush.bf16.msra.mxu0 %v1233
      %1384 = vmatpush.bf16.msra.mxu0 %v1232
      %1385 = vmatpush.bf16.msra.mxu0 %v1231
      %1386 = vmatpush.bf16.msra.mxu0 %v1230
      %1387 = vmatpush.bf16.msra.mxu0 %v1229
      %1388 = vmatpush.bf16.msra.mxu0 %v1228
      %1389 = vmatmul.bf16.gmra.mxu0 %v921
      %v1390 = vpop.f32.mrf.mxu0
      %v1391 = vadd.f32 %v1378, %v1390
      %v1392 = vpop.f32.mrf.mxu0
      %1393 = vdwg.mxu0
      %1394 = vmatpush.bf16.msra.mxu0 %v1243
      %1395 = vmatpush.bf16.msra.mxu0 %v1242
      %1396 = vmatpush.bf16.msra.mxu0 %v1241
      %1397 = vmatpush.bf16.msra.mxu0 %v1240
      %1398 = vmatpush.bf16.msra.mxu0 %v1239
      %1399 = vmatpush.bf16.msra.mxu0 %v1238
      %1400 = vmatpush.bf16.msra.mxu0 %v1237
      %1401 = vmatpush.bf16.msra.mxu0 %v1236
      %1402 = vmatmul.bf16.gmra.mxu0 %v922
      %v1403 = vpop.f32.mrf.mxu0
      %v1404 = vadd.f32 %v1391, %v1403
      %v1405 = vpop.f32.mrf.mxu0
      %1406 = vdwg.mxu0
      %1407 = vmatpush.bf16.msra.mxu0 %v1251
      %1408 = vmatpush.bf16.msra.mxu0 %v1250
      %1409 = vmatpush.bf16.msra.mxu0 %v1249
      %1410 = vmatpush.bf16.msra.mxu0 %v1248
      %1411 = vmatpush.bf16.msra.mxu0 %v1247
      %1412 = vmatpush.bf16.msra.mxu0 %v1246
      %1413 = vmatpush.bf16.msra.mxu0 %v1245
      %1414 = vmatpush.bf16.msra.mxu0 %v1244
      %1415 = vmatmul.bf16.gmra.mxu0 %v923
      %v1416 = vpop.f32.mrf.mxu0
      %v1417 = vadd.f32 %v1404, %v1416
      %v1418 = vpop.f32.mrf.mxu0
      %1419 = vdwg.mxu0
      %vm1420 = vcmp.ge.f32.partialorder %v1417, 0.0
      %v1421 = vmul.f32 %v1417, 0.2
      %v1422 = vsel %vm1420, %v1417, %v1421
      %v1423 = vpack.c.bf16 %v1422, %v1422
      %vm1424 = vcmask 517120
      %1425 = vst.msk [vmem:[%s319] sm:$0x3] %vm1424, %v1423
      %s1426 = scalar_lea.vmem [#allocation3], 16
      %v1427 = vld [vmem:[%s1426] sm:$0xff]
      %v1428 = vld [vmem:[%s1426 + $0x8] sm:$0xff]
      %v1429 = vld [vmem:[%s2] sm:$0xf]
      %v1430 = vld [vmem:[%s2 + $0x4] sm:$0xf]
      %v1431 = vld [vmem:[%s2 + $0x8] sm:$0xf]
      %v1432 = vld [vmem:[%s2 + $0xc] sm:$0xf]
      %v1433 = vld [vmem:[%s2 + $0x10] sm:$0xf]
      %v1434 = vld [vmem:[%s2 + $0x14] sm:$0xf]
      %v1435 = vld [vmem:[%s2 + $0x18] sm:$0xf]
      %v1436 = vld [vmem:[%s2 + $0x1c] sm:$0xf]
      %v1437 = vld [vmem:[%s2 + $0x20] sm:$0xf]
      %v1438 = vld [vmem:[%s2 + $0x24] sm:$0xf]
      %v1439 = vld [vmem:[%s2 + $0x28] sm:$0xf]
      %v1440 = vld [vmem:[%s2 + $0x2c] sm:$0xf]
      %v1441 = vld [vmem:[%s2 + $0x30] sm:$0xf]
      %v1442 = vld [vmem:[%s2 + $0x34] sm:$0xf]
      %v1443 = vld [vmem:[%s2 + $0x38] sm:$0xf]
      %v1444 = vld [vmem:[%s2 + $0x3c] sm:$0xf]
      %v1445 = vld [vmem:[%s2 + $0x40] sm:$0xf]
      %v1446 = vld [vmem:[%s2 + $0x44] sm:$0xf]
      %v1447 = vld [vmem:[%s2 + $0x48] sm:$0xf]
      %v1448 = vld [vmem:[%s2 + $0x4c] sm:$0xf]
      %v1449 = vld [vmem:[%s2 + $0x50] sm:$0xf]
      %v1450 = vld [vmem:[%s2 + $0x54] sm:$0xf]
      %v1451 = vld [vmem:[%s2 + $0x58] sm:$0xf]
      %v1452 = vld [vmem:[%s2 + $0x5c] sm:$0xf]
      %v1453 = vld [vmem:[%s2 + $0x60] sm:$0xf]
      %v1454 = vld [vmem:[%s2 + $0x64] sm:$0xf]
      %v1455 = vld [vmem:[%s2 + $0x68] sm:$0xf]
      %v1456 = vld [vmem:[%s2 + $0x6c] sm:$0xf]
      %v1457 = vld [vmem:[%s2 + $0x70] sm:$0xf]
      %v1458 = vld [vmem:[%s2 + $0x74] sm:$0xf]
      %v1459 = vld [vmem:[%s2 + $0x78] sm:$0xf]
      %v1460 = vld [vmem:[%s2 + $0x7c] sm:$0xf]
      %v1461 = vld [vmem:[%s2 + $0x80] sm:$0xf]
      %v1462 = vld [vmem:[%s2 + $0x84] sm:$0xf]
      %v1463 = vld [vmem:[%s2 + $0x88] sm:$0xf]
      %v1464 = vld [vmem:[%s2 + $0x8c] sm:$0xf]
      %v1465 = vld [vmem:[%s2 + $0x90] sm:$0xf]
      %v1466 = vld [vmem:[%s2 + $0x94] sm:$0xf]
      %v1467 = vld [vmem:[%s2 + $0x98] sm:$0xf]
      %v1468 = vld [vmem:[%s2 + $0x9c] sm:$0xf]
      %v1469 = vld [vmem:[%s2 + $0xa0] sm:$0xf]
      %v1470 = vld [vmem:[%s2 + $0xa4] sm:$0xf]
      %v1471 = vld [vmem:[%s2 + $0xa8] sm:$0xf]
      %v1472 = vld [vmem:[%s2 + $0xac] sm:$0xf]
      %v1473 = vld [vmem:[%s2 + $0xb0] sm:$0xf]
      %v1474 = vld [vmem:[%s2 + $0xb4] sm:$0xf]
      %v1475 = vld [vmem:[%s2 + $0xb8] sm:$0xf]
      %v1476 = vld [vmem:[%s2 + $0xbc] sm:$0xf]
      %v1477 = vld [vmem:[%s2 + $0xc0] sm:$0xf]
      %v1478 = vld [vmem:[%s2 + $0xc4] sm:$0xf]
      %v1479 = vld [vmem:[%s2 + $0xc8] sm:$0xf]
      %v1480 = vld [vmem:[%s2 + $0xcc] sm:$0xf]
      %v1481 = vld [vmem:[%s2 + $0xd0] sm:$0xf]
      %v1482 = vld [vmem:[%s2 + $0xd4] sm:$0xf]
      %v1483 = vld [vmem:[%s2 + $0xd8] sm:$0xf]
      %v1484 = vld [vmem:[%s2 + $0xdc] sm:$0xf]
      %v1485 = vld [vmem:[%s2 + $0xe0] sm:$0xf]
      %v1486 = vld [vmem:[%s2 + $0xe4] sm:$0xf]
      %v1487 = vld [vmem:[%s2 + $0xe8] sm:$0xf]
      %v1488 = vld [vmem:[%s2 + $0xec] sm:$0xf]
      %v1489 = vld [vmem:[%s2 + $0xf0] sm:$0xf]
      %v1490 = vld [vmem:[%s2 + $0xf4] sm:$0xf]
      %v1491 = vld [vmem:[%s2 + $0xf8] sm:$0xf]
      %v1492 = vld [vmem:[%s2 + $0xfc] sm:$0xf]
      %v1493 = vld [vmem:[%s2 + $0x100] sm:$0xf]
      %v1494 = vld [vmem:[%s2 + $0x104] sm:$0xf]
      %v1495 = vld [vmem:[%s2 + $0x108] sm:$0xf]
      %v1496 = vld [vmem:[%s2 + $0x10c] sm:$0xf]
      %v1497 = vld [vmem:[%s2 + $0x110] sm:$0xf]
      %v1498 = vld [vmem:[%s2 + $0x114] sm:$0xf]
      %v1499 = vld [vmem:[%s2 + $0x118] sm:$0xf]
      %v1500 = vld [vmem:[%s2 + $0x11c] sm:$0xf]
      %v1501 = vld [vmem:[%s2 + $0x120] sm:$0xf]
      %v1502 = vld [vmem:[%s2 + $0x124] sm:$0xf]
      %v1503 = vld [vmem:[%s2 + $0x128] sm:$0xf]
      %v1504 = vld [vmem:[%s2 + $0x12c] sm:$0xf]
      %v1505 = vld [vmem:[%s2 + $0x130] sm:$0xf]
      %v1506 = vld [vmem:[%s2 + $0x134] sm:$0xf]
      %v1507 = vld [vmem:[%s2 + $0x138] sm:$0xf]
      %v1508 = vld [vmem:[%s2 + $0x13c] sm:$0xf]
      %v1509 = vld [vmem:[%s2 + $0x140] sm:$0xf]
      %v1510 = vld [vmem:[%s2 + $0x144] sm:$0xf]
      %v1511 = vld [vmem:[%s2 + $0x148] sm:$0xf]
      %v1512 = vld [vmem:[%s2 + $0x14c] sm:$0xf]
      %v1513 = vld [vmem:[%s2 + $0x150] sm:$0xf]
      %v1514 = vld [vmem:[%s2 + $0x154] sm:$0xf]
      %v1515 = vld [vmem:[%s2 + $0x158] sm:$0xf]
      %v1516 = vld [vmem:[%s2 + $0x15c] sm:$0xf]
      %v1517 = vld [vmem:[%s2 + $0x160] sm:$0xf]
      %v1518 = vld [vmem:[%s2 + $0x164] sm:$0xf]
      %v1519 = vld [vmem:[%s2 + $0x168] sm:$0xf]
      %v1520 = vld [vmem:[%s2 + $0x16c] sm:$0xf]
      %v1521 = vld [vmem:[%s2 + $0x170] sm:$0xf]
      %v1522 = vld [vmem:[%s2 + $0x174] sm:$0xf]
      %v1523 = vld [vmem:[%s2 + $0x178] sm:$0xf]
      %v1524 = vld [vmem:[%s2 + $0x17c] sm:$0xf]
      %v1525 = vld [vmem:[%s2 + $0x180] sm:$0xf]
      %v1526 = vld [vmem:[%s2 + $0x184] sm:$0xf]
      %v1527 = vld [vmem:[%s2 + $0x188] sm:$0xf]
      %v1528 = vld [vmem:[%s2 + $0x18c] sm:$0xf]
      %v1529 = vld [vmem:[%s2 + $0x190] sm:$0xf]
      %v1530 = vld [vmem:[%s2 + $0x194] sm:$0xf]
      %v1531 = vld [vmem:[%s2 + $0x198] sm:$0xf]
      %v1532 = vld [vmem:[%s2 + $0x19c] sm:$0xf]
      %v1533 = vld [vmem:[%s2 + $0x1a0] sm:$0xf]
      %v1534 = vld [vmem:[%s2 + $0x1a4] sm:$0xf]
      %v1535 = vld [vmem:[%s2 + $0x1a8] sm:$0xf]
      %v1536 = vld [vmem:[%s2 + $0x1ac] sm:$0xf]
      %v1537 = vld [vmem:[%s2 + $0x1b0] sm:$0xf]
      %v1538 = vld [vmem:[%s2 + $0x1b4] sm:$0xf]
      %v1539 = vld [vmem:[%s2 + $0x1b8] sm:$0xf]
      %v1540 = vld [vmem:[%s2 + $0x1bc] sm:$0xf]
      %v1541 = vld [vmem:[%s2 + $0x1c0] sm:$0xf]
      %v1542 = vld [vmem:[%s2 + $0x1c4] sm:$0xf]
      %v1543 = vld [vmem:[%s2 + $0x1c8] sm:$0xf]
      %v1544 = vld [vmem:[%s2 + $0x1cc] sm:$0xf]
      %v1545 = vld [vmem:[%s2 + $0x1d0] sm:$0xf]
      %v1546 = vld [vmem:[%s2 + $0x1d4] sm:$0xf]
      %v1547 = vld [vmem:[%s2 + $0x1d8] sm:$0xf]
      %v1548 = vld [vmem:[%s2 + $0x1dc] sm:$0xf]
      %v1549 = vld [vmem:[%s2 + $0x1e0] sm:$0xf]
      %v1550 = vld [vmem:[%s2 + $0x1e4] sm:$0xf]
      %v1551 = vld [vmem:[%s2 + $0x1e8] sm:$0xf]
      %v1552 = vld [vmem:[%s2 + $0x1ec] sm:$0xf]
      %v1553 = vld [vmem:[%s2 + $0x1f0] sm:$0xf]
      %v1554 = vld [vmem:[%s2 + $0x1f4] sm:$0xf]
      %v1555 = vld [vmem:[%s2 + $0x1f8] sm:$0xf]
      %v1556 = vld [vmem:[%s2 + $0x1fc] sm:$0xf]
      %v1557 = vld [vmem:[%s3] sm:$0x1]
      %v1559 = vperm.slane %v1557, 0
      %1562 = vst [vmem:[#allocation1] ss:$4 sm:$0xff] %v1427
      %s1564 = scalar_lea.vmem [#allocation1], 32
      %1565 = vst [vmem:[%s1564] ss:$4 sm:$0xff] %v1428
      %v1566 = vld.sshfl [vmem:[#allocation1] sm:$0xff pattern:$0x73625140]
      %v1567 = vld.sshfl [vmem:[#allocation1 + $0x8] sm:$0xff pattern:$0x73625140]
      %v1568 = vld.sshfl [vmem:[#allocation1 + $0x10] sm:$0xff pattern:$0x73625140]
      %v1569 = vld.sshfl [vmem:[#allocation1 + $0x18] sm:$0xff pattern:$0x73625140]
      %v1570 = vld.sshfl [vmem:[#allocation1 + $0x20] sm:$0xff pattern:$0x73625140]
      %v1571 = vld.sshfl [vmem:[#allocation1 + $0x28] sm:$0xff pattern:$0x73625140]
      %v1572 = vld.sshfl [vmem:[#allocation1 + $0x30] sm:$0xff pattern:$0x73625140]
      %v1573 = vld.sshfl [vmem:[#allocation1 + $0x38] sm:$0xff pattern:$0x73625140]
      %v1710 = vunpack.c.l.b16 %v1429
      %v1711 = vunpack.c.l.b16 %v1430
      %v1712 = vunpack.c.l.b16 %v1431
      %v1713 = vunpack.c.l.b16 %v1432
      %v1714 = vunpack.c.l.b16 %v1433
      %v1715 = vunpack.c.l.b16 %v1434
      %v1716 = vunpack.c.l.b16 %v1435
      %v1717 = vunpack.c.l.b16 %v1436
      %v1718 = vunpack.c.l.b16 %v1437
      %v1719 = vunpack.c.l.b16 %v1438
      %v1720 = vunpack.c.l.b16 %v1439
      %v1721 = vunpack.c.l.b16 %v1440
      %v1722 = vunpack.c.l.b16 %v1441
      %v1723 = vunpack.c.l.b16 %v1442
      %v1724 = vunpack.c.l.b16 %v1443
      %v1725 = vunpack.c.l.b16 %v1444
      %v1726 = vunpack.c.l.b16 %v1445
      %v1727 = vunpack.c.l.b16 %v1446
      %v1728 = vunpack.c.l.b16 %v1447
      %v1729 = vunpack.c.l.b16 %v1448
      %v1730 = vunpack.c.l.b16 %v1449
      %v1731 = vunpack.c.l.b16 %v1450
      %v1732 = vunpack.c.l.b16 %v1451
      %v1733 = vunpack.c.l.b16 %v1452
      %v1734 = vunpack.c.l.b16 %v1453
      %v1735 = vunpack.c.l.b16 %v1454
      %v1736 = vunpack.c.l.b16 %v1455
      %v1737 = vunpack.c.l.b16 %v1456
      %v1738 = vunpack.c.l.b16 %v1457
      %v1739 = vunpack.c.l.b16 %v1458
      %v1740 = vunpack.c.l.b16 %v1459
      %v1741 = vunpack.c.l.b16 %v1460
      %v1742 = vunpack.c.l.b16 %v1461
      %v1743 = vunpack.c.l.b16 %v1462
      %v1744 = vunpack.c.l.b16 %v1463
      %v1745 = vunpack.c.l.b16 %v1464
      %v1746 = vunpack.c.l.b16 %v1465
      %v1747 = vunpack.c.l.b16 %v1466
      %v1748 = vunpack.c.l.b16 %v1467
      %v1749 = vunpack.c.l.b16 %v1468
      %v1750 = vunpack.c.l.b16 %v1469
      %v1751 = vunpack.c.l.b16 %v1470
      %v1752 = vunpack.c.l.b16 %v1471
      %v1753 = vunpack.c.l.b16 %v1472
      %v1754 = vunpack.c.l.b16 %v1473
      %v1755 = vunpack.c.l.b16 %v1474
      %v1756 = vunpack.c.l.b16 %v1475
      %v1757 = vunpack.c.l.b16 %v1476
      %v1758 = vunpack.c.l.b16 %v1477
      %v1759 = vunpack.c.l.b16 %v1478
      %v1760 = vunpack.c.l.b16 %v1479
      %v1761 = vunpack.c.l.b16 %v1480
      %v1762 = vunpack.c.l.b16 %v1481
      %v1763 = vunpack.c.l.b16 %v1482
      %v1764 = vunpack.c.l.b16 %v1483
      %v1765 = vunpack.c.l.b16 %v1484
      %v1766 = vunpack.c.l.b16 %v1485
      %v1767 = vunpack.c.l.b16 %v1486
      %v1768 = vunpack.c.l.b16 %v1487
      %v1769 = vunpack.c.l.b16 %v1488
      %v1770 = vunpack.c.l.b16 %v1489
      %v1771 = vunpack.c.l.b16 %v1490
      %v1772 = vunpack.c.l.b16 %v1491
      %v1773 = vunpack.c.l.b16 %v1492
      %v1774 = vunpack.c.l.b16 %v1493
      %v1775 = vunpack.c.l.b16 %v1494
      %v1776 = vunpack.c.l.b16 %v1495
      %v1777 = vunpack.c.l.b16 %v1496
      %v1778 = vunpack.c.l.b16 %v1497
      %v1779 = vunpack.c.l.b16 %v1498
      %v1780 = vunpack.c.l.b16 %v1499
      %v1781 = vunpack.c.l.b16 %v1500
      %v1782 = vunpack.c.l.b16 %v1501
      %v1783 = vunpack.c.l.b16 %v1502
      %v1784 = vunpack.c.l.b16 %v1503
      %v1785 = vunpack.c.l.b16 %v1504
      %v1786 = vunpack.c.l.b16 %v1505
      %v1787 = vunpack.c.l.b16 %v1506
      %v1788 = vunpack.c.l.b16 %v1507
      %v1789 = vunpack.c.l.b16 %v1508
      %v1790 = vunpack.c.l.b16 %v1509
      %v1791 = vunpack.c.l.b16 %v1510
      %v1792 = vunpack.c.l.b16 %v1511
      %v1793 = vunpack.c.l.b16 %v1512
      %v1794 = vunpack.c.l.b16 %v1513
      %v1795 = vunpack.c.l.b16 %v1514
      %v1796 = vunpack.c.l.b16 %v1515
      %v1797 = vunpack.c.l.b16 %v1516
      %v1798 = vunpack.c.l.b16 %v1517
      %v1799 = vunpack.c.l.b16 %v1518
      %v1800 = vunpack.c.l.b16 %v1519
      %v1801 = vunpack.c.l.b16 %v1520
      %v1802 = vunpack.c.l.b16 %v1521
      %v1803 = vunpack.c.l.b16 %v1522
      %v1804 = vunpack.c.l.b16 %v1523
      %v1805 = vunpack.c.l.b16 %v1524
      %v1806 = vunpack.c.l.b16 %v1525
      %v1807 = vunpack.c.l.b16 %v1526
      %v1808 = vunpack.c.l.b16 %v1527
      %v1809 = vunpack.c.l.b16 %v1528
      %v1810 = vunpack.c.l.b16 %v1529
      %v1811 = vunpack.c.l.b16 %v1530
      %v1812 = vunpack.c.l.b16 %v1531
      %v1813 = vunpack.c.l.b16 %v1532
      %v1814 = vunpack.c.l.b16 %v1533
      %v1815 = vunpack.c.l.b16 %v1534
      %v1816 = vunpack.c.l.b16 %v1535
      %v1817 = vunpack.c.l.b16 %v1536
      %v1818 = vunpack.c.l.b16 %v1537
      %v1819 = vunpack.c.l.b16 %v1538
      %v1820 = vunpack.c.l.b16 %v1539
      %v1821 = vunpack.c.l.b16 %v1540
      %v1822 = vunpack.c.l.b16 %v1541
      %v1823 = vunpack.c.l.b16 %v1542
      %v1824 = vunpack.c.l.b16 %v1543
      %v1825 = vunpack.c.l.b16 %v1544
      %v1826 = vunpack.c.l.b16 %v1545
      %v1827 = vunpack.c.l.b16 %v1546
      %v1828 = vunpack.c.l.b16 %v1547
      %v1829 = vunpack.c.l.b16 %v1548
      %v1830 = vunpack.c.l.b16 %v1549
      %v1831 = vunpack.c.l.b16 %v1550
      %v1832 = vunpack.c.l.b16 %v1551
      %v1833 = vunpack.c.l.b16 %v1552
      %v1834 = vunpack.c.l.b16 %v1553
      %v1835 = vunpack.c.l.b16 %v1554
      %v1836 = vunpack.c.l.b16 %v1555
      %v1837 = vunpack.c.l.b16 %v1556
      %v1838 = vpack.c.b16 %v1711, %v1710
      %v1839 = vpack.c.b16 %v1713, %v1712
      %v1840 = vpack.c.b16 %v1715, %v1714
      %v1841 = vpack.c.b16 %v1717, %v1716
      %v1842 = vpack.c.b16 %v1719, %v1718
      %v1843 = vpack.c.b16 %v1721, %v1720
      %v1844 = vpack.c.b16 %v1723, %v1722
      %v1845 = vpack.c.b16 %v1725, %v1724
      %v1846 = vpack.c.b16 %v1727, %v1726
      %v1847 = vpack.c.b16 %v1729, %v1728
      %v1848 = vpack.c.b16 %v1731, %v1730
      %v1849 = vpack.c.b16 %v1733, %v1732
      %v1850 = vpack.c.b16 %v1735, %v1734
      %v1851 = vpack.c.b16 %v1737, %v1736
      %v1852 = vpack.c.b16 %v1739, %v1738
      %v1853 = vpack.c.b16 %v1741, %v1740
      %v1854 = vpack.c.b16 %v1743, %v1742
      %v1855 = vpack.c.b16 %v1745, %v1744
      %v1856 = vpack.c.b16 %v1747, %v1746
      %v1857 = vpack.c.b16 %v1749, %v1748
      %v1858 = vpack.c.b16 %v1751, %v1750
      %v1859 = vpack.c.b16 %v1753, %v1752
      %v1860 = vpack.c.b16 %v1755, %v1754
      %v1861 = vpack.c.b16 %v1757, %v1756
      %v1862 = vpack.c.b16 %v1759, %v1758
      %v1863 = vpack.c.b16 %v1761, %v1760
      %v1864 = vpack.c.b16 %v1763, %v1762
      %v1865 = vpack.c.b16 %v1765, %v1764
      %v1866 = vpack.c.b16 %v1767, %v1766
      %v1867 = vpack.c.b16 %v1769, %v1768
      %v1868 = vpack.c.b16 %v1771, %v1770
      %v1869 = vpack.c.b16 %v1773, %v1772
      %v1870 = vpack.c.b16 %v1775, %v1774
      %v1871 = vpack.c.b16 %v1777, %v1776
      %v1872 = vpack.c.b16 %v1779, %v1778
      %v1873 = vpack.c.b16 %v1781, %v1780
      %v1874 = vpack.c.b16 %v1783, %v1782
      %v1875 = vpack.c.b16 %v1785, %v1784
      %v1876 = vpack.c.b16 %v1787, %v1786
      %v1877 = vpack.c.b16 %v1789, %v1788
      %v1878 = vpack.c.b16 %v1791, %v1790
      %v1879 = vpack.c.b16 %v1793, %v1792
      %v1880 = vpack.c.b16 %v1795, %v1794
      %v1881 = vpack.c.b16 %v1797, %v1796
      %v1882 = vpack.c.b16 %v1799, %v1798
      %v1883 = vpack.c.b16 %v1801, %v1800
      %v1884 = vpack.c.b16 %v1803, %v1802
      %v1885 = vpack.c.b16 %v1805, %v1804
      %v1886 = vpack.c.b16 %v1807, %v1806
      %v1887 = vpack.c.b16 %v1809, %v1808
      %v1888 = vpack.c.b16 %v1811, %v1810
      %v1889 = vpack.c.b16 %v1813, %v1812
      %v1890 = vpack.c.b16 %v1815, %v1814
      %v1891 = vpack.c.b16 %v1817, %v1816
      %v1892 = vpack.c.b16 %v1819, %v1818
      %v1893 = vpack.c.b16 %v1821, %v1820
      %v1894 = vpack.c.b16 %v1823, %v1822
      %v1895 = vpack.c.b16 %v1825, %v1824
      %v1896 = vpack.c.b16 %v1827, %v1826
      %v1897 = vpack.c.b16 %v1829, %v1828
      %v1898 = vpack.c.b16 %v1831, %v1830
      %v1899 = vpack.c.b16 %v1833, %v1832
      %v1900 = vpack.c.b16 %v1835, %v1834
      %v1901 = vpack.c.b16 %v1837, %v1836
      %1966 = vmatpush.bf16.msra.mxu0 %v1845
      %1967 = vmatpush.bf16.msra.mxu0 %v1844
      %1968 = vmatpush.bf16.msra.mxu0 %v1843
      %1969 = vmatpush.bf16.msra.mxu0 %v1842
      %1970 = vmatpush.bf16.msra.mxu0 %v1841
      %1971 = vmatpush.bf16.msra.mxu0 %v1840
      %1972 = vmatpush.bf16.msra.mxu0 %v1839
      %1973 = vmatpush.bf16.msra.mxu0 %v1838
      %1974 = vmatmul.bf16.gmra.mxu0 %v1566
      %v1975 = vpop.f32.mrf.mxu0
      %v1976 = vadd.f32 %v1559, %v1975
      %v1977 = vpop.f32.mrf.mxu0
      %1978 = vdwg.mxu0
      %1979 = vmatpush.bf16.msra.mxu0 %v1853
      %1980 = vmatpush.bf16.msra.mxu0 %v1852
      %1981 = vmatpush.bf16.msra.mxu0 %v1851
      %1982 = vmatpush.bf16.msra.mxu0 %v1850
      %1983 = vmatpush.bf16.msra.mxu0 %v1849
      %1984 = vmatpush.bf16.msra.mxu0 %v1848
      %1985 = vmatpush.bf16.msra.mxu0 %v1847
      %1986 = vmatpush.bf16.msra.mxu0 %v1846
      %1987 = vmatmul.bf16.gmra.mxu0 %v1567
      %v1988 = vpop.f32.mrf.mxu0
      %v1989 = vadd.f32 %v1976, %v1988
      %v1990 = vpop.f32.mrf.mxu0
      %1991 = vdwg.mxu0
      %1992 = vmatpush.bf16.msra.mxu0 %v1861
      %1993 = vmatpush.bf16.msra.mxu0 %v1860
      %1994 = vmatpush.bf16.msra.mxu0 %v1859
      %1995 = vmatpush.bf16.msra.mxu0 %v1858
      %1996 = vmatpush.bf16.msra.mxu0 %v1857
      %1997 = vmatpush.bf16.msra.mxu0 %v1856
      %1998 = vmatpush.bf16.msra.mxu0 %v1855
      %1999 = vmatpush.bf16.msra.mxu0 %v1854
      %2000 = vmatmul.bf16.gmra.mxu0 %v1568
      %v2001 = vpop.f32.mrf.mxu0
      %v2002 = vadd.f32 %v1989, %v2001
      %v2003 = vpop.f32.mrf.mxu0
      %2004 = vdwg.mxu0
      %2005 = vmatpush.bf16.msra.mxu0 %v1869
      %2006 = vmatpush.bf16.msra.mxu0 %v1868
      %2007 = vmatpush.bf16.msra.mxu0 %v1867
      %2008 = vmatpush.bf16.msra.mxu0 %v1866
      %2009 = vmatpush.bf16.msra.mxu0 %v1865
      %2010 = vmatpush.bf16.msra.mxu0 %v1864
      %2011 = vmatpush.bf16.msra.mxu0 %v1863
      %2012 = vmatpush.bf16.msra.mxu0 %v1862
      %2013 = vmatmul.bf16.gmra.mxu0 %v1569
      %v2014 = vpop.f32.mrf.mxu0
      %v2015 = vadd.f32 %v2002, %v2014
      %v2016 = vpop.f32.mrf.mxu0
      %2017 = vdwg.mxu0
      %2018 = vmatpush.bf16.msra.mxu0 %v1877
      %2019 = vmatpush.bf16.msra.mxu0 %v1876
      %2020 = vmatpush.bf16.msra.mxu0 %v1875
      %2021 = vmatpush.bf16.msra.mxu0 %v1874
      %2022 = vmatpush.bf16.msra.mxu0 %v1873
      %2023 = vmatpush.bf16.msra.mxu0 %v1872
      %2024 = vmatpush.bf16.msra.mxu0 %v1871
      %2025 = vmatpush.bf16.msra.mxu0 %v1870
      %2026 = vmatmul.bf16.gmra.mxu0 %v1570
      %v2027 = vpop.f32.mrf.mxu0
      %v2028 = vadd.f32 %v2015, %v2027
      %v2029 = vpop.f32.mrf.mxu0
      %2030 = vdwg.mxu0
      %2031 = vmatpush.bf16.msra.mxu0 %v1885
      %2032 = vmatpush.bf16.msra.mxu0 %v1884
      %2033 = vmatpush.bf16.msra.mxu0 %v1883
      %2034 = vmatpush.bf16.msra.mxu0 %v1882
      %2035 = vmatpush.bf16.msra.mxu0 %v1881
      %2036 = vmatpush.bf16.msra.mxu0 %v1880
      %2037 = vmatpush.bf16.msra.mxu0 %v1879
      %2038 = vmatpush.bf16.msra.mxu0 %v1878
      %2039 = vmatmul.bf16.gmra.mxu0 %v1571
      %v2040 = vpop.f32.mrf.mxu0
      %v2041 = vadd.f32 %v2028, %v2040
      %v2042 = vpop.f32.mrf.mxu0
      %2043 = vdwg.mxu0
      %2044 = vmatpush.bf16.msra.mxu0 %v1893
      %2045 = vmatpush.bf16.msra.mxu0 %v1892
      %2046 = vmatpush.bf16.msra.mxu0 %v1891
      %2047 = vmatpush.bf16.msra.mxu0 %v1890
      %2048 = vmatpush.bf16.msra.mxu0 %v1889
      %2049 = vmatpush.bf16.msra.mxu0 %v1888
      %2050 = vmatpush.bf16.msra.mxu0 %v1887
      %2051 = vmatpush.bf16.msra.mxu0 %v1886
      %2052 = vmatmul.bf16.gmra.mxu0 %v1572
      %v2053 = vpop.f32.mrf.mxu0
      %v2054 = vadd.f32 %v2041, %v2053
      %v2055 = vpop.f32.mrf.mxu0
      %2056 = vdwg.mxu0
      %2057 = vmatpush.bf16.msra.mxu0 %v1901
      %2058 = vmatpush.bf16.msra.mxu0 %v1900
      %2059 = vmatpush.bf16.msra.mxu0 %v1899
      %2060 = vmatpush.bf16.msra.mxu0 %v1898
      %2061 = vmatpush.bf16.msra.mxu0 %v1897
      %2062 = vmatpush.bf16.msra.mxu0 %v1896
      %2063 = vmatpush.bf16.msra.mxu0 %v1895
      %2064 = vmatpush.bf16.msra.mxu0 %v1894
      %2065 = vmatmul.bf16.gmra.mxu0 %v1573
      %v2066 = vpop.f32.mrf.mxu0
      %v2067 = vadd.f32 %v2054, %v2066
      %v2068 = vpop.f32.mrf.mxu0
      %2069 = vdwg.mxu0
      %vm2070 = vcmp.ge.f32.partialorder %v2067, 0.0
      %v2071 = vmul.f32 %v2067, 0.2
      %v2072 = vsel %vm2070, %v2067, %v2071
      %v2073 = vpack.c.bf16 %v2072, %v2072
      %s2074 = scalar_lea.vmem %s319, 2
      %2075 = vst.msk [vmem:[%s2074] sm:$0x3] %vm1424, %v2073
      %s2076 = scalar_lea.vmem [#allocation3], 32
      %v2077 = vld [vmem:[%s2076] sm:$0xff]
      %v2078 = vld [vmem:[%s2076 + $0x8] sm:$0xff]
      %v2079 = vld [vmem:[%s2] sm:$0xf]
      %v2080 = vld [vmem:[%s2 + $0x4] sm:$0xf]
      %v2081 = vld [vmem:[%s2 + $0x8] sm:$0xf]
      %v2082 = vld [vmem:[%s2 + $0xc] sm:$0xf]
      %v2083 = vld [vmem:[%s2 + $0x10] sm:$0xf]
      %v2084 = vld [vmem:[%s2 + $0x14] sm:$0xf]
      %v2085 = vld [vmem:[%s2 + $0x18] sm:$0xf]
      %v2086 = vld [vmem:[%s2 + $0x1c] sm:$0xf]
      %v2087 = vld [vmem:[%s2 + $0x20] sm:$0xf]
      %v2088 = vld [vmem:[%s2 + $0x24] sm:$0xf]
      %v2089 = vld [vmem:[%s2 + $0x28] sm:$0xf]
      %v2090 = vld [vmem:[%s2 + $0x2c] sm:$0xf]
      %v2091 = vld [vmem:[%s2 + $0x30] sm:$0xf]
      %v2092 = vld [vmem:[%s2 + $0x34] sm:$0xf]
      %v2093 = vld [vmem:[%s2 + $0x38] sm:$0xf]
      %v2094 = vld [vmem:[%s2 + $0x3c] sm:$0xf]
      %v2095 = vld [vmem:[%s2 + $0x40] sm:$0xf]
      %v2096 = vld [vmem:[%s2 + $0x44] sm:$0xf]
      %v2097 = vld [vmem:[%s2 + $0x48] sm:$0xf]
      %v2098 = vld [vmem:[%s2 + $0x4c] sm:$0xf]
      %v2099 = vld [vmem:[%s2 + $0x50] sm:$0xf]
      %v2100 = vld [vmem:[%s2 + $0x54] sm:$0xf]
      %v2101 = vld [vmem:[%s2 + $0x58] sm:$0xf]
      %v2102 = vld [vmem:[%s2 + $0x5c] sm:$0xf]
      %v2103 = vld [vmem:[%s2 + $0x60] sm:$0xf]
      %v2104 = vld [vmem:[%s2 + $0x64] sm:$0xf]
      %v2105 = vld [vmem:[%s2 + $0x68] sm:$0xf]
      %v2106 = vld [vmem:[%s2 + $0x6c] sm:$0xf]
      %v2107 = vld [vmem:[%s2 + $0x70] sm:$0xf]
      %v2108 = vld [vmem:[%s2 + $0x74] sm:$0xf]
      %v2109 = vld [vmem:[%s2 + $0x78] sm:$0xf]
      %v2110 = vld [vmem:[%s2 + $0x7c] sm:$0xf]
      %v2111 = vld [vmem:[%s2 + $0x80] sm:$0xf]
      %v2112 = vld [vmem:[%s2 + $0x84] sm:$0xf]
      %v2113 = vld [vmem:[%s2 + $0x88] sm:$0xf]
      %v2114 = vld [vmem:[%s2 + $0x8c] sm:$0xf]
      %v2115 = vld [vmem:[%s2 + $0x90] sm:$0xf]
      %v2116 = vld [vmem:[%s2 + $0x94] sm:$0xf]
      %v2117 = vld [vmem:[%s2 + $0x98] sm:$0xf]
      %v2118 = vld [vmem:[%s2 + $0x9c] sm:$0xf]
      %v2119 = vld [vmem:[%s2 + $0xa0] sm:$0xf]
      %v2120 = vld [vmem:[%s2 + $0xa4] sm:$0xf]
      %v2121 = vld [vmem:[%s2 + $0xa8] sm:$0xf]
      %v2122 = vld [vmem:[%s2 + $0xac] sm:$0xf]
      %v2123 = vld [vmem:[%s2 + $0xb0] sm:$0xf]
      %v2124 = vld [vmem:[%s2 + $0xb4] sm:$0xf]
      %v2125 = vld [vmem:[%s2 + $0xb8] sm:$0xf]
      %v2126 = vld [vmem:[%s2 + $0xbc] sm:$0xf]
      %v2127 = vld [vmem:[%s2 + $0xc0] sm:$0xf]
      %v2128 = vld [vmem:[%s2 + $0xc4] sm:$0xf]
      %v2129 = vld [vmem:[%s2 + $0xc8] sm:$0xf]
      %v2130 = vld [vmem:[%s2 + $0xcc] sm:$0xf]
      %v2131 = vld [vmem:[%s2 + $0xd0] sm:$0xf]
      %v2132 = vld [vmem:[%s2 + $0xd4] sm:$0xf]
      %v2133 = vld [vmem:[%s2 + $0xd8] sm:$0xf]
      %v2134 = vld [vmem:[%s2 + $0xdc] sm:$0xf]
      %v2135 = vld [vmem:[%s2 + $0xe0] sm:$0xf]
      %v2136 = vld [vmem:[%s2 + $0xe4] sm:$0xf]
      %v2137 = vld [vmem:[%s2 + $0xe8] sm:$0xf]
      %v2138 = vld [vmem:[%s2 + $0xec] sm:$0xf]
      %v2139 = vld [vmem:[%s2 + $0xf0] sm:$0xf]
      %v2140 = vld [vmem:[%s2 + $0xf4] sm:$0xf]
      %v2141 = vld [vmem:[%s2 + $0xf8] sm:$0xf]
      %v2142 = vld [vmem:[%s2 + $0xfc] sm:$0xf]
      %v2143 = vld [vmem:[%s2 + $0x100] sm:$0xf]
      %v2144 = vld [vmem:[%s2 + $0x104] sm:$0xf]
      %v2145 = vld [vmem:[%s2 + $0x108] sm:$0xf]
      %v2146 = vld [vmem:[%s2 + $0x10c] sm:$0xf]
      %v2147 = vld [vmem:[%s2 + $0x110] sm:$0xf]
      %v2148 = vld [vmem:[%s2 + $0x114] sm:$0xf]
      %v2149 = vld [vmem:[%s2 + $0x118] sm:$0xf]
      %v2150 = vld [vmem:[%s2 + $0x11c] sm:$0xf]
      %v2151 = vld [vmem:[%s2 + $0x120] sm:$0xf]
      %v2152 = vld [vmem:[%s2 + $0x124] sm:$0xf]
      %v2153 = vld [vmem:[%s2 + $0x128] sm:$0xf]
      %v2154 = vld [vmem:[%s2 + $0x12c] sm:$0xf]
      %v2155 = vld [vmem:[%s2 + $0x130] sm:$0xf]
      %v2156 = vld [vmem:[%s2 + $0x134] sm:$0xf]
      %v2157 = vld [vmem:[%s2 + $0x138] sm:$0xf]
      %v2158 = vld [vmem:[%s2 + $0x13c] sm:$0xf]
      %v2159 = vld [vmem:[%s2 + $0x140] sm:$0xf]
      %v2160 = vld [vmem:[%s2 + $0x144] sm:$0xf]
      %v2161 = vld [vmem:[%s2 + $0x148] sm:$0xf]
      %v2162 = vld [vmem:[%s2 + $0x14c] sm:$0xf]
      %v2163 = vld [vmem:[%s2 + $0x150] sm:$0xf]
      %v2164 = vld [vmem:[%s2 + $0x154] sm:$0xf]
      %v2165 = vld [vmem:[%s2 + $0x158] sm:$0xf]
      %v2166 = vld [vmem:[%s2 + $0x15c] sm:$0xf]
      %v2167 = vld [vmem:[%s2 + $0x160] sm:$0xf]
      %v2168 = vld [vmem:[%s2 + $0x164] sm:$0xf]
      %v2169 = vld [vmem:[%s2 + $0x168] sm:$0xf]
      %v2170 = vld [vmem:[%s2 + $0x16c] sm:$0xf]
      %v2171 = vld [vmem:[%s2 + $0x170] sm:$0xf]
      %v2172 = vld [vmem:[%s2 + $0x174] sm:$0xf]
      %v2173 = vld [vmem:[%s2 + $0x178] sm:$0xf]
      %v2174 = vld [vmem:[%s2 + $0x17c] sm:$0xf]
      %v2175 = vld [vmem:[%s2 + $0x180] sm:$0xf]
      %v2176 = vld [vmem:[%s2 + $0x184] sm:$0xf]
      %v2177 = vld [vmem:[%s2 + $0x188] sm:$0xf]
      %v2178 = vld [vmem:[%s2 + $0x18c] sm:$0xf]
      %v2179 = vld [vmem:[%s2 + $0x190] sm:$0xf]
      %v2180 = vld [vmem:[%s2 + $0x194] sm:$0xf]
      %v2181 = vld [vmem:[%s2 + $0x198] sm:$0xf]
      %v2182 = vld [vmem:[%s2 + $0x19c] sm:$0xf]
      %v2183 = vld [vmem:[%s2 + $0x1a0] sm:$0xf]
      %v2184 = vld [vmem:[%s2 + $0x1a4] sm:$0xf]
      %v2185 = vld [vmem:[%s2 + $0x1a8] sm:$0xf]
      %v2186 = vld [vmem:[%s2 + $0x1ac] sm:$0xf]
      %v2187 = vld [vmem:[%s2 + $0x1b0] sm:$0xf]
      %v2188 = vld [vmem:[%s2 + $0x1b4] sm:$0xf]
      %v2189 = vld [vmem:[%s2 + $0x1b8] sm:$0xf]
      %v2190 = vld [vmem:[%s2 + $0x1bc] sm:$0xf]
      %v2191 = vld [vmem:[%s2 + $0x1c0] sm:$0xf]
      %v2192 = vld [vmem:[%s2 + $0x1c4] sm:$0xf]
      %v2193 = vld [vmem:[%s2 + $0x1c8] sm:$0xf]
      %v2194 = vld [vmem:[%s2 + $0x1cc] sm:$0xf]
      %v2195 = vld [vmem:[%s2 + $0x1d0] sm:$0xf]
      %v2196 = vld [vmem:[%s2 + $0x1d4] sm:$0xf]
      %v2197 = vld [vmem:[%s2 + $0x1d8] sm:$0xf]
      %v2198 = vld [vmem:[%s2 + $0x1dc] sm:$0xf]
      %v2199 = vld [vmem:[%s2 + $0x1e0] sm:$0xf]
      %v2200 = vld [vmem:[%s2 + $0x1e4] sm:$0xf]
      %v2201 = vld [vmem:[%s2 + $0x1e8] sm:$0xf]
      %v2202 = vld [vmem:[%s2 + $0x1ec] sm:$0xf]
      %v2203 = vld [vmem:[%s2 + $0x1f0] sm:$0xf]
      %v2204 = vld [vmem:[%s2 + $0x1f4] sm:$0xf]
      %v2205 = vld [vmem:[%s2 + $0x1f8] sm:$0xf]
      %v2206 = vld [vmem:[%s2 + $0x1fc] sm:$0xf]
      %v2207 = vld [vmem:[%s3] sm:$0x1]
      %v2209 = vperm.slane %v2207, 0
      %2212 = vst [vmem:[#allocation1] ss:$4 sm:$0xff] %v2077
      %s2214 = scalar_lea.vmem [#allocation1], 32
      %2215 = vst [vmem:[%s2214] ss:$4 sm:$0xff] %v2078
      %v2216 = vld.sshfl [vmem:[#allocation1] sm:$0xff pattern:$0x73625140]
      %v2217 = vld.sshfl [vmem:[#allocation1 + $0x8] sm:$0xff pattern:$0x73625140]
      %v2218 = vld.sshfl [vmem:[#allocation1 + $0x10] sm:$0xff pattern:$0x73625140]
      %v2219 = vld.sshfl [vmem:[#allocation1 + $0x18] sm:$0xff pattern:$0x73625140]
      %v2220 = vld.sshfl [vmem:[#allocation1 + $0x20] sm:$0xff pattern:$0x73625140]
      %v2221 = vld.sshfl [vmem:[#allocation1 + $0x28] sm:$0xff pattern:$0x73625140]
      %v2222 = vld.sshfl [vmem:[#allocation1 + $0x30] sm:$0xff pattern:$0x73625140]
      %v2223 = vld.sshfl [vmem:[#allocation1 + $0x38] sm:$0xff pattern:$0x73625140]
      %v2360 = vunpack.c.l.b16 %v2079
      %v2361 = vunpack.c.l.b16 %v2080
      %v2362 = vunpack.c.l.b16 %v2081
      %v2363 = vunpack.c.l.b16 %v2082
      %v2364 = vunpack.c.l.b16 %v2083
      %v2365 = vunpack.c.l.b16 %v2084
      %v2366 = vunpack.c.l.b16 %v2085
      %v2367 = vunpack.c.l.b16 %v2086
      %v2368 = vunpack.c.l.b16 %v2087
      %v2369 = vunpack.c.l.b16 %v2088
      %v2370 = vunpack.c.l.b16 %v2089
      %v2371 = vunpack.c.l.b16 %v2090
      %v2372 = vunpack.c.l.b16 %v2091
      %v2373 = vunpack.c.l.b16 %v2092
      %v2374 = vunpack.c.l.b16 %v2093
      %v2375 = vunpack.c.l.b16 %v2094
      %v2376 = vunpack.c.l.b16 %v2095
      %v2377 = vunpack.c.l.b16 %v2096
      %v2378 = vunpack.c.l.b16 %v2097
      %v2379 = vunpack.c.l.b16 %v2098
      %v2380 = vunpack.c.l.b16 %v2099
      %v2381 = vunpack.c.l.b16 %v2100
      %v2382 = vunpack.c.l.b16 %v2101
      %v2383 = vunpack.c.l.b16 %v2102
      %v2384 = vunpack.c.l.b16 %v2103
      %v2385 = vunpack.c.l.b16 %v2104
      %v2386 = vunpack.c.l.b16 %v2105
      %v2387 = vunpack.c.l.b16 %v2106
      %v2388 = vunpack.c.l.b16 %v2107
      %v2389 = vunpack.c.l.b16 %v2108
      %v2390 = vunpack.c.l.b16 %v2109
      %v2391 = vunpack.c.l.b16 %v2110
      %v2392 = vunpack.c.l.b16 %v2111
      %v2393 = vunpack.c.l.b16 %v2112
      %v2394 = vunpack.c.l.b16 %v2113
      %v2395 = vunpack.c.l.b16 %v2114
      %v2396 = vunpack.c.l.b16 %v2115
      %v2397 = vunpack.c.l.b16 %v2116
      %v2398 = vunpack.c.l.b16 %v2117
      %v2399 = vunpack.c.l.b16 %v2118
      %v2400 = vunpack.c.l.b16 %v2119
      %v2401 = vunpack.c.l.b16 %v2120
      %v2402 = vunpack.c.l.b16 %v2121
      %v2403 = vunpack.c.l.b16 %v2122
      %v2404 = vunpack.c.l.b16 %v2123
      %v2405 = vunpack.c.l.b16 %v2124
      %v2406 = vunpack.c.l.b16 %v2125
      %v2407 = vunpack.c.l.b16 %v2126
      %v2408 = vunpack.c.l.b16 %v2127
      %v2409 = vunpack.c.l.b16 %v2128
      %v2410 = vunpack.c.l.b16 %v2129
      %v2411 = vunpack.c.l.b16 %v2130
      %v2412 = vunpack.c.l.b16 %v2131
      %v2413 = vunpack.c.l.b16 %v2132
      %v2414 = vunpack.c.l.b16 %v2133
      %v2415 = vunpack.c.l.b16 %v2134
      %v2416 = vunpack.c.l.b16 %v2135
      %v2417 = vunpack.c.l.b16 %v2136
      %v2418 = vunpack.c.l.b16 %v2137
      %v2419 = vunpack.c.l.b16 %v2138
      %v2420 = vunpack.c.l.b16 %v2139
      %v2421 = vunpack.c.l.b16 %v2140
      %v2422 = vunpack.c.l.b16 %v2141
      %v2423 = vunpack.c.l.b16 %v2142
      %v2424 = vunpack.c.l.b16 %v2143
      %v2425 = vunpack.c.l.b16 %v2144
      %v2426 = vunpack.c.l.b16 %v2145
      %v2427 = vunpack.c.l.b16 %v2146
      %v2428 = vunpack.c.l.b16 %v2147
      %v2429 = vunpack.c.l.b16 %v2148
      %v2430 = vunpack.c.l.b16 %v2149
      %v2431 = vunpack.c.l.b16 %v2150
      %v2432 = vunpack.c.l.b16 %v2151
      %v2433 = vunpack.c.l.b16 %v2152
      %v2434 = vunpack.c.l.b16 %v2153
      %v2435 = vunpack.c.l.b16 %v2154
      %v2436 = vunpack.c.l.b16 %v2155
      %v2437 = vunpack.c.l.b16 %v2156
      %v2438 = vunpack.c.l.b16 %v2157
      %v2439 = vunpack.c.l.b16 %v2158
      %v2440 = vunpack.c.l.b16 %v2159
      %v2441 = vunpack.c.l.b16 %v2160
      %v2442 = vunpack.c.l.b16 %v2161
      %v2443 = vunpack.c.l.b16 %v2162
      %v2444 = vunpack.c.l.b16 %v2163
      %v2445 = vunpack.c.l.b16 %v2164
      %v2446 = vunpack.c.l.b16 %v2165
      %v2447 = vunpack.c.l.b16 %v2166
      %v2448 = vunpack.c.l.b16 %v2167
      %v2449 = vunpack.c.l.b16 %v2168
      %v2450 = vunpack.c.l.b16 %v2169
      %v2451 = vunpack.c.l.b16 %v2170
      %v2452 = vunpack.c.l.b16 %v2171
      %v2453 = vunpack.c.l.b16 %v2172
      %v2454 = vunpack.c.l.b16 %v2173
      %v2455 = vunpack.c.l.b16 %v2174
      %v2456 = vunpack.c.l.b16 %v2175
      %v2457 = vunpack.c.l.b16 %v2176
      %v2458 = vunpack.c.l.b16 %v2177
      %v2459 = vunpack.c.l.b16 %v2178
      %v2460 = vunpack.c.l.b16 %v2179
      %v2461 = vunpack.c.l.b16 %v2180
      %v2462 = vunpack.c.l.b16 %v2181
      %v2463 = vunpack.c.l.b16 %v2182
      %v2464 = vunpack.c.l.b16 %v2183
      %v2465 = vunpack.c.l.b16 %v2184
      %v2466 = vunpack.c.l.b16 %v2185
      %v2467 = vunpack.c.l.b16 %v2186
      %v2468 = vunpack.c.l.b16 %v2187
      %v2469 = vunpack.c.l.b16 %v2188
      %v2470 = vunpack.c.l.b16 %v2189
      %v2471 = vunpack.c.l.b16 %v2190
      %v2472 = vunpack.c.l.b16 %v2191
      %v2473 = vunpack.c.l.b16 %v2192
      %v2474 = vunpack.c.l.b16 %v2193
      %v2475 = vunpack.c.l.b16 %v2194
      %v2476 = vunpack.c.l.b16 %v2195
      %v2477 = vunpack.c.l.b16 %v2196
      %v2478 = vunpack.c.l.b16 %v2197
      %v2479 = vunpack.c.l.b16 %v2198
      %v2480 = vunpack.c.l.b16 %v2199
      %v2481 = vunpack.c.l.b16 %v2200
      %v2482 = vunpack.c.l.b16 %v2201
      %v2483 = vunpack.c.l.b16 %v2202
      %v2484 = vunpack.c.l.b16 %v2203
      %v2485 = vunpack.c.l.b16 %v2204
      %v2486 = vunpack.c.l.b16 %v2205
      %v2487 = vunpack.c.l.b16 %v2206
      %v2488 = vpack.c.b16 %v2361, %v2360
      %v2489 = vpack.c.b16 %v2363, %v2362
      %v2490 = vpack.c.b16 %v2365, %v2364
      %v2491 = vpack.c.b16 %v2367, %v2366
      %v2492 = vpack.c.b16 %v2369, %v2368
      %v2493 = vpack.c.b16 %v2371, %v2370
      %v2494 = vpack.c.b16 %v2373, %v2372
      %v2495 = vpack.c.b16 %v2375, %v2374
      %v2496 = vpack.c.b16 %v2377, %v2376
      %v2497 = vpack.c.b16 %v2379, %v2378
      %v2498 = vpack.c.b16 %v2381, %v2380
      %v2499 = vpack.c.b16 %v2383, %v2382
      %v2500 = vpack.c.b16 %v2385, %v2384
      %v2501 = vpack.c.b16 %v2387, %v2386
      %v2502 = vpack.c.b16 %v2389, %v2388
      %v2503 = vpack.c.b16 %v2391, %v2390
      %v2504 = vpack.c.b16 %v2393, %v2392
      %v2505 = vpack.c.b16 %v2395, %v2394
      %v2506 = vpack.c.b16 %v2397, %v2396
      %v2507 = vpack.c.b16 %v2399, %v2398
      %v2508 = vpack.c.b16 %v2401, %v2400
      %v2509 = vpack.c.b16 %v2403, %v2402
      %v2510 = vpack.c.b16 %v2405, %v2404
      %v2511 = vpack.c.b16 %v2407, %v2406
      %v2512 = vpack.c.b16 %v2409, %v2408
      %v2513 = vpack.c.b16 %v2411, %v2410
      %v2514 = vpack.c.b16 %v2413, %v2412
      %v2515 = vpack.c.b16 %v2415, %v2414
      %v2516 = vpack.c.b16 %v2417, %v2416
      %v2517 = vpack.c.b16 %v2419, %v2418
      %v2518 = vpack.c.b16 %v2421, %v2420
      %v2519 = vpack.c.b16 %v2423, %v2422
      %v2520 = vpack.c.b16 %v2425, %v2424
      %v2521 = vpack.c.b16 %v2427, %v2426
      %v2522 = vpack.c.b16 %v2429, %v2428
      %v2523 = vpack.c.b16 %v2431, %v2430
      %v2524 = vpack.c.b16 %v2433, %v2432
      %v2525 = vpack.c.b16 %v2435, %v2434
      %v2526 = vpack.c.b16 %v2437, %v2436
      %v2527 = vpack.c.b16 %v2439, %v2438
      %v2528 = vpack.c.b16 %v2441, %v2440
      %v2529 = vpack.c.b16 %v2443, %v2442
      %v2530 = vpack.c.b16 %v2445, %v2444
      %v2531 = vpack.c.b16 %v2447, %v2446
      %v2532 = vpack.c.b16 %v2449, %v2448
      %v2533 = vpack.c.b16 %v2451, %v2450
      %v2534 = vpack.c.b16 %v2453, %v2452
      %v2535 = vpack.c.b16 %v2455, %v2454
      %v2536 = vpack.c.b16 %v2457, %v2456
      %v2537 = vpack.c.b16 %v2459, %v2458
      %v2538 = vpack.c.b16 %v2461, %v2460
      %v2539 = vpack.c.b16 %v2463, %v2462
      %v2540 = vpack.c.b16 %v2465, %v2464
      %v2541 = vpack.c.b16 %v2467, %v2466
      %v2542 = vpack.c.b16 %v2469, %v2468
      %v2543 = vpack.c.b16 %v2471, %v2470
      %v2544 = vpack.c.b16 %v2473, %v2472
      %v2545 = vpack.c.b16 %v2475, %v2474
      %v2546 = vpack.c.b16 %v2477, %v2476
      %v2547 = vpack.c.b16 %v2479, %v2478
      %v2548 = vpack.c.b16 %v2481, %v2480
      %v2549 = vpack.c.b16 %v2483, %v2482
      %v2550 = vpack.c.b16 %v2485, %v2484
      %v2551 = vpack.c.b16 %v2487, %v2486
      %2616 = vmatpush.bf16.msra.mxu0 %v2495
      %2617 = vmatpush.bf16.msra.mxu0 %v2494
      %2618 = vmatpush.bf16.msra.mxu0 %v2493
      %2619 = vmatpush.bf16.msra.mxu0 %v2492
      %2620 = vmatpush.bf16.msra.mxu0 %v2491
      %2621 = vmatpush.bf16.msra.mxu0 %v2490
      %2622 = vmatpush.bf16.msra.mxu0 %v2489
      %2623 = vmatpush.bf16.msra.mxu0 %v2488
      %2624 = vmatmul.bf16.gmra.mxu0 %v2216
      %v2625 = vpop.f32.mrf.mxu0
      %v2626 = vadd.f32 %v2209, %v2625
      %v2627 = vpop.f32.mrf.mxu0
      %2628 = vdwg.mxu0
      %2629 = vmatpush.bf16.msra.mxu0 %v2503
      %2630 = vmatpush.bf16.msra.mxu0 %v2502
      %2631 = vmatpush.bf16.msra.mxu0 %v2501
      %2632 = vmatpush.bf16.msra.mxu0 %v2500
      %2633 = vmatpush.bf16.msra.mxu0 %v2499
      %2634 = vmatpush.bf16.msra.mxu0 %v2498
      %2635 = vmatpush.bf16.msra.mxu0 %v2497
      %2636 = vmatpush.bf16.msra.mxu0 %v2496
      %2637 = vmatmul.bf16.gmra.mxu0 %v2217
      %v2638 = vpop.f32.mrf.mxu0
      %v2639 = vadd.f32 %v2626, %v2638
      %v2640 = vpop.f32.mrf.mxu0
      %2641 = vdwg.mxu0
      %2642 = vmatpush.bf16.msra.mxu0 %v2511
      %2643 = vmatpush.bf16.msra.mxu0 %v2510
      %2644 = vmatpush.bf16.msra.mxu0 %v2509
      %2645 = vmatpush.bf16.msra.mxu0 %v2508
      %2646 = vmatpush.bf16.msra.mxu0 %v2507
      %2647 = vmatpush.bf16.msra.mxu0 %v2506
      %2648 = vmatpush.bf16.msra.mxu0 %v2505
      %2649 = vmatpush.bf16.msra.mxu0 %v2504
      %2650 = vmatmul.bf16.gmra.mxu0 %v2218
      %v2651 = vpop.f32.mrf.mxu0
      %v2652 = vadd.f32 %v2639, %v2651
      %v2653 = vpop.f32.mrf.mxu0
      %2654 = vdwg.mxu0
      %2655 = vmatpush.bf16.msra.mxu0 %v2519
      %2656 = vmatpush.bf16.msra.mxu0 %v2518
      %2657 = vmatpush.bf16.msra.mxu0 %v2517
      %2658 = vmatpush.bf16.msra.mxu0 %v2516
      %2659 = vmatpush.bf16.msra.mxu0 %v2515
      %2660 = vmatpush.bf16.msra.mxu0 %v2514
      %2661 = vmatpush.bf16.msra.mxu0 %v2513
      %2662 = vmatpush.bf16.msra.mxu0 %v2512
      %2663 = vmatmul.bf16.gmra.mxu0 %v2219
      %v2664 = vpop.f32.mrf.mxu0
      %v2665 = vadd.f32 %v2652, %v2664
      %v2666 = vpop.f32.mrf.mxu0
      %2667 = vdwg.mxu0
      %2668 = vmatpush.bf16.msra.mxu0 %v2527
      %2669 = vmatpush.bf16.msra.mxu0 %v2526
      %2670 = vmatpush.bf16.msra.mxu0 %v2525
      %2671 = vmatpush.bf16.msra.mxu0 %v2524
      %2672 = vmatpush.bf16.msra.mxu0 %v2523
      %2673 = vmatpush.bf16.msra.mxu0 %v2522
      %2674 = vmatpush.bf16.msra.mxu0 %v2521
      %2675 = vmatpush.bf16.msra.mxu0 %v2520
      %2676 = vmatmul.bf16.gmra.mxu0 %v2220
      %v2677 = vpop.f32.mrf.mxu0
      %v2678 = vadd.f32 %v2665, %v2677
      %v2679 = vpop.f32.mrf.mxu0
      %2680 = vdwg.mxu0
      %2681 = vmatpush.bf16.msra.mxu0 %v2535
      %2682 = vmatpush.bf16.msra.mxu0 %v2534
      %2683 = vmatpush.bf16.msra.mxu0 %v2533
      %2684 = vmatpush.bf16.msra.mxu0 %v2532
      %2685 = vmatpush.bf16.msra.mxu0 %v2531
      %2686 = vmatpush.bf16.msra.mxu0 %v2530
      %2687 = vmatpush.bf16.msra.mxu0 %v2529
      %2688 = vmatpush.bf16.msra.mxu0 %v2528
      %2689 = vmatmul.bf16.gmra.mxu0 %v2221
      %v2690 = vpop.f32.mrf.mxu0
      %v2691 = vadd.f32 %v2678, %v2690
      %v2692 = vpop.f32.mrf.mxu0
      %2693 = vdwg.mxu0
      %2694 = vmatpush.bf16.msra.mxu0 %v2543
      %2695 = vmatpush.bf16.msra.mxu0 %v2542
      %2696 = vmatpush.bf16.msra.mxu0 %v2541
      %2697 = vmatpush.bf16.msra.mxu0 %v2540
      %2698 = vmatpush.bf16.msra.mxu0 %v2539
      %2699 = vmatpush.bf16.msra.mxu0 %v2538
      %2700 = vmatpush.bf16.msra.mxu0 %v2537
      %2701 = vmatpush.bf16.msra.mxu0 %v2536
      %2702 = vmatmul.bf16.gmra.mxu0 %v2222
      %v2703 = vpop.f32.mrf.mxu0
      %v2704 = vadd.f32 %v2691, %v2703
      %v2705 = vpop.f32.mrf.mxu0
      %2706 = vdwg.mxu0
      %2707 = vmatpush.bf16.msra.mxu0 %v2551
      %2708 = vmatpush.bf16.msra.mxu0 %v2550
      %2709 = vmatpush.bf16.msra.mxu0 %v2549
      %2710 = vmatpush.bf16.msra.mxu0 %v2548
      %2711 = vmatpush.bf16.msra.mxu0 %v2547
      %2712 = vmatpush.bf16.msra.mxu0 %v2546
      %2713 = vmatpush.bf16.msra.mxu0 %v2545
      %2714 = vmatpush.bf16.msra.mxu0 %v2544
      %2715 = vmatmul.bf16.gmra.mxu0 %v2223
      %v2716 = vpop.f32.mrf.mxu0
      %v2717 = vadd.f32 %v2704, %v2716
      %v2718 = vpop.f32.mrf.mxu0
      %2719 = vdwg.mxu0
      %vm2720 = vcmp.ge.f32.partialorder %v2717, 0.0
      %v2721 = vmul.f32 %v2717, 0.2
      %v2722 = vsel %vm2720, %v2717, %v2721
      %v2723 = vpack.c.bf16 %v2722, %v2722
      %s2724 = scalar_lea.vmem %s319, 4
      %2725 = vst.msk [vmem:[%s2724] sm:$0x3] %vm1424, %v2723
      %s2726 = scalar_lea.vmem [#allocation3], 48
      %v2727 = vld [vmem:[%s2726] sm:$0xff]
      %v2728 = vld [vmem:[%s2726 + $0x8] sm:$0xff]
      %v2729 = vld [vmem:[%s2] sm:$0xf]
      %v2730 = vld [vmem:[%s2 + $0x4] sm:$0xf]
      %v2731 = vld [vmem:[%s2 + $0x8] sm:$0xf]
      %v2732 = vld [vmem:[%s2 + $0xc] sm:$0xf]
      %v2733 = vld [vmem:[%s2 + $0x10] sm:$0xf]
      %v2734 = vld [vmem:[%s2 + $0x14] sm:$0xf]
      %v2735 = vld [vmem:[%s2 + $0x18] sm:$0xf]
      %v2736 = vld [vmem:[%s2 + $0x1c] sm:$0xf]
      %v2737 = vld [vmem:[%s2 + $0x20] sm:$0xf]
      %v2738 = vld [vmem:[%s2 + $0x24] sm:$0xf]
      %v2739 = vld [vmem:[%s2 + $0x28] sm:$0xf]
      %v2740 = vld [vmem:[%s2 + $0x2c] sm:$0xf]
      %v2741 = vld [vmem:[%s2 + $0x30] sm:$0xf]
      %v2742 = vld [vmem:[%s2 + $0x34] sm:$0xf]
      %v2743 = vld [vmem:[%s2 + $0x38] sm:$0xf]
      %v2744 = vld [vmem:[%s2 + $0x3c] sm:$0xf]
      %v2745 = vld [vmem:[%s2 + $0x40] sm:$0xf]
      %v2746 = vld [vmem:[%s2 + $0x44] sm:$0xf]
      %v2747 = vld [vmem:[%s2 + $0x48] sm:$0xf]
      %v2748 = vld [vmem:[%s2 + $0x4c] sm:$0xf]
      %v2749 = vld [vmem:[%s2 + $0x50] sm:$0xf]
      %v2750 = vld [vmem:[%s2 + $0x54] sm:$0xf]
      %v2751 = vld [vmem:[%s2 + $0x58] sm:$0xf]
      %v2752 = vld [vmem:[%s2 + $0x5c] sm:$0xf]
      %v2753 = vld [vmem:[%s2 + $0x60] sm:$0xf]
      %v2754 = vld [vmem:[%s2 + $0x64] sm:$0xf]
      %v2755 = vld [vmem:[%s2 + $0x68] sm:$0xf]
      %v2756 = vld [vmem:[%s2 + $0x6c] sm:$0xf]
      %v2757 = vld [vmem:[%s2 + $0x70] sm:$0xf]
      %v2758 = vld [vmem:[%s2 + $0x74] sm:$0xf]
      %v2759 = vld [vmem:[%s2 + $0x78] sm:$0xf]
      %v2760 = vld [vmem:[%s2 + $0x7c] sm:$0xf]
      %v2761 = vld [vmem:[%s2 + $0x80] sm:$0xf]
      %v2762 = vld [vmem:[%s2 + $0x84] sm:$0xf]
      %v2763 = vld [vmem:[%s2 + $0x88] sm:$0xf]
      %v2764 = vld [vmem:[%s2 + $0x8c] sm:$0xf]
      %v2765 = vld [vmem:[%s2 + $0x90] sm:$0xf]
      %v2766 = vld [vmem:[%s2 + $0x94] sm:$0xf]
      %v2767 = vld [vmem:[%s2 + $0x98] sm:$0xf]
      %v2768 = vld [vmem:[%s2 + $0x9c] sm:$0xf]
      %v2769 = vld [vmem:[%s2 + $0xa0] sm:$0xf]
      %v2770 = vld [vmem:[%s2 + $0xa4] sm:$0xf]
      %v2771 = vld [vmem:[%s2 + $0xa8] sm:$0xf]
      %v2772 = vld [vmem:[%s2 + $0xac] sm:$0xf]
      %v2773 = vld [vmem:[%s2 + $0xb0] sm:$0xf]
      %v2774 = vld [vmem:[%s2 + $0xb4] sm:$0xf]
      %v2775 = vld [vmem:[%s2 + $0xb8] sm:$0xf]
      %v2776 = vld [vmem:[%s2 + $0xbc] sm:$0xf]
      %v2777 = vld [vmem:[%s2 + $0xc0] sm:$0xf]
      %v2778 = vld [vmem:[%s2 + $0xc4] sm:$0xf]
      %v2779 = vld [vmem:[%s2 + $0xc8] sm:$0xf]
      %v2780 = vld [vmem:[%s2 + $0xcc] sm:$0xf]
      %v2781 = vld [vmem:[%s2 + $0xd0] sm:$0xf]
      %v2782 = vld [vmem:[%s2 + $0xd4] sm:$0xf]
      %v2783 = vld [vmem:[%s2 + $0xd8] sm:$0xf]
      %v2784 = vld [vmem:[%s2 + $0xdc] sm:$0xf]
      %v2785 = vld [vmem:[%s2 + $0xe0] sm:$0xf]
      %v2786 = vld [vmem:[%s2 + $0xe4] sm:$0xf]
      %v2787 = vld [vmem:[%s2 + $0xe8] sm:$0xf]
      %v2788 = vld [vmem:[%s2 + $0xec] sm:$0xf]
      %v2789 = vld [vmem:[%s2 + $0xf0] sm:$0xf]
      %v2790 = vld [vmem:[%s2 + $0xf4] sm:$0xf]
      %v2791 = vld [vmem:[%s2 + $0xf8] sm:$0xf]
      %v2792 = vld [vmem:[%s2 + $0xfc] sm:$0xf]
      %v2793 = vld [vmem:[%s2 + $0x100] sm:$0xf]
      %v2794 = vld [vmem:[%s2 + $0x104] sm:$0xf]
      %v2795 = vld [vmem:[%s2 + $0x108] sm:$0xf]
      %v2796 = vld [vmem:[%s2 + $0x10c] sm:$0xf]
      %v2797 = vld [vmem:[%s2 + $0x110] sm:$0xf]
      %v2798 = vld [vmem:[%s2 + $0x114] sm:$0xf]
      %v2799 = vld [vmem:[%s2 + $0x118] sm:$0xf]
      %v2800 = vld [vmem:[%s2 + $0x11c] sm:$0xf]
      %v2801 = vld [vmem:[%s2 + $0x120] sm:$0xf]
      %v2802 = vld [vmem:[%s2 + $0x124] sm:$0xf]
      %v2803 = vld [vmem:[%s2 + $0x128] sm:$0xf]
      %v2804 = vld [vmem:[%s2 + $0x12c] sm:$0xf]
      %v2805 = vld [vmem:[%s2 + $0x130] sm:$0xf]
      %v2806 = vld [vmem:[%s2 + $0x134] sm:$0xf]
      %v2807 = vld [vmem:[%s2 + $0x138] sm:$0xf]
      %v2808 = vld [vmem:[%s2 + $0x13c] sm:$0xf]
      %v2809 = vld [vmem:[%s2 + $0x140] sm:$0xf]
      %v2810 = vld [vmem:[%s2 + $0x144] sm:$0xf]
      %v2811 = vld [vmem:[%s2 + $0x148] sm:$0xf]
      %v2812 = vld [vmem:[%s2 + $0x14c] sm:$0xf]
      %v2813 = vld [vmem:[%s2 + $0x150] sm:$0xf]
      %v2814 = vld [vmem:[%s2 + $0x154] sm:$0xf]
      %v2815 = vld [vmem:[%s2 + $0x158] sm:$0xf]
      %v2816 = vld [vmem:[%s2 + $0x15c] sm:$0xf]
      %v2817 = vld [vmem:[%s2 + $0x160] sm:$0xf]
      %v2818 = vld [vmem:[%s2 + $0x164] sm:$0xf]
      %v2819 = vld [vmem:[%s2 + $0x168] sm:$0xf]
      %v2820 = vld [vmem:[%s2 + $0x16c] sm:$0xf]
      %v2821 = vld [vmem:[%s2 + $0x170] sm:$0xf]
      %v2822 = vld [vmem:[%s2 + $0x174] sm:$0xf]
      %v2823 = vld [vmem:[%s2 + $0x178] sm:$0xf]
      %v2824 = vld [vmem:[%s2 + $0x17c] sm:$0xf]
      %v2825 = vld [vmem:[%s2 + $0x180] sm:$0xf]
      %v2826 = vld [vmem:[%s2 + $0x184] sm:$0xf]
      %v2827 = vld [vmem:[%s2 + $0x188] sm:$0xf]
      %v2828 = vld [vmem:[%s2 + $0x18c] sm:$0xf]
      %v2829 = vld [vmem:[%s2 + $0x190] sm:$0xf]
      %v2830 = vld [vmem:[%s2 + $0x194] sm:$0xf]
      %v2831 = vld [vmem:[%s2 + $0x198] sm:$0xf]
      %v2832 = vld [vmem:[%s2 + $0x19c] sm:$0xf]
      %v2833 = vld [vmem:[%s2 + $0x1a0] sm:$0xf]
      %v2834 = vld [vmem:[%s2 + $0x1a4] sm:$0xf]
      %v2835 = vld [vmem:[%s2 + $0x1a8] sm:$0xf]
      %v2836 = vld [vmem:[%s2 + $0x1ac] sm:$0xf]
      %v2837 = vld [vmem:[%s2 + $0x1b0] sm:$0xf]
      %v2838 = vld [vmem:[%s2 + $0x1b4] sm:$0xf]
      %v2839 = vld [vmem:[%s2 + $0x1b8] sm:$0xf]
      %v2840 = vld [vmem:[%s2 + $0x1bc] sm:$0xf]
      %v2841 = vld [vmem:[%s2 + $0x1c0] sm:$0xf]
      %v2842 = vld [vmem:[%s2 + $0x1c4] sm:$0xf]
      %v2843 = vld [vmem:[%s2 + $0x1c8] sm:$0xf]
      %v2844 = vld [vmem:[%s2 + $0x1cc] sm:$0xf]
      %v2845 = vld [vmem:[%s2 + $0x1d0] sm:$0xf]
      %v2846 = vld [vmem:[%s2 + $0x1d4] sm:$0xf]
      %v2847 = vld [vmem:[%s2 + $0x1d8] sm:$0xf]
      %v2848 = vld [vmem:[%s2 + $0x1dc] sm:$0xf]
      %v2849 = vld [vmem:[%s2 + $0x1e0] sm:$0xf]
      %v2850 = vld [vmem:[%s2 + $0x1e4] sm:$0xf]
      %v2851 = vld [vmem:[%s2 + $0x1e8] sm:$0xf]
      %v2852 = vld [vmem:[%s2 + $0x1ec] sm:$0xf]
      %v2853 = vld [vmem:[%s2 + $0x1f0] sm:$0xf]
      %v2854 = vld [vmem:[%s2 + $0x1f4] sm:$0xf]
      %v2855 = vld [vmem:[%s2 + $0x1f8] sm:$0xf]
      %v2856 = vld [vmem:[%s2 + $0x1fc] sm:$0xf]
      %v2857 = vld [vmem:[%s3] sm:$0x1]
      %v2859 = vperm.slane %v2857, 0
      %2862 = vst [vmem:[#allocation1] ss:$4 sm:$0xff] %v2727
      %s2864 = scalar_lea.vmem [#allocation1], 32
      %2865 = vst [vmem:[%s2864] ss:$4 sm:$0xff] %v2728
      %v2866 = vld.sshfl [vmem:[#allocation1] sm:$0xff pattern:$0x73625140]
      %v2867 = vld.sshfl [vmem:[#allocation1 + $0x8] sm:$0xff pattern:$0x73625140]
      %v2868 = vld.sshfl [vmem:[#allocation1 + $0x10] sm:$0xff pattern:$0x73625140]
      %v2869 = vld.sshfl [vmem:[#allocation1 + $0x18] sm:$0xff pattern:$0x73625140]
      %v2870 = vld.sshfl [vmem:[#allocation1 + $0x20] sm:$0xff pattern:$0x73625140]
      %v2871 = vld.sshfl [vmem:[#allocation1 + $0x28] sm:$0xff pattern:$0x73625140]
      %v2872 = vld.sshfl [vmem:[#allocation1 + $0x30] sm:$0xff pattern:$0x73625140]
      %v2873 = vld.sshfl [vmem:[#allocation1 + $0x38] sm:$0xff pattern:$0x73625140]
      %v3010 = vunpack.c.l.b16 %v2729
      %v3011 = vunpack.c.l.b16 %v2730
      %v3012 = vunpack.c.l.b16 %v2731
      %v3013 = vunpack.c.l.b16 %v2732
      %v3014 = vunpack.c.l.b16 %v2733
      %v3015 = vunpack.c.l.b16 %v2734
      %v3016 = vunpack.c.l.b16 %v2735
      %v3017 = vunpack.c.l.b16 %v2736
      %v3018 = vunpack.c.l.b16 %v2737
      %v3019 = vunpack.c.l.b16 %v2738
      %v3020 = vunpack.c.l.b16 %v2739
      %v3021 = vunpack.c.l.b16 %v2740
      %v3022 = vunpack.c.l.b16 %v2741
      %v3023 = vunpack.c.l.b16 %v2742
      %v3024 = vunpack.c.l.b16 %v2743
      %v3025 = vunpack.c.l.b16 %v2744
      %v3026 = vunpack.c.l.b16 %v2745
      %v3027 = vunpack.c.l.b16 %v2746
      %v3028 = vunpack.c.l.b16 %v2747
      %v3029 = vunpack.c.l.b16 %v2748
      %v3030 = vunpack.c.l.b16 %v2749
      %v3031 = vunpack.c.l.b16 %v2750
      %v3032 = vunpack.c.l.b16 %v2751
      %v3033 = vunpack.c.l.b16 %v2752
      %v3034 = vunpack.c.l.b16 %v2753
      %v3035 = vunpack.c.l.b16 %v2754
      %v3036 = vunpack.c.l.b16 %v2755
      %v3037 = vunpack.c.l.b16 %v2756
      %v3038 = vunpack.c.l.b16 %v2757
      %v3039 = vunpack.c.l.b16 %v2758
      %v3040 = vunpack.c.l.b16 %v2759
      %v3041 = vunpack.c.l.b16 %v2760
      %v3042 = vunpack.c.l.b16 %v2761
      %v3043 = vunpack.c.l.b16 %v2762
      %v3044 = vunpack.c.l.b16 %v2763
      %v3045 = vunpack.c.l.b16 %v2764
      %v3046 = vunpack.c.l.b16 %v2765
      %v3047 = vunpack.c.l.b16 %v2766
      %v3048 = vunpack.c.l.b16 %v2767
      %v3049 = vunpack.c.l.b16 %v2768
      %v3050 = vunpack.c.l.b16 %v2769
      %v3051 = vunpack.c.l.b16 %v2770
      %v3052 = vunpack.c.l.b16 %v2771
      %v3053 = vunpack.c.l.b16 %v2772
      %v3054 = vunpack.c.l.b16 %v2773
      %v3055 = vunpack.c.l.b16 %v2774
      %v3056 = vunpack.c.l.b16 %v2775
      %v3057 = vunpack.c.l.b16 %v2776
      %v3058 = vunpack.c.l.b16 %v2777
      %v3059 = vunpack.c.l.b16 %v2778
      %v3060 = vunpack.c.l.b16 %v2779
      %v3061 = vunpack.c.l.b16 %v2780
      %v3062 = vunpack.c.l.b16 %v2781
      %v3063 = vunpack.c.l.b16 %v2782
      %v3064 = vunpack.c.l.b16 %v2783
      %v3065 = vunpack.c.l.b16 %v2784
      %v3066 = vunpack.c.l.b16 %v2785
      %v3067 = vunpack.c.l.b16 %v2786
      %v3068 = vunpack.c.l.b16 %v2787
      %v3069 = vunpack.c.l.b16 %v2788
      %v3070 = vunpack.c.l.b16 %v2789
      %v3071 = vunpack.c.l.b16 %v2790
      %v3072 = vunpack.c.l.b16 %v2791
      %v3073 = vunpack.c.l.b16 %v2792
      %v3074 = vunpack.c.l.b16 %v2793
      %v3075 = vunpack.c.l.b16 %v2794
      %v3076 = vunpack.c.l.b16 %v2795
      %v3077 = vunpack.c.l.b16 %v2796
      %v3078 = vunpack.c.l.b16 %v2797
      %v3079 = vunpack.c.l.b16 %v2798
      %v3080 = vunpack.c.l.b16 %v2799
      %v3081 = vunpack.c.l.b16 %v2800
      %v3082 = vunpack.c.l.b16 %v2801
      %v3083 = vunpack.c.l.b16 %v2802
      %v3084 = vunpack.c.l.b16 %v2803
      %v3085 = vunpack.c.l.b16 %v2804
      %v3086 = vunpack.c.l.b16 %v2805
      %v3087 = vunpack.c.l.b16 %v2806
      %v3088 = vunpack.c.l.b16 %v2807
      %v3089 = vunpack.c.l.b16 %v2808
      %v3090 = vunpack.c.l.b16 %v2809
      %v3091 = vunpack.c.l.b16 %v2810
      %v3092 = vunpack.c.l.b16 %v2811
      %v3093 = vunpack.c.l.b16 %v2812
      %v3094 = vunpack.c.l.b16 %v2813
      %v3095 = vunpack.c.l.b16 %v2814
      %v3096 = vunpack.c.l.b16 %v2815
      %v3097 = vunpack.c.l.b16 %v2816
      %v3098 = vunpack.c.l.b16 %v2817
      %v3099 = vunpack.c.l.b16 %v2818
      %v3100 = vunpack.c.l.b16 %v2819
      %v3101 = vunpack.c.l.b16 %v2820
      %v3102 = vunpack.c.l.b16 %v2821
      %v3103 = vunpack.c.l.b16 %v2822
      %v3104 = vunpack.c.l.b16 %v2823
      %v3105 = vunpack.c.l.b16 %v2824
      %v3106 = vunpack.c.l.b16 %v2825
      %v3107 = vunpack.c.l.b16 %v2826
      %v3108 = vunpack.c.l.b16 %v2827
      %v3109 = vunpack.c.l.b16 %v2828
      %v3110 = vunpack.c.l.b16 %v2829
      %v3111 = vunpack.c.l.b16 %v2830
      %v3112 = vunpack.c.l.b16 %v2831
      %v3113 = vunpack.c.l.b16 %v2832
      %v3114 = vunpack.c.l.b16 %v2833
      %v3115 = vunpack.c.l.b16 %v2834
      %v3116 = vunpack.c.l.b16 %v2835
      %v3117 = vunpack.c.l.b16 %v2836
      %v3118 = vunpack.c.l.b16 %v2837
      %v3119 = vunpack.c.l.b16 %v2838
      %v3120 = vunpack.c.l.b16 %v2839
      %v3121 = vunpack.c.l.b16 %v2840
      %v3122 = vunpack.c.l.b16 %v2841
      %v3123 = vunpack.c.l.b16 %v2842
      %v3124 = vunpack.c.l.b16 %v2843
      %v3125 = vunpack.c.l.b16 %v2844
      %v3126 = vunpack.c.l.b16 %v2845
      %v3127 = vunpack.c.l.b16 %v2846
      %v3128 = vunpack.c.l.b16 %v2847
      %v3129 = vunpack.c.l.b16 %v2848
      %v3130 = vunpack.c.l.b16 %v2849
      %v3131 = vunpack.c.l.b16 %v2850
      %v3132 = vunpack.c.l.b16 %v2851
      %v3133 = vunpack.c.l.b16 %v2852
      %v3134 = vunpack.c.l.b16 %v2853
      %v3135 = vunpack.c.l.b16 %v2854
      %v3136 = vunpack.c.l.b16 %v2855
      %v3137 = vunpack.c.l.b16 %v2856
      %v3138 = vpack.c.b16 %v3011, %v3010
      %v3139 = vpack.c.b16 %v3013, %v3012
      %v3140 = vpack.c.b16 %v3015, %v3014
      %v3141 = vpack.c.b16 %v3017, %v3016
      %v3142 = vpack.c.b16 %v3019, %v3018
      %v3143 = vpack.c.b16 %v3021, %v3020
      %v3144 = vpack.c.b16 %v3023, %v3022
      %v3145 = vpack.c.b16 %v3025, %v3024
      %v3146 = vpack.c.b16 %v3027, %v3026
      %v3147 = vpack.c.b16 %v3029, %v3028
      %v3148 = vpack.c.b16 %v3031, %v3030
      %v3149 = vpack.c.b16 %v3033, %v3032
      %v3150 = vpack.c.b16 %v3035, %v3034
      %v3151 = vpack.c.b16 %v3037, %v3036
      %v3152 = vpack.c.b16 %v3039, %v3038
      %v3153 = vpack.c.b16 %v3041, %v3040
      %v3154 = vpack.c.b16 %v3043, %v3042
      %v3155 = vpack.c.b16 %v3045, %v3044
      %v3156 = vpack.c.b16 %v3047, %v3046
      %v3157 = vpack.c.b16 %v3049, %v3048
      %v3158 = vpack.c.b16 %v3051, %v3050
      %v3159 = vpack.c.b16 %v3053, %v3052
      %v3160 = vpack.c.b16 %v3055, %v3054
      %v3161 = vpack.c.b16 %v3057, %v3056
      %v3162 = vpack.c.b16 %v3059, %v3058
      %v3163 = vpack.c.b16 %v3061, %v3060
      %v3164 = vpack.c.b16 %v3063, %v3062
      %v3165 = vpack.c.b16 %v3065, %v3064
      %v3166 = vpack.c.b16 %v3067, %v3066
      %v3167 = vpack.c.b16 %v3069, %v3068
      %v3168 = vpack.c.b16 %v3071, %v3070
      %v3169 = vpack.c.b16 %v3073, %v3072
      %v3170 = vpack.c.b16 %v3075, %v3074
      %v3171 = vpack.c.b16 %v3077, %v3076
      %v3172 = vpack.c.b16 %v3079, %v3078
      %v3173 = vpack.c.b16 %v3081, %v3080
      %v3174 = vpack.c.b16 %v3083, %v3082
      %v3175 = vpack.c.b16 %v3085, %v3084
      %v3176 = vpack.c.b16 %v3087, %v3086
      %v3177 = vpack.c.b16 %v3089, %v3088
      %v3178 = vpack.c.b16 %v3091, %v3090
      %v3179 = vpack.c.b16 %v3093, %v3092
      %v3180 = vpack.c.b16 %v3095, %v3094
      %v3181 = vpack.c.b16 %v3097, %v3096
      %v3182 = vpack.c.b16 %v3099, %v3098
      %v3183 = vpack.c.b16 %v3101, %v3100
      %v3184 = vpack.c.b16 %v3103, %v3102
      %v3185 = vpack.c.b16 %v3105, %v3104
      %v3186 = vpack.c.b16 %v3107, %v3106
      %v3187 = vpack.c.b16 %v3109, %v3108
      %v3188 = vpack.c.b16 %v3111, %v3110
      %v3189 = vpack.c.b16 %v3113, %v3112
      %v3190 = vpack.c.b16 %v3115, %v3114
      %v3191 = vpack.c.b16 %v3117, %v3116
      %v3192 = vpack.c.b16 %v3119, %v3118
      %v3193 = vpack.c.b16 %v3121, %v3120
      %v3194 = vpack.c.b16 %v3123, %v3122
      %v3195 = vpack.c.b16 %v3125, %v3124
      %v3196 = vpack.c.b16 %v3127, %v3126
      %v3197 = vpack.c.b16 %v3129, %v3128
      %v3198 = vpack.c.b16 %v3131, %v3130
      %v3199 = vpack.c.b16 %v3133, %v3132
      %v3200 = vpack.c.b16 %v3135, %v3134
      %v3201 = vpack.c.b16 %v3137, %v3136
      %3266 = vmatpush.bf16.msra.mxu0 %v3145
      %3267 = vmatpush.bf16.msra.mxu0 %v3144
      %3268 = vmatpush.bf16.msra.mxu0 %v3143
      %3269 = vmatpush.bf16.msra.mxu0 %v3142
      %3270 = vmatpush.bf16.msra.mxu0 %v3141
      %3271 = vmatpush.bf16.msra.mxu0 %v3140
      %3272 = vmatpush.bf16.msra.mxu0 %v3139
      %3273 = vmatpush.bf16.msra.mxu0 %v3138
      %3274 = vmatmul.bf16.gmra.mxu0 %v2866
      %v3275 = vpop.f32.mrf.mxu0
      %v3276 = vadd.f32 %v2859, %v3275
      %v3277 = vpop.f32.mrf.mxu0
      %3278 = vdwg.mxu0
      %3279 = vmatpush.bf16.msra.mxu0 %v3153
      %3280 = vmatpush.bf16.msra.mxu0 %v3152
      %3281 = vmatpush.bf16.msra.mxu0 %v3151
      %3282 = vmatpush.bf16.msra.mxu0 %v3150
      %3283 = vmatpush.bf16.msra.mxu0 %v3149
      %3284 = vmatpush.bf16.msra.mxu0 %v3148
      %3285 = vmatpush.bf16.msra.mxu0 %v3147
      %3286 = vmatpush.bf16.msra.mxu0 %v3146
      %3287 = vmatmul.bf16.gmra.mxu0 %v2867
      %v3288 = vpop.f32.mrf.mxu0
      %v3289 = vadd.f32 %v3276, %v3288
      %v3290 = vpop.f32.mrf.mxu0
      %3291 = vdwg.mxu0
      %3292 = vmatpush.bf16.msra.mxu0 %v3161
      %3293 = vmatpush.bf16.msra.mxu0 %v3160
      %3294 = vmatpush.bf16.msra.mxu0 %v3159
      %3295 = vmatpush.bf16.msra.mxu0 %v3158
      %3296 = vmatpush.bf16.msra.mxu0 %v3157
      %3297 = vmatpush.bf16.msra.mxu0 %v3156
      %3298 = vmatpush.bf16.msra.mxu0 %v3155
      %3299 = vmatpush.bf16.msra.mxu0 %v3154
      %3300 = vmatmul.bf16.gmra.mxu0 %v2868
      %v3301 = vpop.f32.mrf.mxu0
      %v3302 = vadd.f32 %v3289, %v3301
      %v3303 = vpop.f32.mrf.mxu0
      %3304 = vdwg.mxu0
      %3305 = vmatpush.bf16.msra.mxu0 %v3169
      %3306 = vmatpush.bf16.msra.mxu0 %v3168
      %3307 = vmatpush.bf16.msra.mxu0 %v3167
      %3308 = vmatpush.bf16.msra.mxu0 %v3166
      %3309 = vmatpush.bf16.msra.mxu0 %v3165
      %3310 = vmatpush.bf16.msra.mxu0 %v3164
      %3311 = vmatpush.bf16.msra.mxu0 %v3163
      %3312 = vmatpush.bf16.msra.mxu0 %v3162
      %3313 = vmatmul.bf16.gmra.mxu0 %v2869
      %v3314 = vpop.f32.mrf.mxu0
      %v3315 = vadd.f32 %v3302, %v3314
      %v3316 = vpop.f32.mrf.mxu0
      %3317 = vdwg.mxu0
      %3318 = vmatpush.bf16.msra.mxu0 %v3177
      %3319 = vmatpush.bf16.msra.mxu0 %v3176
      %3320 = vmatpush.bf16.msra.mxu0 %v3175
      %3321 = vmatpush.bf16.msra.mxu0 %v3174
      %3322 = vmatpush.bf16.msra.mxu0 %v3173
      %3323 = vmatpush.bf16.msra.mxu0 %v3172
      %3324 = vmatpush.bf16.msra.mxu0 %v3171
      %3325 = vmatpush.bf16.msra.mxu0 %v3170
      %3326 = vmatmul.bf16.gmra.mxu0 %v2870
      %v3327 = vpop.f32.mrf.mxu0
      %v3328 = vadd.f32 %v3315, %v3327
      %v3329 = vpop.f32.mrf.mxu0
      %3330 = vdwg.mxu0
      %3331 = vmatpush.bf16.msra.mxu0 %v3185
      %3332 = vmatpush.bf16.msra.mxu0 %v3184
      %3333 = vmatpush.bf16.msra.mxu0 %v3183
      %3334 = vmatpush.bf16.msra.mxu0 %v3182
      %3335 = vmatpush.bf16.msra.mxu0 %v3181
      %3336 = vmatpush.bf16.msra.mxu0 %v3180
      %3337 = vmatpush.bf16.msra.mxu0 %v3179
      %3338 = vmatpush.bf16.msra.mxu0 %v3178
      %3339 = vmatmul.bf16.gmra.mxu0 %v2871
      %v3340 = vpop.f32.mrf.mxu0
      %v3341 = vadd.f32 %v3328, %v3340
      %v3342 = vpop.f32.mrf.mxu0
      %3343 = vdwg.mxu0
      %3344 = vmatpush.bf16.msra.mxu0 %v3193
      %3345 = vmatpush.bf16.msra.mxu0 %v3192
      %3346 = vmatpush.bf16.msra.mxu0 %v3191
      %3347 = vmatpush.bf16.msra.mxu0 %v3190
      %3348 = vmatpush.bf16.msra.mxu0 %v3189
      %3349 = vmatpush.bf16.msra.mxu0 %v3188
      %3350 = vmatpush.bf16.msra.mxu0 %v3187
      %3351 = vmatpush.bf16.msra.mxu0 %v3186
      %3352 = vmatmul.bf16.gmra.mxu0 %v2872
      %v3353 = vpop.f32.mrf.mxu0
      %v3354 = vadd.f32 %v3341, %v3353
      %v3355 = vpop.f32.mrf.mxu0
      %3356 = vdwg.mxu0
      %3357 = vmatpush.bf16.msra.mxu0 %v3201
      %3358 = vmatpush.bf16.msra.mxu0 %v3200
      %3359 = vmatpush.bf16.msra.mxu0 %v3199
      %3360 = vmatpush.bf16.msra.mxu0 %v3198
      %3361 = vmatpush.bf16.msra.mxu0 %v3197
      %3362 = vmatpush.bf16.msra.mxu0 %v3196
      %3363 = vmatpush.bf16.msra.mxu0 %v3195
      %3364 = vmatpush.bf16.msra.mxu0 %v3194
      %3365 = vmatmul.bf16.gmra.mxu0 %v2873
      %v3366 = vpop.f32.mrf.mxu0
      %v3367 = vadd.f32 %v3354, %v3366
      %v3368 = vpop.f32.mrf.mxu0
      %3369 = vdwg.mxu0
      %vm3370 = vcmp.ge.f32.partialorder %v3367, 0.0
      %v3371 = vmul.f32 %v3367, 0.2
      %v3372 = vsel %vm3370, %v3367, %v3371
      %v3373 = vpack.c.bf16 %v3372, %v3372
      %s3374 = scalar_lea.vmem %s319, 6
      %3375 = vst.msk [vmem:[%s3374] sm:$0x3] %vm1424, %v3373
      %s3376 = smul.u32 4, %s20
      %p3377 = scmp.lt.s32.totalorder %s19, 1
      %s3378 = scalar_select %p3377, %s19, 1
      %p3379 = scmp.lt.s32.totalorder %s3376, 3
      %s3380 = scalar_select %p3379, %s3376, 3
      %s3381 = smul.addr %s3378, 4
      %s3382 = sadd.s32 %s3380, %s3381
      %s3383 = smul.addr %s3382, 2
      %s3384 = scalar_lea.vmem %s4, %s3383
      // Predicated region
      $region37: #{condition_forward.4} parent=35 // pred_check
        %p3385 = pneg %p153
      $region38: #{condition_forward.4} parent=35 // pred_check_branch
        %3387 = sbr.rel (%p3385) target = $region40
      $region39: #{condition_forward.4} parent=35 // pred_region
        %s3388 = smul.u32 4, %s20
      $region40: #{condition_forward.4} parent=35 // pred_fallthru
        _
    $region36: #{condition_forward.4} parent=5 // pred_fallthru
      _
    %p3389 = scmp.le.s32.totalorder 2, %s10
    // Predicated region
    $region41: #{condition_forward.4} parent=5 // pred_check
      %p3390 = pneg %p3389
    $region42: #{condition_forward.4} parent=5 // pred_check_branch
      %3392 = sbr.rel (%p3390) target = $region44
    $region43: #{condition_forward.4} parent=5 // pred_region
      %s3393 = ssub.s32 %s10, 2
      // Predicated region
      $region45: #{condition_forward.4} parent=43 // pred_check
        %p3394 = pneg %p159
      $region46: #{condition_forward.4} parent=43 // pred_check_branch
        %3396 = sbr.rel (%p3394) target = $region48
      $region47: #{condition_forward.4} parent=43 // pred_region
        %s3397 = smul.u32 4, %s22
        %p3398 = scmp.lt.s32.totalorder %s21, 1
        %s3399 = scalar_select %p3398, %s21, 1
        %p3400 = scmp.lt.s32.totalorder %s3397, 3
        %s3401 = scalar_select %p3400, %s3397, 3
        %s3402 = smul.addr %s3399, 4
        %s3403 = sadd.s32 %s3401, %s3402
        %s3404 = smul.addr %s3403, 2
        %s3405 = scalar_lea.vmem %s4, %s3404
      $region48: #{condition_forward.4} parent=43 // pred_fallthru
        _
    $region44: #{condition_forward.4} parent=5 // pred_fallthru
      _
  $region6: #{condition_forward.4} parent=0 // loop_footer
    %s14 = sadd.s32 1, %s10
  $region7: #{condition_forward.4} parent=0 // loop_footer_branch
    %9 = sbr.rel target = $region3
  $region8: #{condition_forward.4} parent=0 // loop_exit
    _

</llo_original>
